<compile_context>
chip_gen: v7x
topology: tpu7x:2x2x1
jax: 0.10.0
libtpu: 0.0.40
codegen_flags: <defaults>
</compile_context>

<pallas_src>
import functools
import math

import jax
import jax.numpy as jnp
from jax.experimental import pallas as pl
from jax.experimental.pallas import tpu as pltpu


def mab2_kernel(q_ref, k_ref, wq_ref, bq_ref, *rest,
                n_dim, num_heads, fuse_kv, matmul_dtype):
    if fuse_kv:
        (wkv_ref, bkv_ref, wo_ref, bo_ref,
         o_ref, qf_ref, qm_ref, km_ref, vm_ref, av_acc) = rest
    else:
        (wk_ref, bk_ref, wv_ref, bv_ref, wo_ref, bo_ref,
         o_ref, qf_ref, qm_ref, km_ref, vm_ref, av_acc) = rest

    Bt, Nq, dim_Q = q_ref.shape
    _, Nk, dim_K = k_ref.shape
    H = num_heads
    d = n_dim // H
    scale = 1.0 / math.sqrt(n_dim)  # PyTorch module scales by sqrt(n_dim), not sqrt(head_dim)

    # ---- Projections: big-M matmuls on flattened (Bt*N, feat) blocks (MXU) ----
    q2 = q_ref[...].reshape(Bt * Nq, dim_Q).astype(matmul_dtype)
    k2 = k_ref[...].reshape(Bt * Nk, dim_K).astype(matmul_dtype)

    qp = jnp.dot(q2, wq_ref[...], preferred_element_type=jnp.float32) + bq_ref[...]
    # Stage projection results in VMEM scratch: bounds live ranges across the statically
    # unrolled head loop; per-head slices below are cheap ref views.
    qf_ref[...] = qp                          # f32 copy for the residual (lane-dense store)
    qm_ref[...] = qp.astype(matmul_dtype)     # cast hoisted out of the head loop

    if fuse_kv:
        kvp = jnp.dot(k2, wkv_ref[...], preferred_element_type=jnp.float32) + bkv_ref[...]
        kp = kvp[:, :n_dim]                   # lane-aligned: only used when n_dim % 128 == 0
        vp = kvp[:, n_dim:]
    else:
        kp = jnp.dot(k2, wk_ref[...], preferred_element_type=jnp.float32) + bk_ref[...]
        vp = jnp.dot(k2, wv_ref[...], preferred_element_type=jnp.float32) + bv_ref[...]
    # Fold the 1/sqrt(n_dim) score scale into K (K only feeds the score matmul), fused
    # with the cast: one VPU pass over (Bt*Nk, n_dim) instead of H passes over scores.
    km_ref[...] = (kp * scale).astype(matmul_dtype)
    vm_ref[...] = vp.astype(matmul_dtype)

    # ---- Per-head attention, batched over Bt (leading-batch einsums; static unroll) ----
    for h in range(H):
        sl = slice(h * d, (h + 1) * d)
        qh = qm_ref[:, sl].reshape(Bt, Nq, d)
        kh = km_ref[:, sl].reshape(Bt, Nk, d)
        vh = vm_ref[:, sl].reshape(Bt, Nk, d)

        s = jnp.einsum('bqd,bkd->bqk', qh, kh, preferred_element_type=jnp.float32)
        m = jnp.max(s, axis=-1, keepdims=True)          # softmax math stays in f32
        e = jnp.exp(s - m)                               # EUP
        denom = jnp.sum(e, axis=-1, keepdims=True)
        av = jnp.einsum('bqk,bkd->bqd', e.astype(matmul_dtype), vh,
                        preferred_element_type=jnp.float32)
        # Normalize AFTER A@V (linearity): VPU multiply covers Bt*Nq*d elements per head
        # instead of Bt*Nq*Nk; the reciprocal uses the EUP slot.
        av = av * pl.reciprocal(denom, approx=True)
        av_acc[:, sl] = av.reshape(Bt * Nq, d)           # lane-partial store if d % 128 != 0

    # ---- Residual + output MLP on the full lane-dense (Bt*Nq, n_dim) slab ----
    O = qf_ref[...] + av_acc[...]
    hidden = jnp.dot(O.astype(matmul_dtype), wo_ref[...],
                     preferred_element_type=jnp.float32) + bo_ref[...]
    out = O + jnp.maximum(hidden, 0.0)
    o_ref[...] = out.reshape(Bt, Nq, n_dim).astype(o_ref.dtype)


def _estimate_vmem_bytes(Bt, Nq, Nk, dim_Q, dim_K, n_dim, num_heads, esz):
    """Rough per-grid-step VMEM footprint (bytes) used for tile selection."""
    mq, mk = Bt * Nq, Bt * Nk
    d = n_dim // num_heads
    f32 = 4
    io = 2 * (mq * dim_Q + mk * dim_K + mq * n_dim) * f32             # double-buffered I/O blocks
    weights = (dim_Q * n_dim + 2 * dim_K * n_dim + n_dim * n_dim) * esz + 4 * n_dim * f32
    scratch = 2 * mq * n_dim * f32 + (mq + 2 * mk) * n_dim * esz      # qf, av_acc, qm/km/vm
    live = (2 * mq * Nk + mq * d + 2 * mq * n_dim) * f32              # scores/exp, av, O/hidden
    return io + weights + scratch + live


def _num_tensorcores():
    """2 TensorCores per chip on v7x-class devices, else 1 (v5e/v6e)."""
    try:
        kind = jax.devices()[0].device_kind.lower()
        return 2 if "v7" in kind else 1
    except Exception:
        return 1


def _pick_batch_tile(B, Nq, Nk, dim_Q, dim_K, n_dim, num_heads, esz,
                     vmem_budget_bytes, min_grid_steps=1):
    """Largest divisor Bt of B fitting the VMEM budget, preferring M = Bt*Nq that fills
    the (8,128) vreg tile, and keeping >= min_grid_steps steps on dual-TC chips."""
    def fitting(steps):
        return [bt for bt in range(1, B + 1)
                if B % bt == 0 and B // bt >= steps
                and _estimate_vmem_bytes(bt, Nq, Nk, dim_Q, dim_K, n_dim,
                                         num_heads, esz) <= vmem_budget_bytes]
    cands = fitting(min_grid_steps) or fitting(1)
    if not cands:
        # TODO(synk): block Nk (flash-style online softmax) instead of degrading to Bt=1.
        return 1
    for pred in (lambda bt: (bt * Nq) % 128 == 0, lambda bt: (bt * Nq) % 8 == 0):
        pref = [bt for bt in cands if pred(bt)]
        if pref:
            return max(pref)
    return max(cands)


def mab2_forward(Q, K, params, *, n_dim, num_heads,
                 matmul_dtype=jnp.bfloat16, vmem_budget_bytes=40 * 1024 * 1024):
    B, Nq, dim_Q = Q.shape
    _, Nk, dim_K = K.shape
    wq, bq, wk, bk, wv, bv, wo, bo = params

    # Weights in HBM in the MXU dtype (halves weight DMA bytes); biases stay f32
    # since they are added to f32 accumulators.
    wq_m = wq.astype(matmul_dtype)
    wo_m = wo.astype(matmul_dtype)
    bq_f = bq.astype(jnp.float32)
    bo_f = bo.astype(jnp.float32)

    # Fuse fc_k / fc_v only when the n_dim split of the fused result is lane-aligned.
    fuse_kv = (n_dim % 128 == 0)
    if fuse_kv:
        k_weight_args = (jnp.concatenate([wk, wv], axis=1).astype(matmul_dtype),
                         jnp.concatenate([bk, bv], axis=1).astype(jnp.float32))
    else:
        k_weight_args = (wk.astype(matmul_dtype), bk.astype(jnp.float32),
                         wv.astype(matmul_dtype), bv.astype(jnp.float32))

    esz = jnp.dtype(matmul_dtype).itemsize
    min_steps = 2 if (_num_tensorcores() >= 2 and B >= 2) else 1
    Bt = _pick_batch_tile(B, Nq, Nk, dim_Q, dim_K, n_dim, num_heads, esz,
                          vmem_budget_bytes, min_grid_steps=min_steps)
    grid = (B // Bt,)

    est = _estimate_vmem_bytes(Bt, Nq, Nk, dim_Q, dim_K, n_dim, num_heads, esz)
    vmem_limit = int(min(60 * 1024 * 1024, max(32 * 1024 * 1024, int(est * 1.4))))

    kernel = functools.partial(mab2_kernel, n_dim=n_dim, num_heads=num_heads,
                               fuse_kv=fuse_kv, matmul_dtype=matmul_dtype)

    flops = int(2 * B * Nq * dim_Q * n_dim            # fc_q
                + 2 * B * Nk * dim_K * 2 * n_dim      # fc_k + fc_v
                + 4 * B * Nq * Nk * n_dim             # scores + A@V over all heads
                + 2 * B * Nq * n_dim * n_dim)         # fc_o
    transcendentals = int(B * num_heads * Nq * Nk + B * num_heads * Nq)
    bytes_accessed = int(4 * (Q.size + K.size + B * Nq * n_dim
                              + bq.size + bk.size + bv.size + bo.size)
                         + esz * (wq.size + wk.size + wv.size + wo.size))

    def build_and_call(buffer_weights):
        def wspec(shape):
            idx = lambda b, _s=shape: (0,) * len(_s)
            if buffer_weights:
                # Constant index_map: single-buffer the resident weights (frees VMEM).
                return pl.BlockSpec(shape, idx, pipeline_mode=pl.Buffered(1))
            return pl.BlockSpec(shape, idx)

        if fuse_kv:
            kw_specs = [wspec((dim_K, 2 * n_dim)), wspec((1, 2 * n_dim))]
        else:
            kw_specs = [wspec((dim_K, n_dim)), wspec((1, n_dim)),
                        wspec((dim_K, n_dim)), wspec((1, n_dim))]

        return pl.pallas_call(
            kernel,
            out_shape=jax.ShapeDtypeStruct((B, Nq, n_dim), jnp.float32),
            grid=grid,
            in_specs=[
                pl.BlockSpec((Bt, Nq, dim_Q), lambda b: (b, 0, 0)),
                pl.BlockSpec((Bt, Nk, dim_K), lambda b: (b, 0, 0)),
                wspec((dim_Q, n_dim)), wspec((1, n_dim)),
                *kw_specs,
                wspec((n_dim, n_dim)), wspec((1, n_dim)),
            ],
            out_specs=pl.BlockSpec((Bt, Nq, n_dim), lambda b: (b, 0, 0)),
            scratch_shapes=[
                pltpu.VMEM((Bt * Nq, n_dim), jnp.float32),    # qf: f32 Q projection (residual)
                pltpu.VMEM((Bt * Nq, n_dim), matmul_dtype),   # qm: matmul-dtype Q
                pltpu.VMEM((Bt * Nk, n_dim), matmul_dtype),   # km: pre-scaled K
                pltpu.VMEM((Bt * Nk, n_dim), matmul_dtype),   # vm: V
                pltpu.VMEM((Bt * Nq, n_dim), jnp.float32),    # av accumulator
            ],
            compiler_params=pltpu.CompilerParams(
                dimension_semantics=("parallel",),
                vmem_limit_bytes=vmem_limit),
            cost_estimate=pl.CostEstimate(
                flops=flops, transcendentals=transcendentals,
                bytes_accessed=bytes_accessed),
        )(Q, K, wq_m, bq_f, *k_weight_args, wo_m, bo_f)

    try:
        return build_and_call(buffer_weights=True)
    except Exception:
        # pipeline_mode=pl.Buffered(1) is a pure optimization; fall back to the default
        # double-buffered weight specs if this JAX/Mosaic build rejects it.
        return build_and_call(buffer_weights=False)


def mab2_reference(Q, K, params, *, n_dim, num_heads):
    """Pure-JAX mirror of the PyTorch forward (mask=None, ln=False)."""
    wq, bq, wk, bk, wv, bv, wo, bo = params
    Qp = Q @ wq + bq[0]
    Kp = K @ wk + bk[0]
    Vp = K @ wv + bv[0]
    Q_ = jnp.concatenate(jnp.split(Qp, num_heads, axis=2), axis=0)
    K_ = jnp.concatenate(jnp.split(Kp, num_heads, axis=2), axis=0)
    V_ = jnp.concatenate(jnp.split(Vp, num_heads, axis=2), axis=0)
    att = jnp.einsum('bqd,bkd->bqk', Q_, K_) / math.sqrt(n_dim)
    A = jax.nn.softmax(att, axis=2)
    O = Q_ + jnp.einsum('bqk,bkd->bqd', A, V_)
    O = jnp.concatenate(jnp.split(O, num_heads, axis=0), axis=2)
    return O + jax.nn.relu(O @ wo + bo[0])


if __name__ == "__main__":
    # Small, module-consistent shapes.
    B, Nq, Nk = 2, 8, 8
    dim_Q = dim_K = 16

    def make_params(key, dim_q, dim_k, n_dim):
        ks = jax.random.split(key, 8)
        def linear_init(kw, kb, fan_in, fan_out):
            bound = 1.0 / math.sqrt(fan_in)
            w = jax.random.uniform(kw, (fan_in, fan_out), jnp.float32, -bound, bound)
            b = jax.random.uniform(kb, (1, fan_out), jnp.float32, -bound, bound)
            return w, b
        wq, bq = linear_init(ks[0], ks[1], dim_q, n_dim)
        wk, bk = linear_init(ks[2], ks[3], dim_k, n_dim)
        wv, bv = linear_init(ks[4], ks[5], dim_k, n_dim)
        wo, bo = linear_init(ks[6], ks[7], n_dim, n_dim)
        return (wq, bq, wk, bk, wv, bv, wo, bo)

    key = jax.random.PRNGKey(0)
    kq, kk, kp1, kp2 = jax.random.split(key, 4)
    Q = jax.random.normal(kq, (B, Nq, dim_Q), jnp.float32)
    K = jax.random.normal(kk, (B, Nk, dim_K), jnp.float32)

    # Config A: n_dim=32, heads=4 -> unfused K/V path (32 % 128 != 0).
    n_dim_a, heads_a = 32, 4
    params_a = make_params(kp1, dim_Q, dim_K, n_dim_a)
    ref_a = mab2_reference(Q, K, params_a, n_dim=n_dim_a, num_heads=heads_a)

    out_bf16 = jax.block_until_ready(
        mab2_forward(Q, K, params_a, n_dim=n_dim_a, num_heads=heads_a))
    assert out_bf16.shape == (B, Nq, n_dim_a)
    # bf16 MXU operands + approximate-reciprocal softmax -> loose tolerance.
    assert jnp.allclose(out_bf16, ref_a, atol=1e-1, rtol=1e-1), "bf16 kernel mismatch"

    # f32 matmul path: tight tolerance (only the approx reciprocal differs).
    out_f32 = jax.block_until_ready(
        mab2_forward(Q, K, params_a, n_dim=n_dim_a, num_heads=heads_a,
                     matmul_dtype=jnp.float32))
    assert jnp.allclose(out_f32, ref_a, atol=5e-3, rtol=5e-3), "f32 kernel mismatch"

    # Config B: n_dim=128 exercises the lane-aligned fused K|V projection path.
    n_dim_b, heads_b = 128, 4
    params_b = make_params(kp2, dim_Q, dim_K, n_dim_b)
    ref_b = mab2_reference(Q, K, params_b, n_dim=n_dim_b, num_heads=heads_b)
    out_b = jax.block_until_ready(
        mab2_forward(Q, K, params_b, n_dim=n_dim_b, num_heads=heads_b))
    assert jnp.allclose(out_b, ref_b, atol=1e-1, rtol=1e-1), "fused-KV kernel mismatch"

    print("KERNEL_OK")
</pallas_src>

<mosaic_0001>
module attributes {stable_mosaic.version = 11 : i64} {
  func.func @mab2_kernel(%arg0: i32, %arg1: memref<2x8x16xf32, #tpu.memory_space<vmem>>, %arg2: memref<2x8x16xf32, #tpu.memory_space<vmem>>, %arg3: memref<16x32xbf16, #tpu.memory_space<vmem>>, %arg4: memref<1x32xf32, #tpu.memory_space<vmem>>, %arg5: memref<16x32xbf16, #tpu.memory_space<vmem>>, %arg6: memref<1x32xf32, #tpu.memory_space<vmem>>, %arg7: memref<16x32xbf16, #tpu.memory_space<vmem>>, %arg8: memref<1x32xf32, #tpu.memory_space<vmem>>, %arg9: memref<32x32xbf16, #tpu.memory_space<vmem>>, %arg10: memref<1x32xf32, #tpu.memory_space<vmem>>, %arg11: memref<2x8x32xf32, #tpu.memory_space<vmem>>, %arg12: memref<16x32xf32, #tpu.memory_space<vmem>>, %arg13: memref<16x32xbf16, #tpu.memory_space<vmem>>, %arg14: memref<16x32xbf16, #tpu.memory_space<vmem>>, %arg15: memref<16x32xbf16, #tpu.memory_space<vmem>>, %arg16: memref<16x32xf32, #tpu.memory_space<vmem>>) attributes {dimension_semantics = [#tpu.dimension_semantics<parallel>], iteration_bounds = array<i64: 1>, scalar_prefetch = 0 : i64, scratch_operands = 5 : i64, tpu.core_type = #tpu.core_type<tc>, window_params = [{transform_indices = @transform_0, window_bounds = array<i64: 2, 8, 16>}, {transform_indices = @transform_1, window_bounds = array<i64: 2, 8, 16>}, {pipeline_mode = #tpu.pipeline_mode<synchronous>, transform_indices = @transform_2, window_bounds = array<i64: 16, 32>}, {pipeline_mode = #tpu.pipeline_mode<synchronous>, transform_indices = @transform_3, window_bounds = array<i64: 1, 32>}, {pipeline_mode = #tpu.pipeline_mode<synchronous>, transform_indices = @transform_4, window_bounds = array<i64: 16, 32>}, {pipeline_mode = #tpu.pipeline_mode<synchronous>, transform_indices = @transform_5, window_bounds = array<i64: 1, 32>}, {pipeline_mode = #tpu.pipeline_mode<synchronous>, transform_indices = @transform_6, window_bounds = array<i64: 16, 32>}, {pipeline_mode = #tpu.pipeline_mode<synchronous>, transform_indices = @transform_7, window_bounds = array<i64: 1, 32>}, {pipeline_mode = #tpu.pipeline_mode<synchronous>, transform_indices = @transform_8, window_bounds = array<i64: 32, 32>}, {pipeline_mode = #tpu.pipeline_mode<synchronous>, transform_indices = @transform_9, window_bounds = array<i64: 1, 32>}, {transform_indices = @transform_10, window_bounds = array<i64: 2, 8, 32>}]} {
    %c0 = arith.constant 0 : index
    %c0_0 = arith.constant 0 : index
    %c0_1 = arith.constant 0 : index
    %0 = vector.load %arg1[%c0, %c0_0, %c0_1] : memref<2x8x16xf32, #tpu.memory_space<vmem>>, vector<2x8x16xf32>
    %1 = vector.shape_cast %0 : vector<2x8x16xf32> to vector<16x16xf32>
    %2 = arith.truncf %1 : vector<16x16xf32> to vector<16x16xbf16>
    %c0_2 = arith.constant 0 : index
    %c0_3 = arith.constant 0 : index
    %c0_4 = arith.constant 0 : index
    %3 = vector.load %arg2[%c0_2, %c0_3, %c0_4] : memref<2x8x16xf32, #tpu.memory_space<vmem>>, vector<2x8x16xf32>
    %4 = vector.shape_cast %3 : vector<2x8x16xf32> to vector<16x16xf32>
    %5 = arith.truncf %4 : vector<16x16xf32> to vector<16x16xbf16>
    %c0_5 = arith.constant 0 : index
    %c0_6 = arith.constant 0 : index
    %6 = vector.load %arg3[%c0_5, %c0_6] : memref<16x32xbf16, #tpu.memory_space<vmem>>, vector<16x32xbf16>
    %cst = arith.constant dense<0.000000e+00> : vector<16x32xf32>
    %7 = tpu.matmul %2, %6, %cst {dimension_numbers = #tpu.dot_dimension_numbers<[1], [0], [0], [1], [0, 0, 1, 1], [], []>} : vector<16x16xbf16>, vector<16x32xbf16>, vector<16x32xf32> -> vector<16x32xf32>
    %c0_7 = arith.constant 0 : index
    %c0_8 = arith.constant 0 : index
    %8 = vector.load %arg4[%c0_7, %c0_8] : memref<1x32xf32, #tpu.memory_space<vmem>>, vector<1x32xf32>
    %9 = vector.broadcast %8 : vector<1x32xf32> to vector<16x32xf32>
    %10 = arith.addf %7, %9 : vector<16x32xf32>
    %c0_9 = arith.constant 0 : index
    %c0_10 = arith.constant 0 : index
    %11 = vector.load %arg12[%c0_9, %c0_10] : memref<16x32xf32, #tpu.memory_space<vmem>>, vector<16x32xf32>
    tpu.vector_store %arg12[%c0_9, %c0_10], %10 {strides = array<i32>} : memref<16x32xf32, #tpu.memory_space<vmem>>, vector<16x32xf32>,
    %12 = arith.truncf %10 : vector<16x32xf32> to vector<16x32xbf16>
    %c0_11 = arith.constant 0 : index
    %c0_12 = arith.constant 0 : index
    %13 = vector.load %arg13[%c0_11, %c0_12] : memref<16x32xbf16, #tpu.memory_space<vmem>>, vector<16x32xbf16>
    tpu.vector_store %arg13[%c0_11, %c0_12], %12 {strides = array<i32>} : memref<16x32xbf16, #tpu.memory_space<vmem>>, vector<16x32xbf16>,
    %c0_13 = arith.constant 0 : index
    %c0_14 = arith.constant 0 : index
    %14 = vector.load %arg5[%c0_13, %c0_14] : memref<16x32xbf16, #tpu.memory_space<vmem>>, vector<16x32xbf16>
    %cst_15 = arith.constant dense<0.000000e+00> : vector<16x32xf32>
    %15 = tpu.matmul %5, %14, %cst_15 {dimension_numbers = #tpu.dot_dimension_numbers<[1], [0], [0], [1], [0, 0, 1, 1], [], []>} : vector<16x16xbf16>, vector<16x32xbf16>, vector<16x32xf32> -> vector<16x32xf32>
    %c0_16 = arith.constant 0 : index
    %c0_17 = arith.constant 0 : index
    %16 = vector.load %arg6[%c0_16, %c0_17] : memref<1x32xf32, #tpu.memory_space<vmem>>, vector<1x32xf32>
    %17 = vector.broadcast %16 : vector<1x32xf32> to vector<16x32xf32>
    %18 = arith.addf %15, %17 : vector<16x32xf32>
    %c0_18 = arith.constant 0 : index
    %c0_19 = arith.constant 0 : index
    %19 = vector.load %arg7[%c0_18, %c0_19] : memref<16x32xbf16, #tpu.memory_space<vmem>>, vector<16x32xbf16>
    %cst_20 = arith.constant dense<0.000000e+00> : vector<16x32xf32>
    %20 = tpu.matmul %5, %19, %cst_20 {dimension_numbers = #tpu.dot_dimension_numbers<[1], [0], [0], [1], [0, 0, 1, 1], [], []>} : vector<16x16xbf16>, vector<16x32xbf16>, vector<16x32xf32> -> vector<16x32xf32>
    %c0_21 = arith.constant 0 : index
    %c0_22 = arith.constant 0 : index
    %21 = vector.load %arg8[%c0_21, %c0_22] : memref<1x32xf32, #tpu.memory_space<vmem>>, vector<1x32xf32>
    %22 = vector.broadcast %21 : vector<1x32xf32> to vector<16x32xf32>
    %23 = arith.addf %20, %22 : vector<16x32xf32>
    %cst_23 = arith.constant 0.176776692 : f32
    %24 = vector.broadcast %cst_23 : f32 to vector<16x32xf32>
    %25 = arith.mulf %18, %24 : vector<16x32xf32>
    %26 = arith.truncf %25 : vector<16x32xf32> to vector<16x32xbf16>
    %c0_24 = arith.constant 0 : index
    %c0_25 = arith.constant 0 : index
    %27 = vector.load %arg14[%c0_24, %c0_25] : memref<16x32xbf16, #tpu.memory_space<vmem>>, vector<16x32xbf16>
    tpu.vector_store %arg14[%c0_24, %c0_25], %26 {strides = array<i32>} : memref<16x32xbf16, #tpu.memory_space<vmem>>, vector<16x32xbf16>,
    %28 = arith.truncf %23 : vector<16x32xf32> to vector<16x32xbf16>
    %c0_26 = arith.constant 0 : index
    %c0_27 = arith.constant 0 : index
    %29 = vector.load %arg15[%c0_26, %c0_27] : memref<16x32xbf16, #tpu.memory_space<vmem>>, vector<16x32xbf16>
    tpu.vector_store %arg15[%c0_26, %c0_27], %28 {strides = array<i32>} : memref<16x32xbf16, #tpu.memory_space<vmem>>, vector<16x32xbf16>,
    %c0_28 = arith.constant 0 : index
    %c0_29 = arith.constant 0 : index
    %30 = vector.load %arg13[%c0_28, %c0_29] : memref<16x32xbf16, #tpu.memory_space<vmem>>, vector<16x8xbf16>
    %31 = vector.shape_cast %30 : vector<16x8xbf16> to vector<2x8x8xbf16>
    %c0_30 = arith.constant 0 : index
    %c0_31 = arith.constant 0 : index
    %32 = vector.load %arg14[%c0_30, %c0_31] : memref<16x32xbf16, #tpu.memory_space<vmem>>, vector<16x8xbf16>
    %33 = vector.shape_cast %32 : vector<16x8xbf16> to vector<2x8x8xbf16>
    %c0_32 = arith.constant 0 : index
    %c0_33 = arith.constant 0 : index
    %34 = vector.load %arg15[%c0_32, %c0_33] : memref<16x32xbf16, #tpu.memory_space<vmem>>, vector<16x8xbf16>
    %35 = vector.shape_cast %34 : vector<16x8xbf16> to vector<2x8x8xbf16>
    "tpu.trace_start"() <{level = 10 : i32, message = "bqd,bkd->bqk"}> : () -> ()
    %cst_34 = arith.constant dense<0.000000e+00> : vector<2x8x8xf32>
    %36 = tpu.matmul %31, %33, %cst_34 {dimension_numbers = #tpu.dot_dimension_numbers<[2], [2], [1], [1], [0, 0, 0, 1, 1, 1], [0], [0]>} : vector<2x8x8xbf16>, vector<2x8x8xbf16>, vector<2x8x8xf32> -> vector<2x8x8xf32>
    "tpu.trace_stop"() : () -> ()
    %cst_35 = arith.constant dense<0xFF800000> : vector<2x8xf32>
    %37 = vector.multi_reduction <maximumf>, %36, %cst_35 [2] : vector<2x8x8xf32> to vector<2x8xf32>
    %38 = vector.shape_cast %37 : vector<2x8xf32> to vector<2x8x1xf32>
    %39 = vector.broadcast %38 : vector<2x8x1xf32> to vector<2x8x8xf32>
    %40 = arith.subf %36, %39 : vector<2x8x8xf32>
    %41 = math.exp %40 : vector<2x8x8xf32>
    %cst_36 = arith.constant dense<0.000000e+00> : vector<2x8xf32>
    %42 = vector.multi_reduction <add>, %41, %cst_36 [2] : vector<2x8x8xf32> to vector<2x8xf32>
    %43 = vector.shape_cast %42 : vector<2x8xf32> to vector<2x8x1xf32>
    %44 = arith.truncf %41 : vector<2x8x8xf32> to vector<2x8x8xbf16>
    "tpu.trace_start"() <{level = 10 : i32, message = "bqk,bkd->bqd"}> : () -> ()
    %cst_37 = arith.constant dense<0.000000e+00> : vector<2x8x8xf32>
    %45 = tpu.matmul %44, %35, %cst_37 {dimension_numbers = #tpu.dot_dimension_numbers<[2], [1], [1], [2], [0, 0, 0, 1, 1, 2], [0], [0]>} : vector<2x8x8xbf16>, vector<2x8x8xbf16>, vector<2x8x8xf32> -> vector<2x8x8xf32>
    "tpu.trace_stop"() : () -> ()
    %46 = tpu.reciprocal %43 {approx = true} : vector<2x8x1xf32> -> vector<2x8x1xf32>
    %47 = vector.broadcast %46 : vector<2x8x1xf32> to vector<2x8x8xf32>
    %48 = arith.mulf %45, %47 : vector<2x8x8xf32>
    %49 = vector.shape_cast %48 : vector<2x8x8xf32> to vector<16x8xf32>
    %c0_38 = arith.constant 0 : index
    %c0_39 = arith.constant 0 : index
    %50 = vector.load %arg16[%c0_38, %c0_39] : memref<16x32xf32, #tpu.memory_space<vmem>>, vector<16x8xf32>
    tpu.vector_store %arg16[%c0_38, %c0_39], %49 {strides = array<i32>} : memref<16x32xf32, #tpu.memory_space<vmem>>, vector<16x8xf32>,
    %c0_40 = arith.constant 0 : index
    %c8 = arith.constant 8 : index
    %51 = vector.load %arg13[%c0_40, %c8] : memref<16x32xbf16, #tpu.memory_space<vmem>>, vector<16x8xbf16>
    %52 = vector.shape_cast %51 : vector<16x8xbf16> to vector<2x8x8xbf16>
    %c0_41 = arith.constant 0 : index
    %c8_42 = arith.constant 8 : index
    %53 = vector.load %arg14[%c0_41, %c8_42] : memref<16x32xbf16, #tpu.memory_space<vmem>>, vector<16x8xbf16>
    %54 = vector.shape_cast %53 : vector<16x8xbf16> to vector<2x8x8xbf16>
    %c0_43 = arith.constant 0 : index
    %c8_44 = arith.constant 8 : index
    %55 = vector.load %arg15[%c0_43, %c8_44] : memref<16x32xbf16, #tpu.memory_space<vmem>>, vector<16x8xbf16>
    %56 = vector.shape_cast %55 : vector<16x8xbf16> to vector<2x8x8xbf16>
    "tpu.trace_start"() <{level = 10 : i32, message = "bqd,bkd->bqk"}> : () -> ()
    %cst_45 = arith.constant dense<0.000000e+00> : vector<2x8x8xf32>
    %57 = tpu.matmul %52, %54, %cst_45 {dimension_numbers = #tpu.dot_dimension_numbers<[2], [2], [1], [1], [0, 0, 0, 1, 1, 1], [0], [0]>} : vector<2x8x8xbf16>, vector<2x8x8xbf16>, vector<2x8x8xf32> -> vector<2x8x8xf32>
    "tpu.trace_stop"() : () -> ()
    %cst_46 = arith.constant dense<0xFF800000> : vector<2x8xf32>
    %58 = vector.multi_reduction <maximumf>, %57, %cst_46 [2] : vector<2x8x8xf32> to vector<2x8xf32>
    %59 = vector.shape_cast %58 : vector<2x8xf32> to vector<2x8x1xf32>
    %60 = vector.broadcast %59 : vector<2x8x1xf32> to vector<2x8x8xf32>
    %61 = arith.subf %57, %60 : vector<2x8x8xf32>
    %62 = math.exp %61 : vector<2x8x8xf32>
    %cst_47 = arith.constant dense<0.000000e+00> : vector<2x8xf32>
    %63 = vector.multi_reduction <add>, %62, %cst_47 [2] : vector<2x8x8xf32> to vector<2x8xf32>
    %64 = vector.shape_cast %63 : vector<2x8xf32> to vector<2x8x1xf32>
    %65 = arith.truncf %62 : vector<2x8x8xf32> to vector<2x8x8xbf16>
    "tpu.trace_start"() <{level = 10 : i32, message = "bqk,bkd->bqd"}> : () -> ()
    %cst_48 = arith.constant dense<0.000000e+00> : vector<2x8x8xf32>
    %66 = tpu.matmul %65, %56, %cst_48 {dimension_numbers = #tpu.dot_dimension_numbers<[2], [1], [1], [2], [0, 0, 0, 1, 1, 2], [0], [0]>} : vector<2x8x8xbf16>, vector<2x8x8xbf16>, vector<2x8x8xf32> -> vector<2x8x8xf32>
    "tpu.trace_stop"() : () -> ()
    %67 = tpu.reciprocal %64 {approx = true} : vector<2x8x1xf32> -> vector<2x8x1xf32>
    %68 = vector.broadcast %67 : vector<2x8x1xf32> to vector<2x8x8xf32>
    %69 = arith.mulf %66, %68 : vector<2x8x8xf32>
    %70 = vector.shape_cast %69 : vector<2x8x8xf32> to vector<16x8xf32>
    %c0_49 = arith.constant 0 : index
    %c8_50 = arith.constant 8 : index
    %71 = vector.load %arg16[%c0_49, %c8_50] : memref<16x32xf32, #tpu.memory_space<vmem>>, vector<16x8xf32>
    tpu.vector_store %arg16[%c0_49, %c8_50], %70 {strides = array<i32>} : memref<16x32xf32, #tpu.memory_space<vmem>>, vector<16x8xf32>,
    %c0_51 = arith.constant 0 : index
    %c16 = arith.constant 16 : index
    %72 = vector.load %arg13[%c0_51, %c16] : memref<16x32xbf16, #tpu.memory_space<vmem>>, vector<16x8xbf16>
    %73 = vector.shape_cast %72 : vector<16x8xbf16> to vector<2x8x8xbf16>
    %c0_52 = arith.constant 0 : index
    %c16_53 = arith.constant 16 : index
    %74 = vector.load %arg14[%c0_52, %c16_53] : memref<16x32xbf16, #tpu.memory_space<vmem>>, vector<16x8xbf16>
    %75 = vector.shape_cast %74 : vector<16x8xbf16> to vector<2x8x8xbf16>
    %c0_54 = arith.constant 0 : index
    %c16_55 = arith.constant 16 : index
    %76 = vector.load %arg15[%c0_54, %c16_55] : memref<16x32xbf16, #tpu.memory_space<vmem>>, vector<16x8xbf16>
    %77 = vector.shape_cast %76 : vector<16x8xbf16> to vector<2x8x8xbf16>
    "tpu.trace_start"() <{level = 10 : i32, message = "bqd,bkd->bqk"}> : () -> ()
    %cst_56 = arith.constant dense<0.000000e+00> : vector<2x8x8xf32>
    %78 = tpu.matmul %73, %75, %cst_56 {dimension_numbers = #tpu.dot_dimension_numbers<[2], [2], [1], [1], [0, 0, 0, 1, 1, 1], [0], [0]>} : vector<2x8x8xbf16>, vector<2x8x8xbf16>, vector<2x8x8xf32> -> vector<2x8x8xf32>
    "tpu.trace_stop"() : () -> ()
    %cst_57 = arith.constant dense<0xFF800000> : vector<2x8xf32>
    %79 = vector.multi_reduction <maximumf>, %78, %cst_57 [2] : vector<2x8x8xf32> to vector<2x8xf32>
    %80 = vector.shape_cast %79 : vector<2x8xf32> to vector<2x8x1xf32>
    %81 = vector.broadcast %80 : vector<2x8x1xf32> to vector<2x8x8xf32>
    %82 = arith.subf %78, %81 : vector<2x8x8xf32>
    %83 = math.exp %82 : vector<2x8x8xf32>
    %cst_58 = arith.constant dense<0.000000e+00> : vector<2x8xf32>
    %84 = vector.multi_reduction <add>, %83, %cst_58 [2] : vector<2x8x8xf32> to vector<2x8xf32>
    %85 = vector.shape_cast %84 : vector<2x8xf32> to vector<2x8x1xf32>
    %86 = arith.truncf %83 : vector<2x8x8xf32> to vector<2x8x8xbf16>
    "tpu.trace_start"() <{level = 10 : i32, message = "bqk,bkd->bqd"}> : () -> ()
    %cst_59 = arith.constant dense<0.000000e+00> : vector<2x8x8xf32>
    %87 = tpu.matmul %86, %77, %cst_59 {dimension_numbers = #tpu.dot_dimension_numbers<[2], [1], [1], [2], [0, 0, 0, 1, 1, 2], [0], [0]>} : vector<2x8x8xbf16>, vector<2x8x8xbf16>, vector<2x8x8xf32> -> vector<2x8x8xf32>
    "tpu.trace_stop"() : () -> ()
    %88 = tpu.reciprocal %85 {approx = true} : vector<2x8x1xf32> -> vector<2x8x1xf32>
    %89 = vector.broadcast %88 : vector<2x8x1xf32> to vector<2x8x8xf32>
    %90 = arith.mulf %87, %89 : vector<2x8x8xf32>
    %91 = vector.shape_cast %90 : vector<2x8x8xf32> to vector<16x8xf32>
    %c0_60 = arith.constant 0 : index
    %c16_61 = arith.constant 16 : index
    %92 = vector.load %arg16[%c0_60, %c16_61] : memref<16x32xf32, #tpu.memory_space<vmem>>, vector<16x8xf32>
    tpu.vector_store %arg16[%c0_60, %c16_61], %91 {strides = array<i32>} : memref<16x32xf32, #tpu.memory_space<vmem>>, vector<16x8xf32>,
    %c0_62 = arith.constant 0 : index
    %c24 = arith.constant 24 : index
    %93 = vector.load %arg13[%c0_62, %c24] : memref<16x32xbf16, #tpu.memory_space<vmem>>, vector<16x8xbf16>
    %94 = vector.shape_cast %93 : vector<16x8xbf16> to vector<2x8x8xbf16>
    %c0_63 = arith.constant 0 : index
    %c24_64 = arith.constant 24 : index
    %95 = vector.load %arg14[%c0_63, %c24_64] : memref<16x32xbf16, #tpu.memory_space<vmem>>, vector<16x8xbf16>
    %96 = vector.shape_cast %95 : vector<16x8xbf16> to vector<2x8x8xbf16>
    %c0_65 = arith.constant 0 : index
    %c24_66 = arith.constant 24 : index
    %97 = vector.load %arg15[%c0_65, %c24_66] : memref<16x32xbf16, #tpu.memory_space<vmem>>, vector<16x8xbf16>
    %98 = vector.shape_cast %97 : vector<16x8xbf16> to vector<2x8x8xbf16>
    "tpu.trace_start"() <{level = 10 : i32, message = "bqd,bkd->bqk"}> : () -> ()
    %cst_67 = arith.constant dense<0.000000e+00> : vector<2x8x8xf32>
    %99 = tpu.matmul %94, %96, %cst_67 {dimension_numbers = #tpu.dot_dimension_numbers<[2], [2], [1], [1], [0, 0, 0, 1, 1, 1], [0], [0]>} : vector<2x8x8xbf16>, vector<2x8x8xbf16>, vector<2x8x8xf32> -> vector<2x8x8xf32>
    "tpu.trace_stop"() : () -> ()
    %cst_68 = arith.constant dense<0xFF800000> : vector<2x8xf32>
    %100 = vector.multi_reduction <maximumf>, %99, %cst_68 [2] : vector<2x8x8xf32> to vector<2x8xf32>
    %101 = vector.shape_cast %100 : vector<2x8xf32> to vector<2x8x1xf32>
    %102 = vector.broadcast %101 : vector<2x8x1xf32> to vector<2x8x8xf32>
    %103 = arith.subf %99, %102 : vector<2x8x8xf32>
    %104 = math.exp %103 : vector<2x8x8xf32>
    %cst_69 = arith.constant dense<0.000000e+00> : vector<2x8xf32>
    %105 = vector.multi_reduction <add>, %104, %cst_69 [2] : vector<2x8x8xf32> to vector<2x8xf32>
    %106 = vector.shape_cast %105 : vector<2x8xf32> to vector<2x8x1xf32>
    %107 = arith.truncf %104 : vector<2x8x8xf32> to vector<2x8x8xbf16>
    "tpu.trace_start"() <{level = 10 : i32, message = "bqk,bkd->bqd"}> : () -> ()
    %cst_70 = arith.constant dense<0.000000e+00> : vector<2x8x8xf32>
    %108 = tpu.matmul %107, %98, %cst_70 {dimension_numbers = #tpu.dot_dimension_numbers<[2], [1], [1], [2], [0, 0, 0, 1, 1, 2], [0], [0]>} : vector<2x8x8xbf16>, vector<2x8x8xbf16>, vector<2x8x8xf32> -> vector<2x8x8xf32>
    "tpu.trace_stop"() : () -> ()
    %109 = tpu.reciprocal %106 {approx = true} : vector<2x8x1xf32> -> vector<2x8x1xf32>
    %110 = vector.broadcast %109 : vector<2x8x1xf32> to vector<2x8x8xf32>
    %111 = arith.mulf %108, %110 : vector<2x8x8xf32>
    %112 = vector.shape_cast %111 : vector<2x8x8xf32> to vector<16x8xf32>
    %c0_71 = arith.constant 0 : index
    %c24_72 = arith.constant 24 : index
    %113 = vector.load %arg16[%c0_71, %c24_72] : memref<16x32xf32, #tpu.memory_space<vmem>>, vector<16x8xf32>
    tpu.vector_store %arg16[%c0_71, %c24_72], %112 {strides = array<i32>} : memref<16x32xf32, #tpu.memory_space<vmem>>, vector<16x8xf32>,
    %c0_73 = arith.constant 0 : index
    %c0_74 = arith.constant 0 : index
    %114 = vector.load %arg12[%c0_73, %c0_74] : memref<16x32xf32, #tpu.memory_space<vmem>>, vector<16x32xf32>
    %c0_75 = arith.constant 0 : index
    %c0_76 = arith.constant 0 : index
    %115 = vector.load %arg16[%c0_75, %c0_76] : memref<16x32xf32, #tpu.memory_space<vmem>>, vector<16x32xf32>
    %116 = arith.addf %114, %115 : vector<16x32xf32>
    %117 = arith.truncf %116 : vector<16x32xf32> to vector<16x32xbf16>
    %c0_77 = arith.constant 0 : index
    %c0_78 = arith.constant 0 : index
    %118 = vector.load %arg9[%c0_77, %c0_78] : memref<32x32xbf16, #tpu.memory_space<vmem>>, vector<32x32xbf16>
    %cst_79 = arith.constant dense<0.000000e+00> : vector<16x32xf32>
    %119 = tpu.matmul %117, %118, %cst_79 {dimension_numbers = #tpu.dot_dimension_numbers<[1], [0], [0], [1], [0, 0, 1, 1], [], []>} : vector<16x32xbf16>, vector<32x32xbf16>, vector<16x32xf32> -> vector<16x32xf32>
    %c0_80 = arith.constant 0 : index
    %c0_81 = arith.constant 0 : index
    %120 = vector.load %arg10[%c0_80, %c0_81] : memref<1x32xf32, #tpu.memory_space<vmem>>, vector<1x32xf32>
    %121 = vector.broadcast %120 : vector<1x32xf32> to vector<16x32xf32>
    %122 = arith.addf %119, %121 : vector<16x32xf32>
    %cst_82 = arith.constant 0.000000e+00 : f32
    %123 = vector.broadcast %cst_82 : f32 to vector<16x32xf32>
    %124 = arith.maximumf %122, %123 : vector<16x32xf32>
    %125 = arith.addf %116, %124 : vector<16x32xf32>
    %126 = vector.shape_cast %125 : vector<16x32xf32> to vector<2x8x32xf32>
    %c0_83 = arith.constant 0 : index
    %c0_84 = arith.constant 0 : index
    %c0_85 = arith.constant 0 : index
    %127 = vector.load %arg11[%c0_83, %c0_84, %c0_85] : memref<2x8x32xf32, #tpu.memory_space<vmem>>, vector<2x8x32xf32>
    tpu.vector_store %arg11[%c0_83, %c0_84, %c0_85], %126 {strides = array<i32>} : memref<2x8x32xf32, #tpu.memory_space<vmem>>, vector<2x8x32xf32>,
    return
  }
  func.func @transform_0(%arg0: i32) -> (i32, i32, i32) {
    %c0_i32 = arith.constant 0 : i32
    %c0_i32_0 = arith.constant 0 : i32
    %c0_i32_1 = arith.constant 0 : i32
    return %arg0, %c0_i32, %c0_i32_0 : i32, i32, i32
  }
  func.func @transform_1(%arg0: i32) -> (i32, i32, i32) {
    %c0_i32 = arith.constant 0 : i32
    %c0_i32_0 = arith.constant 0 : i32
    %c0_i32_1 = arith.constant 0 : i32
    return %arg0, %c0_i32, %c0_i32_0 : i32, i32, i32
  }
  func.func @transform_2(%arg0: i32) -> (i32, i32) {
    %c0_i32 = arith.constant 0 : i32
    %c0_i32_0 = arith.constant 0 : i32
    %c0_i32_1 = arith.constant 0 : i32
    return %c0_i32, %c0_i32_0 : i32, i32
  }
  func.func @transform_3(%arg0: i32) -> (i32, i32) {
    %c0_i32 = arith.constant 0 : i32
    %c0_i32_0 = arith.constant 0 : i32
    %c0_i32_1 = arith.constant 0 : i32
    return %c0_i32, %c0_i32_0 : i32, i32
  }
  func.func @transform_4(%arg0: i32) -> (i32, i32) {
    %c0_i32 = arith.constant 0 : i32
    %c0_i32_0 = arith.constant 0 : i32
    %c0_i32_1 = arith.constant 0 : i32
    return %c0_i32, %c0_i32_0 : i32, i32
  }
  func.func @transform_5(%arg0: i32) -> (i32, i32) {
    %c0_i32 = arith.constant 0 : i32
    %c0_i32_0 = arith.constant 0 : i32
    %c0_i32_1 = arith.constant 0 : i32
    return %c0_i32, %c0_i32_0 : i32, i32
  }
  func.func @transform_6(%arg0: i32) -> (i32, i32) {
    %c0_i32 = arith.constant 0 : i32
    %c0_i32_0 = arith.constant 0 : i32
    %c0_i32_1 = arith.constant 0 : i32
    return %c0_i32, %c0_i32_0 : i32, i32
  }
  func.func @transform_7(%arg0: i32) -> (i32, i32) {
    %c0_i32 = arith.constant 0 : i32
    %c0_i32_0 = arith.constant 0 : i32
    %c0_i32_1 = arith.constant 0 : i32
    return %c0_i32, %c0_i32_0 : i32, i32
  }
  func.func @transform_8(%arg0: i32) -> (i32, i32) {
    %c0_i32 = arith.constant 0 : i32
    %c0_i32_0 = arith.constant 0 : i32
    %c0_i32_1 = arith.constant 0 : i32
    return %c0_i32, %c0_i32_0 : i32, i32
  }
  func.func @transform_9(%arg0: i32) -> (i32, i32) {
    %c0_i32 = arith.constant 0 : i32
    %c0_i32_0 = arith.constant 0 : i32
    %c0_i32_1 = arith.constant 0 : i32
    return %c0_i32, %c0_i32_0 : i32, i32
  }
  func.func @transform_10(%arg0: i32) -> (i32, i32, i32) {
    %c0_i32 = arith.constant 0 : i32
    %c0_i32_0 = arith.constant 0 : i32
    %c0_i32_1 = arith.constant 0 : i32
    return %arg0, %c0_i32, %c0_i32_0 : i32, i32, i32
  }
}

module attributes {stable_mosaic.version = 11 : i64} {
  func.func @mab2_kernel(%arg0: i32, %arg1: memref<2x8x16xf32, #tpu.memory_space<vmem>>, %arg2: memref<2x8x16xf32, #tpu.memory_space<vmem>>, %arg3: memref<16x32xbf16, #tpu.memory_space<vmem>>, %arg4: memref<1x32xf32, #tpu.memory_space<vmem>>, %arg5: memref<16x32xbf16, #tpu.memory_space<vmem>>, %arg6: memref<1x32xf32, #tpu.memory_space<vmem>>, %arg7: memref<16x32xbf16, #tpu.memory_space<vmem>>, %arg8: memref<1x32xf32, #tpu.memory_space<vmem>>, %arg9: memref<32x32xbf16, #tpu.memory_space<vmem>>, %arg10: memref<1x32xf32, #tpu.memory_space<vmem>>, %arg11: memref<2x8x32xf32, #tpu.memory_space<vmem>>, %arg12: memref<16x32xf32, #tpu.memory_space<vmem>>, %arg13: memref<16x32xbf16, #tpu.memory_space<vmem>>, %arg14: memref<16x32xbf16, #tpu.memory_space<vmem>>, %arg15: memref<16x32xbf16, #tpu.memory_space<vmem>>, %arg16: memref<16x32xf32, #tpu.memory_space<vmem>>) attributes {dimension_semantics = [#tpu.dimension_semantics<parallel>], iteration_bounds = array<i64: 1>, scalar_prefetch = 0 : i64, scratch_operands = 5 : i64, tpu.core_type = #tpu.core_type<tc>, window_params = [{transform_indices = @transform_0, window_bounds = array<i64: 2, 8, 16>}, {transform_indices = @transform_1, window_bounds = array<i64: 2, 8, 16>}, {pipeline_mode = #tpu.pipeline_mode<synchronous>, transform_indices = @transform_2, window_bounds = array<i64: 16, 32>}, {pipeline_mode = #tpu.pipeline_mode<synchronous>, transform_indices = @transform_3, window_bounds = array<i64: 1, 32>}, {pipeline_mode = #tpu.pipeline_mode<synchronous>, transform_indices = @transform_4, window_bounds = array<i64: 16, 32>}, {pipeline_mode = #tpu.pipeline_mode<synchronous>, transform_indices = @transform_5, window_bounds = array<i64: 1, 32>}, {pipeline_mode = #tpu.pipeline_mode<synchronous>, transform_indices = @transform_6, window_bounds = array<i64: 16, 32>}, {pipeline_mode = #tpu.pipeline_mode<synchronous>, transform_indices = @transform_7, window_bounds = array<i64: 1, 32>}, {pipeline_mode = #tpu.pipeline_mode<synchronous>, transform_indices = @transform_8, window_bounds = array<i64: 32, 32>}, {pipeline_mode = #tpu.pipeline_mode<synchronous>, transform_indices = @transform_9, window_bounds = array<i64: 1, 32>}, {transform_indices = @transform_10, window_bounds = array<i64: 2, 8, 32>}]} {
    %c0 = arith.constant 0 : index
    %c0_0 = arith.constant 0 : index
    %c0_1 = arith.constant 0 : index
    %0 = vector.load %arg1[%c0, %c0_0, %c0_1] : memref<2x8x16xf32, #tpu.memory_space<vmem>>, vector<2x8x16xf32>
    %1 = vector.shape_cast %0 : vector<2x8x16xf32> to vector<16x16xf32>
    %2 = arith.truncf %1 : vector<16x16xf32> to vector<16x16xbf16>
    %c0_2 = arith.constant 0 : index
    %c0_3 = arith.constant 0 : index
    %c0_4 = arith.constant 0 : index
    %3 = vector.load %arg2[%c0_2, %c0_3, %c0_4] : memref<2x8x16xf32, #tpu.memory_space<vmem>>, vector<2x8x16xf32>
    %4 = vector.shape_cast %3 : vector<2x8x16xf32> to vector<16x16xf32>
    %5 = arith.truncf %4 : vector<16x16xf32> to vector<16x16xbf16>
    %c0_5 = arith.constant 0 : index
    %c0_6 = arith.constant 0 : index
    %6 = vector.load %arg3[%c0_5, %c0_6] : memref<16x32xbf16, #tpu.memory_space<vmem>>, vector<16x32xbf16>
    %cst = arith.constant dense<0.000000e+00> : vector<16x32xf32>
    %7 = tpu.matmul %2, %6, %cst {dimension_numbers = #tpu.dot_dimension_numbers<[1], [0], [0], [1], [0, 0, 1, 1], [], []>} : vector<16x16xbf16>, vector<16x32xbf16>, vector<16x32xf32> -> vector<16x32xf32>
    %c0_7 = arith.constant 0 : index
    %c0_8 = arith.constant 0 : index
    %8 = vector.load %arg4[%c0_7, %c0_8] : memref<1x32xf32, #tpu.memory_space<vmem>>, vector<1x32xf32>
    %9 = vector.broadcast %8 : vector<1x32xf32> to vector<16x32xf32>
    %10 = arith.addf %7, %9 : vector<16x32xf32>
    %c0_9 = arith.constant 0 : index
    %c0_10 = arith.constant 0 : index
    %11 = vector.load %arg12[%c0_9, %c0_10] : memref<16x32xf32, #tpu.memory_space<vmem>>, vector<16x32xf32>
    tpu.vector_store %arg12[%c0_9, %c0_10], %10 {strides = array<i32>} : memref<16x32xf32, #tpu.memory_space<vmem>>, vector<16x32xf32>,
    %12 = arith.truncf %10 : vector<16x32xf32> to vector<16x32xbf16>
    %c0_11 = arith.constant 0 : index
    %c0_12 = arith.constant 0 : index
    %13 = vector.load %arg13[%c0_11, %c0_12] : memref<16x32xbf16, #tpu.memory_space<vmem>>, vector<16x32xbf16>
    tpu.vector_store %arg13[%c0_11, %c0_12], %12 {strides = array<i32>} : memref<16x32xbf16, #tpu.memory_space<vmem>>, vector<16x32xbf16>,
    %c0_13 = arith.constant 0 : index
    %c0_14 = arith.constant 0 : index
    %14 = vector.load %arg5[%c0_13, %c0_14] : memref<16x32xbf16, #tpu.memory_space<vmem>>, vector<16x32xbf16>
    %cst_15 = arith.constant dense<0.000000e+00> : vector<16x32xf32>
    %15 = tpu.matmul %5, %14, %cst_15 {dimension_numbers = #tpu.dot_dimension_numbers<[1], [0], [0], [1], [0, 0, 1, 1], [], []>} : vector<16x16xbf16>, vector<16x32xbf16>, vector<16x32xf32> -> vector<16x32xf32>
    %c0_16 = arith.constant 0 : index
    %c0_17 = arith.constant 0 : index
    %16 = vector.load %arg6[%c0_16, %c0_17] : memref<1x32xf32, #tpu.memory_space<vmem>>, vector<1x32xf32>
    %17 = vector.broadcast %16 : vector<1x32xf32> to vector<16x32xf32>
    %18 = arith.addf %15, %17 : vector<16x32xf32>
    %c0_18 = arith.constant 0 : index
    %c0_19 = arith.constant 0 : index
    %19 = vector.load %arg7[%c0_18, %c0_19] : memref<16x32xbf16, #tpu.memory_space<vmem>>, vector<16x32xbf16>
    %cst_20 = arith.constant dense<0.000000e+00> : vector<16x32xf32>
    %20 = tpu.matmul %5, %19, %cst_20 {dimension_numbers = #tpu.dot_dimension_numbers<[1], [0], [0], [1], [0, 0, 1, 1], [], []>} : vector<16x16xbf16>, vector<16x32xbf16>, vector<16x32xf32> -> vector<16x32xf32>
    %c0_21 = arith.constant 0 : index
    %c0_22 = arith.constant 0 : index
    %21 = vector.load %arg8[%c0_21, %c0_22] : memref<1x32xf32, #tpu.memory_space<vmem>>, vector<1x32xf32>
    %22 = vector.broadcast %21 : vector<1x32xf32> to vector<16x32xf32>
    %23 = arith.addf %20, %22 : vector<16x32xf32>
    %cst_23 = arith.constant 0.176776692 : f32
    %24 = vector.broadcast %cst_23 : f32 to vector<16x32xf32>
    %25 = arith.mulf %18, %24 : vector<16x32xf32>
    %26 = arith.truncf %25 : vector<16x32xf32> to vector<16x32xbf16>
    %c0_24 = arith.constant 0 : index
    %c0_25 = arith.constant 0 : index
    %27 = vector.load %arg14[%c0_24, %c0_25] : memref<16x32xbf16, #tpu.memory_space<vmem>>, vector<16x32xbf16>
    tpu.vector_store %arg14[%c0_24, %c0_25], %26 {strides = array<i32>} : memref<16x32xbf16, #tpu.memory_space<vmem>>, vector<16x32xbf16>,
    %28 = arith.truncf %23 : vector<16x32xf32> to vector<16x32xbf16>
    %c0_26 = arith.constant 0 : index
    %c0_27 = arith.constant 0 : index
    %29 = vector.load %arg15[%c0_26, %c0_27] : memref<16x32xbf16, #tpu.memory_space<vmem>>, vector<16x32xbf16>
    tpu.vector_store %arg15[%c0_26, %c0_27], %28 {strides = array<i32>} : memref<16x32xbf16, #tpu.memory_space<vmem>>, vector<16x32xbf16>,
    %c0_28 = arith.constant 0 : index
    %c0_29 = arith.constant 0 : index
    %30 = vector.load %arg13[%c0_28, %c0_29] : memref<16x32xbf16, #tpu.memory_space<vmem>>, vector<16x8xbf16>
    %31 = vector.shape_cast %30 : vector<16x8xbf16> to vector<2x8x8xbf16>
    %c0_30 = arith.constant 0 : index
    %c0_31 = arith.constant 0 : index
    %32 = vector.load %arg14[%c0_30, %c0_31] : memref<16x32xbf16, #tpu.memory_space<vmem>>, vector<16x8xbf16>
    %33 = vector.shape_cast %32 : vector<16x8xbf16> to vector<2x8x8xbf16>
    %c0_32 = arith.constant 0 : index
    %c0_33 = arith.constant 0 : index
    %34 = vector.load %arg15[%c0_32, %c0_33] : memref<16x32xbf16, #tpu.memory_space<vmem>>, vector<16x8xbf16>
    %35 = vector.shape_cast %34 : vector<16x8xbf16> to vector<2x8x8xbf16>
    "tpu.trace_start"() <{level = 10 : i32, message = "bqd,bkd->bqk"}> : () -> ()
    %cst_34 = arith.constant dense<0.000000e+00> : vector<2x8x8xf32>
    %36 = tpu.matmul %31, %33, %cst_34 {dimension_numbers = #tpu.dot_dimension_numbers<[2], [2], [1], [1], [0, 0, 0, 1, 1, 1], [0], [0]>} : vector<2x8x8xbf16>, vector<2x8x8xbf16>, vector<2x8x8xf32> -> vector<2x8x8xf32>
    "tpu.trace_stop"() : () -> ()
    %cst_35 = arith.constant dense<0xFF800000> : vector<2x8xf32>
    %37 = vector.multi_reduction <maximumf>, %36, %cst_35 [2] : vector<2x8x8xf32> to vector<2x8xf32>
    %38 = vector.shape_cast %37 : vector<2x8xf32> to vector<2x8x1xf32>
    %39 = vector.broadcast %38 : vector<2x8x1xf32> to vector<2x8x8xf32>
    %40 = arith.subf %36, %39 : vector<2x8x8xf32>
    %41 = math.exp %40 : vector<2x8x8xf32>
    %cst_36 = arith.constant dense<0.000000e+00> : vector<2x8xf32>
    %42 = vector.multi_reduction <add>, %41, %cst_36 [2] : vector<2x8x8xf32> to vector<2x8xf32>
    %43 = vector.shape_cast %42 : vector<2x8xf32> to vector<2x8x1xf32>
    %44 = arith.truncf %41 : vector<2x8x8xf32> to vector<2x8x8xbf16>
    "tpu.trace_start"() <{level = 10 : i32, message = "bqk,bkd->bqd"}> : () -> ()
    %cst_37 = arith.constant dense<0.000000e+00> : vector<2x8x8xf32>
    %45 = tpu.matmul %44, %35, %cst_37 {dimension_numbers = #tpu.dot_dimension_numbers<[2], [1], [1], [2], [0, 0, 0, 1, 1, 2], [0], [0]>} : vector<2x8x8xbf16>, vector<2x8x8xbf16>, vector<2x8x8xf32> -> vector<2x8x8xf32>
    "tpu.trace_stop"() : () -> ()
    %46 = tpu.reciprocal %43 {approx = true} : vector<2x8x1xf32> -> vector<2x8x1xf32>
    %47 = vector.broadcast %46 : vector<2x8x1xf32> to vector<2x8x8xf32>
    %48 = arith.mulf %45, %47 : vector<2x8x8xf32>
    %49 = vector.shape_cast %48 : vector<2x8x8xf32> to vector<16x8xf32>
    %c0_38 = arith.constant 0 : index
    %c0_39 = arith.constant 0 : index
    %50 = vector.load %arg16[%c0_38, %c0_39] : memref<16x32xf32, #tpu.memory_space<vmem>>, vector<16x8xf32>
    tpu.vector_store %arg16[%c0_38, %c0_39], %49 {strides = array<i32>} : memref<16x32xf32, #tpu.memory_space<vmem>>, vector<16x8xf32>,
    %c0_40 = arith.constant 0 : index
    %c8 = arith.constant 8 : index
    %51 = vector.load %arg13[%c0_40, %c8] : memref<16x32xbf16, #tpu.memory_space<vmem>>, vector<16x8xbf16>
    %52 = vector.shape_cast %51 : vector<16x8xbf16> to vector<2x8x8xbf16>
    %c0_41 = arith.constant 0 : index
    %c8_42 = arith.constant 8 : index
    %53 = vector.load %arg14[%c0_41, %c8_42] : memref<16x32xbf16, #tpu.memory_space<vmem>>, vector<16x8xbf16>
    %54 = vector.shape_cast %53 : vector<16x8xbf16> to vector<2x8x8xbf16>
    %c0_43 = arith.constant 0 : index
    %c8_44 = arith.constant 8 : index
    %55 = vector.load %arg15[%c0_43, %c8_44] : memref<16x32xbf16, #tpu.memory_space<vmem>>, vector<16x8xbf16>
    %56 = vector.shape_cast %55 : vector<16x8xbf16> to vector<2x8x8xbf16>
    "tpu.trace_start"() <{level = 10 : i32, message = "bqd,bkd->bqk"}> : () -> ()
    %cst_45 = arith.constant dense<0.000000e+00> : vector<2x8x8xf32>
    %57 = tpu.matmul %52, %54, %cst_45 {dimension_numbers = #tpu.dot_dimension_numbers<[2], [2], [1], [1], [0, 0, 0, 1, 1, 1], [0], [0]>} : vector<2x8x8xbf16>, vector<2x8x8xbf16>, vector<2x8x8xf32> -> vector<2x8x8xf32>
    "tpu.trace_stop"() : () -> ()
    %cst_46 = arith.constant dense<0xFF800000> : vector<2x8xf32>
    %58 = vector.multi_reduction <maximumf>, %57, %cst_46 [2] : vector<2x8x8xf32> to vector<2x8xf32>
    %59 = vector.shape_cast %58 : vector<2x8xf32> to vector<2x8x1xf32>
    %60 = vector.broadcast %59 : vector<2x8x1xf32> to vector<2x8x8xf32>
    %61 = arith.subf %57, %60 : vector<2x8x8xf32>
    %62 = math.exp %61 : vector<2x8x8xf32>
    %cst_47 = arith.constant dense<0.000000e+00> : vector<2x8xf32>
    %63 = vector.multi_reduction <add>, %62, %cst_47 [2] : vector<2x8x8xf32> to vector<2x8xf32>
    %64 = vector.shape_cast %63 : vector<2x8xf32> to vector<2x8x1xf32>
    %65 = arith.truncf %62 : vector<2x8x8xf32> to vector<2x8x8xbf16>
    "tpu.trace_start"() <{level = 10 : i32, message = "bqk,bkd->bqd"}> : () -> ()
    %cst_48 = arith.constant dense<0.000000e+00> : vector<2x8x8xf32>
    %66 = tpu.matmul %65, %56, %cst_48 {dimension_numbers = #tpu.dot_dimension_numbers<[2], [1], [1], [2], [0, 0, 0, 1, 1, 2], [0], [0]>} : vector<2x8x8xbf16>, vector<2x8x8xbf16>, vector<2x8x8xf32> -> vector<2x8x8xf32>
    "tpu.trace_stop"() : () -> ()
    %67 = tpu.reciprocal %64 {approx = true} : vector<2x8x1xf32> -> vector<2x8x1xf32>
    %68 = vector.broadcast %67 : vector<2x8x1xf32> to vector<2x8x8xf32>
    %69 = arith.mulf %66, %68 : vector<2x8x8xf32>
    %70 = vector.shape_cast %69 : vector<2x8x8xf32> to vector<16x8xf32>
    %c0_49 = arith.constant 0 : index
    %c8_50 = arith.constant 8 : index
    %71 = vector.load %arg16[%c0_49, %c8_50] : memref<16x32xf32, #tpu.memory_space<vmem>>, vector<16x8xf32>
    tpu.vector_store %arg16[%c0_49, %c8_50], %70 {strides = array<i32>} : memref<16x32xf32, #tpu.memory_space<vmem>>, vector<16x8xf32>,
    %c0_51 = arith.constant 0 : index
    %c16 = arith.constant 16 : index
    %72 = vector.load %arg13[%c0_51, %c16] : memref<16x32xbf16, #tpu.memory_space<vmem>>, vector<16x8xbf16>
    %73 = vector.shape_cast %72 : vector<16x8xbf16> to vector<2x8x8xbf16>
    %c0_52 = arith.constant 0 : index
    %c16_53 = arith.constant 16 : index
    %74 = vector.load %arg14[%c0_52, %c16_53] : memref<16x32xbf16, #tpu.memory_space<vmem>>, vector<16x8xbf16>
    %75 = vector.shape_cast %74 : vector<16x8xbf16> to vector<2x8x8xbf16>
    %c0_54 = arith.constant 0 : index
    %c16_55 = arith.constant 16 : index
    %76 = vector.load %arg15[%c0_54, %c16_55] : memref<16x32xbf16, #tpu.memory_space<vmem>>, vector<16x8xbf16>
    %77 = vector.shape_cast %76 : vector<16x8xbf16> to vector<2x8x8xbf16>
    "tpu.trace_start"() <{level = 10 : i32, message = "bqd,bkd->bqk"}> : () -> ()
    %cst_56 = arith.constant dense<0.000000e+00> : vector<2x8x8xf32>
    %78 = tpu.matmul %73, %75, %cst_56 {dimension_numbers = #tpu.dot_dimension_numbers<[2], [2], [1], [1], [0, 0, 0, 1, 1, 1], [0], [0]>} : vector<2x8x8xbf16>, vector<2x8x8xbf16>, vector<2x8x8xf32> -> vector<2x8x8xf32>
    "tpu.trace_stop"() : () -> ()
    %cst_57 = arith.constant dense<0xFF800000> : vector<2x8xf32>
    %79 = vector.multi_reduction <maximumf>, %78, %cst_57 [2] : vector<2x8x8xf32> to vector<2x8xf32>
    %80 = vector.shape_cast %79 : vector<2x8xf32> to vector<2x8x1xf32>
    %81 = vector.broadcast %80 : vector<2x8x1xf32> to vector<2x8x8xf32>
    %82 = arith.subf %78, %81 : vector<2x8x8xf32>
    %83 = math.exp %82 : vector<2x8x8xf32>
    %cst_58 = arith.constant dense<0.000000e+00> : vector<2x8xf32>
    %84 = vector.multi_reduction <add>, %83, %cst_58 [2] : vector<2x8x8xf32> to vector<2x8xf32>
    %85 = vector.shape_cast %84 : vector<2x8xf32> to vector<2x8x1xf32>
    %86 = arith.truncf %83 : vector<2x8x8xf32> to vector<2x8x8xbf16>
    "tpu.trace_start"() <{level = 10 : i32, message = "bqk,bkd->bqd"}> : () -> ()
    %cst_59 = arith.constant dense<0.000000e+00> : vector<2x8x8xf32>
    %87 = tpu.matmul %86, %77, %cst_59 {dimension_numbers = #tpu.dot_dimension_numbers<[2], [1], [1], [2], [0, 0, 0, 1, 1, 2], [0], [0]>} : vector<2x8x8xbf16>, vector<2x8x8xbf16>, vector<2x8x8xf32> -> vector<2x8x8xf32>
    "tpu.trace_stop"() : () -> ()
    %88 = tpu.reciprocal %85 {approx = true} : vector<2x8x1xf32> -> vector<2x8x1xf32>
    %89 = vector.broadcast %88 : vector<2x8x1xf32> to vector<2x8x8xf32>
    %90 = arith.mulf %87, %89 : vector<2x8x8xf32>
    %91 = vector.shape_cast %90 : vector<2x8x8xf32> to vector<16x8xf32>
    %c0_60 = arith.constant 0 : index
    %c16_61 = arith.constant 16 : index
    %92 = vector.load %arg16[%c0_60, %c16_61] : memref<16x32xf32, #tpu.memory_space<vmem>>, vector<16x8xf32>
    tpu.vector_store %arg16[%c0_60, %c16_61], %91 {strides = array<i32>} : memref<16x32xf32, #tpu.memory_space<vmem>>, vector<16x8xf32>,
    %c0_62 = arith.constant 0 : index
    %c24 = arith.constant 24 : index
    %93 = vector.load %arg13[%c0_62, %c24] : memref<16x32xbf16, #tpu.memory_space<vmem>>, vector<16x8xbf16>
    %94 = vector.shape_cast %93 : vector<16x8xbf16> to vector<2x8x8xbf16>
    %c0_63 = arith.constant 0 : index
    %c24_64 = arith.constant 24 : index
    %95 = vector.load %arg14[%c0_63, %c24_64] : memref<16x32xbf16, #tpu.memory_space<vmem>>, vector<16x8xbf16>
    %96 = vector.shape_cast %95 : vector<16x8xbf16> to vector<2x8x8xbf16>
    %c0_65 = arith.constant 0 : index
    %c24_66 = arith.constant 24 : index
    %97 = vector.load %arg15[%c0_65, %c24_66] : memref<16x32xbf16, #tpu.memory_space<vmem>>, vector<16x8xbf16>
    %98 = vector.shape_cast %97 : vector<16x8xbf16> to vector<2x8x8xbf16>
    "tpu.trace_start"() <{level = 10 : i32, message = "bqd,bkd->bqk"}> : () -> ()
    %cst_67 = arith.constant dense<0.000000e+00> : vector<2x8x8xf32>
    %99 = tpu.matmul %94, %96, %cst_67 {dimension_numbers = #tpu.dot_dimension_numbers<[2], [2], [1], [1], [0, 0, 0, 1, 1, 1], [0], [0]>} : vector<2x8x8xbf16>, vector<2x8x8xbf16>, vector<2x8x8xf32> -> vector<2x8x8xf32>
    "tpu.trace_stop"() : () -> ()
    %cst_68 = arith.constant dense<0xFF800000> : vector<2x8xf32>
    %100 = vector.multi_reduction <maximumf>, %99, %cst_68 [2] : vector<2x8x8xf32> to vector<2x8xf32>
    %101 = vector.shape_cast %100 : vector<2x8xf32> to vector<2x8x1xf32>
    %102 = vector.broadcast %101 : vector<2x8x1xf32> to vector<2x8x8xf32>
    %103 = arith.subf %99, %102 : vector<2x8x8xf32>
    %104 = math.exp %103 : vector<2x8x8xf32>
    %cst_69 = arith.constant dense<0.000000e+00> : vector<2x8xf32>
    %105 = vector.multi_reduction <add>, %104, %cst_69 [2] : vector<2x8x8xf32> to vector<2x8xf32>
    %106 = vector.shape_cast %105 : vector<2x8xf32> to vector<2x8x1xf32>
    %107 = arith.truncf %104 : vector<2x8x8xf32> to vector<2x8x8xbf16>
    "tpu.trace_start"() <{level = 10 : i32, message = "bqk,bkd->bqd"}> : () -> ()
    %cst_70 = arith.constant dense<0.000000e+00> : vector<2x8x8xf32>
    %108 = tpu.matmul %107, %98, %cst_70 {dimension_numbers = #tpu.dot_dimension_numbers<[2], [1], [1], [2], [0, 0, 0, 1, 1, 2], [0], [0]>} : vector<2x8x8xbf16>, vector<2x8x8xbf16>, vector<2x8x8xf32> -> vector<2x8x8xf32>
    "tpu.trace_stop"() : () -> ()
    %109 = tpu.reciprocal %106 {approx = true} : vector<2x8x1xf32> -> vector<2x8x1xf32>
    %110 = vector.broadcast %109 : vector<2x8x1xf32> to vector<2x8x8xf32>
    %111 = arith.mulf %108, %110 : vector<2x8x8xf32>
    %112 = vector.shape_cast %111 : vector<2x8x8xf32> to vector<16x8xf32>
    %c0_71 = arith.constant 0 : index
    %c24_72 = arith.constant 24 : index
    %113 = vector.load %arg16[%c0_71, %c24_72] : memref<16x32xf32, #tpu.memory_space<vmem>>, vector<16x8xf32>
    tpu.vector_store %arg16[%c0_71, %c24_72], %112 {strides = array<i32>} : memref<16x32xf32, #tpu.memory_space<vmem>>, vector<16x8xf32>,
    %c0_73 = arith.constant 0 : index
    %c0_74 = arith.constant 0 : index
    %114 = vector.load %arg12[%c0_73, %c0_74] : memref<16x32xf32, #tpu.memory_space<vmem>>, vector<16x32xf32>
    %c0_75 = arith.constant 0 : index
    %c0_76 = arith.constant 0 : index
    %115 = vector.load %arg16[%c0_75, %c0_76] : memref<16x32xf32, #tpu.memory_space<vmem>>, vector<16x32xf32>
    %116 = arith.addf %114, %115 : vector<16x32xf32>
    %117 = arith.truncf %116 : vector<16x32xf32> to vector<16x32xbf16>
    %c0_77 = arith.constant 0 : index
    %c0_78 = arith.constant 0 : index
    %118 = vector.load %arg9[%c0_77, %c0_78] : memref<32x32xbf16, #tpu.memory_space<vmem>>, vector<32x32xbf16>
    %cst_79 = arith.constant dense<0.000000e+00> : vector<16x32xf32>
    %119 = tpu.matmul %117, %118, %cst_79 {dimension_numbers = #tpu.dot_dimension_numbers<[1], [0], [0], [1], [0, 0, 1, 1], [], []>} : vector<16x32xbf16>, vector<32x32xbf16>, vector<16x32xf32> -> vector<16x32xf32>
    %c0_80 = arith.constant 0 : index
    %c0_81 = arith.constant 0 : index
    %120 = vector.load %arg10[%c0_80, %c0_81] : memref<1x32xf32, #tpu.memory_space<vmem>>, vector<1x32xf32>
    %121 = vector.broadcast %120 : vector<1x32xf32> to vector<16x32xf32>
    %122 = arith.addf %119, %121 : vector<16x32xf32>
    %cst_82 = arith.constant 0.000000e+00 : f32
    %123 = vector.broadcast %cst_82 : f32 to vector<16x32xf32>
    %124 = arith.maximumf %122, %123 : vector<16x32xf32>
    %125 = arith.addf %116, %124 : vector<16x32xf32>
    %126 = vector.shape_cast %125 : vector<16x32xf32> to vector<2x8x32xf32>
    %c0_83 = arith.constant 0 : index
    %c0_84 = arith.constant 0 : index
    %c0_85 = arith.constant 0 : index
    %127 = vector.load %arg11[%c0_83, %c0_84, %c0_85] : memref<2x8x32xf32, #tpu.memory_space<vmem>>, vector<2x8x32xf32>
    tpu.vector_store %arg11[%c0_83, %c0_84, %c0_85], %126 {strides = array<i32>} : memref<2x8x32xf32, #tpu.memory_space<vmem>>, vector<2x8x32xf32>,
    return
  }
  func.func @transform_0(%arg0: i32) -> (i32, i32, i32) {
    %c0_i32 = arith.constant 0 : i32
    %c0_i32_0 = arith.constant 0 : i32
    %c0_i32_1 = arith.constant 0 : i32
    return %arg0, %c0_i32, %c0_i32_0 : i32, i32, i32
  }
  func.func @transform_1(%arg0: i32) -> (i32, i32, i32) {
    %c0_i32 = arith.constant 0 : i32
    %c0_i32_0 = arith.constant 0 : i32
    %c0_i32_1 = arith.constant 0 : i32
    return %arg0, %c0_i32, %c0_i32_0 : i32, i32, i32
  }
  func.func @transform_2(%arg0: i32) -> (i32, i32) {
    %c0_i32 = arith.constant 0 : i32
    %c0_i32_0 = arith.constant 0 : i32
    %c0_i32_1 = arith.constant 0 : i32
    return %c0_i32, %c0_i32_0 : i32, i32
  }
  func.func @transform_3(%arg0: i32) -> (i32, i32) {
    %c0_i32 = arith.constant 0 : i32
    %c0_i32_0 = arith.constant 0 : i32
    %c0_i32_1 = arith.constant 0 : i32
    return %c0_i32, %c0_i32_0 : i32, i32
  }
  func.func @transform_4(%arg0: i32) -> (i32, i32) {
    %c0_i32 = arith.constant 0 : i32
    %c0_i32_0 = arith.constant 0 : i32
    %c0_i32_1 = arith.constant 0 : i32
    return %c0_i32, %c0_i32_0 : i32, i32
  }
  func.func @transform_5(%arg0: i32) -> (i32, i32) {
    %c0_i32 = arith.constant 0 : i32
    %c0_i32_0 = arith.constant 0 : i32
    %c0_i32_1 = arith.constant 0 : i32
    return %c0_i32, %c0_i32_0 : i32, i32
  }
  func.func @transform_6(%arg0: i32) -> (i32, i32) {
    %c0_i32 = arith.constant 0 : i32
    %c0_i32_0 = arith.constant 0 : i32
    %c0_i32_1 = arith.constant 0 : i32
    return %c0_i32, %c0_i32_0 : i32, i32
  }
  func.func @transform_7(%arg0: i32) -> (i32, i32) {
    %c0_i32 = arith.constant 0 : i32
    %c0_i32_0 = arith.constant 0 : i32
    %c0_i32_1 = arith.constant 0 : i32
    return %c0_i32, %c0_i32_0 : i32, i32
  }
  func.func @transform_8(%arg0: i32) -> (i32, i32) {
    %c0_i32 = arith.constant 0 : i32
    %c0_i32_0 = arith.constant 0 : i32
    %c0_i32_1 = arith.constant 0 : i32
    return %c0_i32, %c0_i32_0 : i32, i32
  }
  func.func @transform_9(%arg0: i32) -> (i32, i32) {
    %c0_i32 = arith.constant 0 : i32
    %c0_i32_0 = arith.constant 0 : i32
    %c0_i32_1 = arith.constant 0 : i32
    return %c0_i32, %c0_i32_0 : i32, i32
  }
  func.func @transform_10(%arg0: i32) -> (i32, i32, i32) {
    %c0_i32 = arith.constant 0 : i32
    %c0_i32_0 = arith.constant 0 : i32
    %c0_i32_1 = arith.constant 0 : i32
    return %arg0, %c0_i32, %c0_i32_0 : i32, i32, i32
  }
}

</mosaic_0001>

<llo_original>
// kernel: tpu_custom_call.1
$region0: #{tpu_custom_call.1}
  #allocation0 [shape = 'u32[]', space=smem, size = 0x4, offset = 0x4, fixed_abs, tag = 'smem constant byte address 0x4 - core index']
  #allocation1 [shape = 'u32[144,128]{1,0:T(1,128)}', space=vmem, size = 0x12000, scoped, tag = 'internal scratch']
  #allocation2 [shape = 'f32[16,32]{1,0:T(8,128)}', space=vmem, size = 0x2000, scoped, tag = 'scratch operand']
  #allocation3 [shape = 'bf16[16,32]{1,0:T(16,128)(2,1)}', space=vmem, size = 0x1000, scoped, tag = 'scratch operand']
  #allocation4 [shape = 'bf16[16,32]{1,0:T(16,128)(2,1)}', space=vmem, size = 0x1000, scoped, tag = 'scratch operand']
  #allocation5 [shape = 'bf16[16,32]{1,0:T(16,128)(2,1)}', space=vmem, size = 0x1000, scoped, tag = 'scratch operand']
  #allocation6 [shape = 'f32[16,32]{1,0:T(8,128)}', space=vmem, size = 0x2000, scoped, tag = 'scratch operand']
  %s0 = inlined_call_operand.hbm [shape: f32[2,8,16], index: 0, kind: input, shape index: {}]
  %s1 = inlined_call_operand.hbm [shape: f32[2,8,16], index: 1, kind: input, shape index: {}]
  %s2 = inlined_call_operand.hbm [shape: bf16[16,32], index: 2, kind: input, shape index: {}]
  %s3 = inlined_call_operand.vmem [shape: f32[1,32], index: 3, kind: input, shape index: {}]
  %s4 = inlined_call_operand.vmem [shape: bf16[16,32], index: 4, kind: input, shape index: {}]
  %s5 = inlined_call_operand.vmem [shape: f32[1,32], index: 5, kind: input, shape index: {}]
  %s6 = inlined_call_operand.hbm [shape: bf16[16,32], index: 6, kind: input, shape index: {}]
  %s7 = inlined_call_operand.vmem [shape: f32[1,32], index: 7, kind: input, shape index: {}]
  %s8 = inlined_call_operand.vmem [shape: bf16[32,32], index: 8, kind: input, shape index: {}]
  %s9 = inlined_call_operand.vmem [shape: f32[1,32], index: 9, kind: input, shape index: {}]
  %s10 = inlined_call_operand.hbm [shape: f32[2,8,32], index: 10, kind: output, shape index: {}]
  %s11 = sld [smem:[#allocation0]]
  $region66: #{tpu_custom_call.1} parent=0
    _
  %s13 = ssub.s32 1, %s11
  %s14 = scalar_select 0, %s13, %s11
  $region1: #{tpu_custom_call.1} parent=0
    #allocation7 [shape = 'u8[8192]{0}', space=vmem, size = 0x2000, scoped, tag = 'input window, operand 0, single buffered']
    #allocation8 [shape = 's32[1]{0}', space=sflag, size = 0x4, scoped, tag = 'scoped memory for tpu_custom_call.1']
    #allocation9 [shape = 's32[1]{0}', space=sflag, size = 0x4, scoped, tag = 'scoped memory for tpu_custom_call.1']
    #allocation10 [shape = 'u8[8192]{0}', space=vmem, size = 0x2000, scoped, tag = 'input window, operand 1, single buffered']
    #allocation11 [shape = 's32[1]{0}', space=sflag, size = 0x4, scoped, tag = 'scoped memory for tpu_custom_call.1']
    #allocation12 [shape = 'u8[4096]{0}', space=vmem, size = 0x1000, scoped, tag = 'input window, operand 2, single buffered']
    #allocation13 [shape = 'u8[4096]{0}', space=vmem, size = 0x1000, scoped, tag = 'input window, operand 6, single buffered']
    #allocation14 [shape = 's32[1]{0}', space=sflag, size = 0x4, scoped, tag = 'scoped memory for tpu_custom_call.1']
    #allocation15 [shape = 'u8[8192]{0}', space=vmem, size = 0x2000, scoped, tag = 'output window, operand 0, single buffered']
    %15 = vsyncpa [#allocation8], 0
    %16 = vsyncpa [#allocation11], 0
    %17 = vsyncpa [#allocation14], 0
    %18 = vsyncpa [#allocation9], 0
    // Predicated region
    $region2: #{tpu_custom_call.1} parent=1 // pred_check
      _
    $region3: #{tpu_custom_call.1} parent=1 // pred_check_branch
      %20 = sbr.rel (0) target = $region5
    $region4: #{tpu_custom_call.1} parent=1 // pred_region
      %s22 = ssub.s32 256, 256
      %23 = vsyncadd [#allocation8], %s22
      %s24 = sshll.u32 [#allocation7], 4
      %s25 = int_to_ptr.vmem [resolvable:$true] %s24
      %30 = dma.hbm_to_vmem [thread:$0]  %s0, 256, %s25, [#allocation8], 128, 128, 8
    $region5: #{tpu_custom_call.1} parent=1 // pred_fallthru
      _
    // Predicated region
    $region6: #{tpu_custom_call.1} parent=1 // pred_check
      _
    $region7: #{tpu_custom_call.1} parent=1 // pred_check_branch
      %32 = sbr.rel (0) target = $region9
    $region8: #{tpu_custom_call.1} parent=1 // pred_region
      %s34 = ssub.s32 256, 256
      %35 = vsyncadd [#allocation11], %s34
      %s36 = sshll.u32 [#allocation10], 4
      %s37 = int_to_ptr.vmem [resolvable:$true] %s36
      %42 = dma.hbm_to_vmem [thread:$0]  %s1, 256, %s37, [#allocation11], 128, 128, 8
    $region9: #{tpu_custom_call.1} parent=1 // pred_fallthru
      _
    // Predicated region
    $region10: #{tpu_custom_call.1} parent=1 // pred_check
      _
    $region11: #{tpu_custom_call.1} parent=1 // pred_check_branch
      %44 = sbr.rel (0) target = $region13
    $region12: #{tpu_custom_call.1} parent=1 // pred_region
      %s46 = ssub.s32 128, 128
      %47 = vsyncadd [#allocation11], %s46
      %s48 = sshll.u32 [#allocation12], 4
      %s49 = int_to_ptr.vmem [resolvable:$true] %s48
      %54 = dma.hbm_to_vmem [thread:$0]  %s2, 128, %s49, [#allocation11], 64, 64, 4
    $region13: #{tpu_custom_call.1} parent=1 // pred_fallthru
      _
    // Predicated region
    $region14: #{tpu_custom_call.1} parent=1 // pred_check
      _
    $region15: #{tpu_custom_call.1} parent=1 // pred_check_branch
      %56 = sbr.rel (0) target = $region17
    $region16: #{tpu_custom_call.1} parent=1 // pred_region
      _
    $region17: #{tpu_custom_call.1} parent=1 // pred_fallthru
      _
    // Predicated region
    $region18: #{tpu_custom_call.1} parent=1 // pred_check
      _
    $region19: #{tpu_custom_call.1} parent=1 // pred_check_branch
      %58 = sbr.rel (0) target = $region21
    $region20: #{tpu_custom_call.1} parent=1 // pred_region
      _
    $region21: #{tpu_custom_call.1} parent=1 // pred_fallthru
      _
    // Predicated region
    $region22: #{tpu_custom_call.1} parent=1 // pred_check
      _
    $region23: #{tpu_custom_call.1} parent=1 // pred_check_branch
      %60 = sbr.rel (0) target = $region25
    $region24: #{tpu_custom_call.1} parent=1 // pred_region
      _
    $region25: #{tpu_custom_call.1} parent=1 // pred_fallthru
      _
    // Predicated region
    $region26: #{tpu_custom_call.1} parent=1 // pred_check
      _
    $region27: #{tpu_custom_call.1} parent=1 // pred_check_branch
      %62 = sbr.rel (0) target = $region29
    $region28: #{tpu_custom_call.1} parent=1 // pred_region
      %s64 = ssub.s32 128, 128
      %65 = vsyncadd [#allocation14], %s64
      %s66 = sshll.u32 [#allocation13], 4
      %s67 = int_to_ptr.vmem [resolvable:$true] %s66
      %72 = dma.hbm_to_vmem [thread:$0]  %s6, 128, %s67, [#allocation14], 64, 64, 4
    $region29: #{tpu_custom_call.1} parent=1 // pred_fallthru
      _
    // Predicated region
    $region30: #{tpu_custom_call.1} parent=1 // pred_check
      _
    $region31: #{tpu_custom_call.1} parent=1 // pred_check_branch
      %74 = sbr.rel (0) target = $region33
    $region32: #{tpu_custom_call.1} parent=1 // pred_region
      _
    $region33: #{tpu_custom_call.1} parent=1 // pred_fallthru
      _
    // Predicated region
    $region34: #{tpu_custom_call.1} parent=1 // pred_check
      _
    $region35: #{tpu_custom_call.1} parent=1 // pred_check_branch
      %76 = sbr.rel (0) target = $region37
    $region36: #{tpu_custom_call.1} parent=1 // pred_region
      _
    $region37: #{tpu_custom_call.1} parent=1 // pred_fallthru
      _
    // Predicated region
    $region38: #{tpu_custom_call.1} parent=1 // pred_check
      _
    $region39: #{tpu_custom_call.1} parent=1 // pred_check_branch
      %78 = sbr.rel (0) target = $region41
    $region40: #{tpu_custom_call.1} parent=1 // pred_region
      _
    $region41: #{tpu_custom_call.1} parent=1 // pred_fallthru
      _
    // Predicated region
    $region42: #{tpu_custom_call.1} parent=1 // pred_check
      _
    $region43: #{tpu_custom_call.1} parent=1 // pred_check_branch
      %80 = sbr.rel (0) target = $region45
    $region44: #{tpu_custom_call.1} parent=1 // pred_region
      %81 = dma.done [#allocation8], 256
    $region45: #{tpu_custom_call.1} parent=1 // pred_fallthru
      _
    // Predicated region
    $region46: #{tpu_custom_call.1} parent=1 // pred_check
      _
    $region47: #{tpu_custom_call.1} parent=1 // pred_check_branch
      %83 = sbr.rel (0) target = $region49
    $region48: #{tpu_custom_call.1} parent=1 // pred_region
      %84 = dma.done [#allocation11], 256
    $region49: #{tpu_custom_call.1} parent=1 // pred_fallthru
      _
    // Predicated region
    $region50: #{tpu_custom_call.1} parent=1 // pred_check
      _
    $region51: #{tpu_custom_call.1} parent=1 // pred_check_branch
      %86 = sbr.rel (0) target = $region53
    $region52: #{tpu_custom_call.1} parent=1 // pred_region
      %87 = dma.done [#allocation11], 128
    $region53: #{tpu_custom_call.1} parent=1 // pred_fallthru
      _
    // Predicated region
    $region54: #{tpu_custom_call.1} parent=1 // pred_check
      _
    $region55: #{tpu_custom_call.1} parent=1 // pred_check_branch
      %89 = sbr.rel (0) target = $region57
    $region56: #{tpu_custom_call.1} parent=1 // pred_region
      %90 = dma.done [#allocation14], 128
    $region57: #{tpu_custom_call.1} parent=1 // pred_fallthru
      _
    %v92 = vld [vmem:[#allocation7] sm:$0xff]
    %v93 = vld [vmem:[#allocation7 + $0x8] sm:$0xff]
    %v94 = vpack.c.bf16 %v93, %v92
    %v95 = vld [vmem:[#allocation10] sm:$0xff]
    %v96 = vld [vmem:[#allocation10 + $0x8] sm:$0xff]
    %v97 = vpack.c.bf16 %v96, %v95
    %v98 = vld [vmem:[#allocation12] sm:$0xf]
    %v99 = vld [vmem:[#allocation12 + $0x4] sm:$0xf]
    %v100 = vld [vmem:[%s3] sm:$0x1]
    %v102 = vlaneseq
    %v103 = vshrl.u32 %v102, 7
    %v104 = vsub.s32 0, %v103
    %v105 = vrot.slane %v100, %v104
    %v109 = vunpack.c.l.b16 %v98
    %v110 = vunpack.c.l.b16 %v99
    %v111 = vpack.c.b16 %v110, %v109
    %vm113 = vcmask 130048
    %v115 = vsel %vm113, %v94, 0
    %117 = vmatprep.subr.bf16.mxu0 0
    %118 = vmatpush1.bf16.msra.mxu0 %v111
    %119 = vmatprep.subr.bf16.mxu0 0
    %120 = vmatpush1.bf16.msra.mxu0 0
    %121 = vmatprep.subr.bf16.mxu0 0
    %122 = vmatpush1.bf16.msra.mxu0 0
    %123 = vmatprep.subr.bf16.mxu0 0
    %124 = vmatpush1.bf16.msra.mxu0 0
    %125 = vmatprep.subr.bf16.mxu0 0
    %126 = vmatpush1.bf16.msra.mxu0 0
    %127 = vmatprep.subr.bf16.mxu0 0
    %128 = vmatpush1.bf16.msra.mxu0 0
    %129 = vmatprep.subr.bf16.mxu0 0
    %130 = vmatpush1.bf16.msra.mxu0 0
    %131 = vmatprep.subr.bf16.mxu0 0
    %132 = vmatpush1.bf16.msra.mxu0 0
    %133 = vmatprep.subr.bf16.mxu0 0
    %134 = vmatpush1.bf16.msra.mxu0 0
    %135 = vmatprep.subr.bf16.mxu0 0
    %136 = vmatpush1.bf16.msra.mxu0 0
    %137 = vmatprep.subr.bf16.mxu0 0
    %138 = vmatpush1.bf16.msra.mxu0 0
    %139 = vmatprep.subr.bf16.mxu0 0
    %140 = vmatpush1.bf16.msra.mxu0 0
    %141 = vmatprep.subr.bf16.mxu0 0
    %142 = vmatpush1.bf16.msra.mxu0 0
    %143 = vmatprep.subr.bf16.mxu0 0
    %144 = vmatpush1.bf16.msra.mxu0 0
    %145 = vmatprep.subr.bf16.mxu0 0
    %146 = vmatpush1.bf16.msra.mxu0 0
    %147 = vmatprep.subr.bf16.mxu0 0
    %148 = vmatpush1.bf16.msra.mxu0 0
    %149 = vmatprep.mubr.bf16.mxu0 0
    %150 = vmatmul.mubr.bf16.gmra.mrb[0].mxu0 %v115
    %v151 = vpop.f32.mrb[0].mxu0
    %v152 = vadd.f32 %v105, %v151
    %v153 = vpop.f32.mrb[0].mxu0
    %v154 = vpop.f32.mrb[0].mxu0
    %v155 = vadd.f32 %v105, %v154
    %v156 = vpop.f32.mrb[0].mxu0
    %157 = vdwg.mxu0
    %vm158 = vcmask 261120
    %159 = vst.msk [vmem:[#allocation2] sm:$0xff] %vm158, %v152
    %160 = vst.msk [vmem:[#allocation2 + $0x8] sm:$0xff] %vm158, %v155
    %v161 = vpack.c.bf16 %v155, %v152
    %162 = vst.msk [vmem:[#allocation3] sm:$0xff] %vm158, %v161
    %v163 = vld [vmem:[%s4] sm:$0xf]
    %v164 = vld [vmem:[%s4 + $0x4] sm:$0xf]
    %v165 = vld [vmem:[%s5] sm:$0x1]
    %v167 = vlaneseq
    %v168 = vshrl.u32 %v167, 7
    %v169 = vsub.s32 0, %v168
    %v170 = vrot.slane %v165, %v169
    %v174 = vunpack.c.l.b16 %v163
    %v175 = vunpack.c.l.b16 %v164
    %v176 = vpack.c.b16 %v175, %v174
    %v179 = vsel %vm113, %v97, 0
    %181 = vmatprep.subr.bf16.mxu0 0
    %182 = vmatpush1.bf16.msra.mxu0 %v176
    %183 = vmatprep.subr.bf16.mxu0 0
    %184 = vmatpush1.bf16.msra.mxu0 0
    %185 = vmatprep.subr.bf16.mxu0 0
    %186 = vmatpush1.bf16.msra.mxu0 0
    %187 = vmatprep.subr.bf16.mxu0 0
    %188 = vmatpush1.bf16.msra.mxu0 0
    %189 = vmatprep.subr.bf16.mxu0 0
    %190 = vmatpush1.bf16.msra.mxu0 0
    %191 = vmatprep.subr.bf16.mxu0 0
    %192 = vmatpush1.bf16.msra.mxu0 0
    %193 = vmatprep.subr.bf16.mxu0 0
    %194 = vmatpush1.bf16.msra.mxu0 0
    %195 = vmatprep.subr.bf16.mxu0 0
    %196 = vmatpush1.bf16.msra.mxu0 0
    %197 = vmatprep.subr.bf16.mxu0 0
    %198 = vmatpush1.bf16.msra.mxu0 0
    %199 = vmatprep.subr.bf16.mxu0 0
    %200 = vmatpush1.bf16.msra.mxu0 0
    %201 = vmatprep.subr.bf16.mxu0 0
    %202 = vmatpush1.bf16.msra.mxu0 0
    %203 = vmatprep.subr.bf16.mxu0 0
    %204 = vmatpush1.bf16.msra.mxu0 0
    %205 = vmatprep.subr.bf16.mxu0 0
    %206 = vmatpush1.bf16.msra.mxu0 0
    %207 = vmatprep.subr.bf16.mxu0 0
    %208 = vmatpush1.bf16.msra.mxu0 0
    %209 = vmatprep.subr.bf16.mxu0 0
    %210 = vmatpush1.bf16.msra.mxu0 0
    %211 = vmatprep.subr.bf16.mxu0 0
    %212 = vmatpush1.bf16.msra.mxu0 0
    %213 = vmatprep.mubr.bf16.mxu0 0
    %214 = vmatmul.mubr.bf16.gmra.mrb[0].mxu0 %v179
    %v215 = vpop.f32.mrb[0].mxu0
    %v216 = vadd.f32 %v170, %v215
    %v217 = vpop.f32.mrb[0].mxu0
    %v218 = vpop.f32.mrb[0].mxu0
    %v219 = vadd.f32 %v170, %v218
    %v220 = vpop.f32.mrb[0].mxu0
    %221 = vdwg.mxu0
    %v222 = vld [vmem:[#allocation13] sm:$0xf]
    %v223 = vld [vmem:[#allocation13 + $0x4] sm:$0xf]
    %v224 = vld [vmem:[%s7] sm:$0x1]
    %v226 = vlaneseq
    %v227 = vshrl.u32 %v226, 7
    %v228 = vsub.s32 0, %v227
    %v229 = vrot.slane %v224, %v228
    %v233 = vunpack.c.l.b16 %v222
    %v234 = vunpack.c.l.b16 %v223
    %v235 = vpack.c.b16 %v234, %v233
    %237 = vmatprep.subr.bf16.mxu0 0
    %238 = vmatpush1.bf16.msra.mxu0 %v235
    %239 = vmatprep.subr.bf16.mxu0 0
    %240 = vmatpush1.bf16.msra.mxu0 0
    %241 = vmatprep.subr.bf16.mxu0 0
    %242 = vmatpush1.bf16.msra.mxu0 0
    %243 = vmatprep.subr.bf16.mxu0 0
    %244 = vmatpush1.bf16.msra.mxu0 0
    %245 = vmatprep.subr.bf16.mxu0 0
    %246 = vmatpush1.bf16.msra.mxu0 0
    %247 = vmatprep.subr.bf16.mxu0 0
    %248 = vmatpush1.bf16.msra.mxu0 0
    %249 = vmatprep.subr.bf16.mxu0 0
    %250 = vmatpush1.bf16.msra.mxu0 0
    %251 = vmatprep.subr.bf16.mxu0 0
    %252 = vmatpush1.bf16.msra.mxu0 0
    %253 = vmatprep.subr.bf16.mxu0 0
    %254 = vmatpush1.bf16.msra.mxu0 0
    %255 = vmatprep.subr.bf16.mxu0 0
    %256 = vmatpush1.bf16.msra.mxu0 0
    %257 = vmatprep.subr.bf16.mxu0 0
    %258 = vmatpush1.bf16.msra.mxu0 0
    %259 = vmatprep.subr.bf16.mxu0 0
    %260 = vmatpush1.bf16.msra.mxu0 0
    %261 = vmatprep.subr.bf16.mxu0 0
    %262 = vmatpush1.bf16.msra.mxu0 0
    %263 = vmatprep.subr.bf16.mxu0 0
    %264 = vmatpush1.bf16.msra.mxu0 0
    %265 = vmatprep.subr.bf16.mxu0 0
    %266 = vmatpush1.bf16.msra.mxu0 0
    %267 = vmatprep.subr.bf16.mxu0 0
    %268 = vmatpush1.bf16.msra.mxu0 0
    %269 = vmatprep.mubr.bf16.mxu0 0
    %270 = vmatmul.mubr.bf16.gmra.mrb[0].mxu0 %v179
    %v271 = vpop.f32.mrb[0].mxu0
    %v272 = vadd.f32 %v229, %v271
    %v273 = vpop.f32.mrb[0].mxu0
    %v274 = vpop.f32.mrb[0].mxu0
    %v275 = vadd.f32 %v229, %v274
    %v276 = vpop.f32.mrb[0].mxu0
    %277 = vdwg.mxu0
    %v278 = vmul.f32 %v216, 0.17677669
    %v279 = vmul.f32 %v219, 0.17677669
    %v280 = vpack.c.bf16 %v279, %v278
    %281 = vst.msk [vmem:[#allocation4] sm:$0xff] %vm158, %v280
    %v282 = vpack.c.bf16 %v275, %v272
    %283 = vst.msk [vmem:[#allocation5] sm:$0xff] %vm158, %v282
    %v284 = vld [vmem:[#allocation3] sm:$0xff]
    %v286 = vunpack.c.l.b16 %v284
    %v287 = vunpack.c.h.b16 %v284
    %v288 = vpack.c.b16 %v286, %v286
    %v289 = vpack.c.b16 %v287, %v287
    %v290 = vld [vmem:[#allocation4] sm:$0xff]
    %v292 = vunpack.c.l.b16 %v290
    %v293 = vunpack.c.h.b16 %v290
    %v294 = vpack.c.b16 %v292, %v292
    %v295 = vpack.c.b16 %v293, %v293
    %v296 = vld [vmem:[#allocation5] sm:$0xff]
    %v298 = vunpack.c.l.b16 %v296
    %v299 = vunpack.c.h.b16 %v296
    %v300 = vpack.c.b16 %v298, %v298
    %v301 = vpack.c.b16 %v299, %v299
    %vm302 = vcmask 64512
    %v304 = vsel %vm302, %v288, 0
    %v307 = vsel %vm302, %v294, 0
    %309 = vmatprep.subr.bf16.mxu0 0
    %310 = vmatpush1.bf16.xpose.msra.mxu0 %v307
    %311 = vmatprep.subr.bf16.mxu0 0
    %312 = vmatpush1.bf16.xpose.msra.mxu0 0
    %313 = vmatprep.subr.bf16.mxu0 0
    %314 = vmatpush1.bf16.xpose.msra.mxu0 0
    %315 = vmatprep.subr.bf16.mxu0 0
    %316 = vmatpush1.bf16.xpose.msra.mxu0 0
    %317 = vmatprep.subr.bf16.mxu0 0
    %318 = vmatpush1.bf16.xpose.msra.mxu0 0
    %319 = vmatprep.subr.bf16.mxu0 0
    %320 = vmatpush1.bf16.xpose.msra.mxu0 0
    %321 = vmatprep.subr.bf16.mxu0 0
    %322 = vmatpush1.bf16.xpose.msra.mxu0 0
    %323 = vmatprep.subr.bf16.mxu0 0
    %324 = vmatpush1.bf16.xpose.msra.mxu0 0
    %325 = vmatprep.subr.bf16.mxu0 0
    %326 = vmatpush1.bf16.xpose.msra.mxu0 0
    %327 = vmatprep.subr.bf16.mxu0 0
    %328 = vmatpush1.bf16.xpose.msra.mxu0 0
    %329 = vmatprep.subr.bf16.mxu0 0
    %330 = vmatpush1.bf16.xpose.msra.mxu0 0
    %331 = vmatprep.subr.bf16.mxu0 0
    %332 = vmatpush1.bf16.xpose.msra.mxu0 0
    %333 = vmatprep.subr.bf16.mxu0 0
    %334 = vmatpush1.bf16.xpose.msra.mxu0 0
    %335 = vmatprep.subr.bf16.mxu0 0
    %336 = vmatpush1.bf16.xpose.msra.mxu0 0
    %337 = vmatprep.subr.bf16.mxu0 0
    %338 = vmatpush1.bf16.xpose.msra.mxu0 0
    %339 = vmatprep.subr.bf16.mxu0 0
    %340 = vmatpush1.bf16.xpose.msra.mxu0 0
    %341 = vmatprep.mubr.bf16.mxu0 0
    %342 = vmatmul.mubr.bf16.gmra.mrb[0].mxu0 %v304
    %v343 = vpop.f32.mrb[0].mxu0
    %v344 = vadd.f32 0.0, %v343
    %v345 = vpop.f32.mrb[0].mxu0
    %v346 = vpop.f32.mrb[0].mxu0
    %v347 = vpop.f32.mrb[0].mxu0
    %348 = vdwg.mxu0
    %v350 = vsel %vm302, %v289, 0
    %v353 = vsel %vm302, %v295, 0
    %355 = vmatprep.subr.bf16.mxu0 0
    %356 = vmatpush1.bf16.xpose.msra.mxu0 %v353
    %357 = vmatprep.subr.bf16.mxu0 0
    %358 = vmatpush1.bf16.xpose.msra.mxu0 0
    %359 = vmatprep.subr.bf16.mxu0 0
    %360 = vmatpush1.bf16.xpose.msra.mxu0 0
    %361 = vmatprep.subr.bf16.mxu0 0
    %362 = vmatpush1.bf16.xpose.msra.mxu0 0
    %363 = vmatprep.subr.bf16.mxu0 0
    %364 = vmatpush1.bf16.xpose.msra.mxu0 0
    %365 = vmatprep.subr.bf16.mxu0 0
    %366 = vmatpush1.bf16.xpose.msra.mxu0 0
    %367 = vmatprep.subr.bf16.mxu0 0
    %368 = vmatpush1.bf16.xpose.msra.mxu0 0
    %369 = vmatprep.subr.bf16.mxu0 0
    %370 = vmatpush1.bf16.xpose.msra.mxu0 0
    %371 = vmatprep.subr.bf16.mxu0 0
    %372 = vmatpush1.bf16.xpose.msra.mxu0 0
    %373 = vmatprep.subr.bf16.mxu0 0
    %374 = vmatpush1.bf16.xpose.msra.mxu0 0
    %375 = vmatprep.subr.bf16.mxu0 0
    %376 = vmatpush1.bf16.xpose.msra.mxu0 0
    %377 = vmatprep.subr.bf16.mxu0 0
    %378 = vmatpush1.bf16.xpose.msra.mxu0 0
    %379 = vmatprep.subr.bf16.mxu0 0
    %380 = vmatpush1.bf16.xpose.msra.mxu0 0
    %381 = vmatprep.subr.bf16.mxu0 0
    %382 = vmatpush1.bf16.xpose.msra.mxu0 0
    %383 = vmatprep.subr.bf16.mxu0 0
    %384 = vmatpush1.bf16.xpose.msra.mxu0 0
    %385 = vmatprep.subr.bf16.mxu0 0
    %386 = vmatpush1.bf16.xpose.msra.mxu0 0
    %387 = vmatprep.mubr.bf16.mxu0 0
    %388 = vmatmul.mubr.bf16.gmra.mrb[0].mxu0 %v350
    %v389 = vpop.f32.mrb[0].mxu0
    %v390 = vadd.f32 0.0, %v389
    %v391 = vpop.f32.mrb[0].mxu0
    %v392 = vpop.f32.mrb[0].mxu0
    %v393 = vpop.f32.mrb[0].mxu0
    %394 = vdwg.mxu0
    %v395 = vsel %vm302, %v344, -inf
    %396 = vmax.xlane.f32.xlu0 %v395
    %v397 = vpop.xlane.xlu0 %396
    %v398 = vsel %vm302, %v390, -inf
    %399 = vmax.xlane.f32.xlu0 %v398
    %v400 = vpop.xlane.xlu0 %399
    %v401 = vsub.f32 %v344, %v397
    %v402 = vsub.f32 %v390, %v400
    %v403 = vmul.f32 %v401, 1.442695
    %v404 = vpow.pop %v403
    %v405 = vmul.f32 %v402, 1.442695
    %v406 = vpow.pop %v405
    %v407 = vsel %vm302, %v404, 0.0
    %408 = vadd.xlane.f32.xlu0 %v407
    %v409 = vpop.xlane.xlu0 %408
    %v410 = vsel %vm302, %v406, 0.0
    %411 = vadd.xlane.f32.xlu0 %v410
    %v412 = vpop.xlane.xlu0 %411
    %v413 = vpack.c.bf16 %v404, %v404
    %v414 = vpack.c.bf16 %v406, %v406
    %v416 = vsel %vm302, %v413, 0
    %vm418 = vcmask 1043456
    %v420 = vsel %vm418, %v300, 0
    %422 = vmatprep.subr.bf16.mxu0 0
    %423 = vmatpush1.bf16.msra.mxu0 %v420
    %424 = vmatprep.subr.bf16.mxu0 0
    %425 = vmatpush1.bf16.msra.mxu0 0
    %426 = vmatprep.subr.bf16.mxu0 0
    %427 = vmatpush1.bf16.msra.mxu0 0
    %428 = vmatprep.subr.bf16.mxu0 0
    %429 = vmatpush1.bf16.msra.mxu0 0
    %430 = vmatprep.subr.bf16.mxu0 0
    %431 = vmatpush1.bf16.msra.mxu0 0
    %432 = vmatprep.subr.bf16.mxu0 0
    %433 = vmatpush1.bf16.msra.mxu0 0
    %434 = vmatprep.subr.bf16.mxu0 0
    %435 = vmatpush1.bf16.msra.mxu0 0
    %436 = vmatprep.subr.bf16.mxu0 0
    %437 = vmatpush1.bf16.msra.mxu0 0
    %438 = vmatprep.subr.bf16.mxu0 0
    %439 = vmatpush1.bf16.msra.mxu0 0
    %440 = vmatprep.subr.bf16.mxu0 0
    %441 = vmatpush1.bf16.msra.mxu0 0
    %442 = vmatprep.subr.bf16.mxu0 0
    %443 = vmatpush1.bf16.msra.mxu0 0
    %444 = vmatprep.subr.bf16.mxu0 0
    %445 = vmatpush1.bf16.msra.mxu0 0
    %446 = vmatprep.subr.bf16.mxu0 0
    %447 = vmatpush1.bf16.msra.mxu0 0
    %448 = vmatprep.subr.bf16.mxu0 0
    %449 = vmatpush1.bf16.msra.mxu0 0
    %450 = vmatprep.subr.bf16.mxu0 0
    %451 = vmatpush1.bf16.msra.mxu0 0
    %452 = vmatprep.subr.bf16.mxu0 0
    %453 = vmatpush1.bf16.msra.mxu0 0
    %454 = vmatprep.mubr.bf16.mxu0 0
    %455 = vmatmul.mubr.bf16.gmra.mrb[0].mxu0 %v416
    %v456 = vpop.f32.mrb[0].mxu0
    %v457 = vadd.f32 0.0, %v456
    %v458 = vpop.f32.mrb[0].mxu0
    %v459 = vpop.f32.mrb[0].mxu0
    %v460 = vpop.f32.mrb[0].mxu0
    %461 = vdwg.mxu0
    %v463 = vsel %vm302, %v414, 0
    %v466 = vsel %vm418, %v301, 0
    %468 = vmatprep.subr.bf16.mxu0 0
    %469 = vmatpush1.bf16.msra.mxu0 %v466
    %470 = vmatprep.subr.bf16.mxu0 0
    %471 = vmatpush1.bf16.msra.mxu0 0
    %472 = vmatprep.subr.bf16.mxu0 0
    %473 = vmatpush1.bf16.msra.mxu0 0
    %474 = vmatprep.subr.bf16.mxu0 0
    %475 = vmatpush1.bf16.msra.mxu0 0
    %476 = vmatprep.subr.bf16.mxu0 0
    %477 = vmatpush1.bf16.msra.mxu0 0
    %478 = vmatprep.subr.bf16.mxu0 0
    %479 = vmatpush1.bf16.msra.mxu0 0
    %480 = vmatprep.subr.bf16.mxu0 0
    %481 = vmatpush1.bf16.msra.mxu0 0
    %482 = vmatprep.subr.bf16.mxu0 0
    %483 = vmatpush1.bf16.msra.mxu0 0
    %484 = vmatprep.subr.bf16.mxu0 0
    %485 = vmatpush1.bf16.msra.mxu0 0
    %486 = vmatprep.subr.bf16.mxu0 0
    %487 = vmatpush1.bf16.msra.mxu0 0
    %488 = vmatprep.subr.bf16.mxu0 0
    %489 = vmatpush1.bf16.msra.mxu0 0
    %490 = vmatprep.subr.bf16.mxu0 0
    %491 = vmatpush1.bf16.msra.mxu0 0
    %492 = vmatprep.subr.bf16.mxu0 0
    %493 = vmatpush1.bf16.msra.mxu0 0
    %494 = vmatprep.subr.bf16.mxu0 0
    %495 = vmatpush1.bf16.msra.mxu0 0
    %496 = vmatprep.subr.bf16.mxu0 0
    %497 = vmatpush1.bf16.msra.mxu0 0
    %498 = vmatprep.subr.bf16.mxu0 0
    %499 = vmatpush1.bf16.msra.mxu0 0
    %500 = vmatprep.mubr.bf16.mxu0 0
    %501 = vmatmul.mubr.bf16.gmra.mrb[0].mxu0 %v463
    %v502 = vpop.f32.mrb[0].mxu0
    %v503 = vadd.f32 0.0, %v502
    %v504 = vpop.f32.mrb[0].mxu0
    %v505 = vpop.f32.mrb[0].mxu0
    %v506 = vpop.f32.mrb[0].mxu0
    %507 = vdwg.mxu0
    %v508 = vrcp.pop %v409
    %v509 = vrcp.pop %v412
    %v510 = vmul.f32 %v457, %v508
    %v511 = vmul.f32 %v503, %v509
    %512 = vst.msk [vmem:[#allocation6] sm:$0xff] %vm302, %v510
    %513 = vst.msk [vmem:[#allocation6 + $0x8] sm:$0xff] %vm302, %v511
    %v514 = vld [vmem:[#allocation3] sm:$0xff]
    %v516 = vunpack.c.l.b16 %v514
    %v517 = vunpack.c.h.b16 %v514
    %v518 = vld [vmem:[#allocation4] sm:$0xff]
    %v520 = vunpack.c.l.b16 %v518
    %v521 = vunpack.c.h.b16 %v518
    %v522 = vld [vmem:[#allocation5] sm:$0xff]
    %v524 = vunpack.c.l.b16 %v522
    %v525 = vunpack.c.h.b16 %v522
    %v526 = vpack.c.b16 %v516, %v516
    %527 = vrot.lane.b32.xlu0 %v526, 120
    %v528 = vpop.permute.xlu0 %527
    %v529 = vpack.c.b16 %v520, %v520
    %530 = vrot.lane.b32.xlu0 %v529, 120
    %v531 = vpop.permute.xlu0 %530
    %v533 = vsel %vm302, %v528, 0
    %v536 = vsel %vm302, %v531, 0
    %538 = vmatprep.subr.bf16.mxu0 0
    %539 = vmatpush1.bf16.xpose.msra.mxu0 %v536
    %540 = vmatprep.subr.bf16.mxu0 0
    %541 = vmatpush1.bf16.xpose.msra.mxu0 0
    %542 = vmatprep.subr.bf16.mxu0 0
    %543 = vmatpush1.bf16.xpose.msra.mxu0 0
    %544 = vmatprep.subr.bf16.mxu0 0
    %545 = vmatpush1.bf16.xpose.msra.mxu0 0
    %546 = vmatprep.subr.bf16.mxu0 0
    %547 = vmatpush1.bf16.xpose.msra.mxu0 0
    %548 = vmatprep.subr.bf16.mxu0 0
    %549 = vmatpush1.bf16.xpose.msra.mxu0 0
    %550 = vmatprep.subr.bf16.mxu0 0
    %551 = vmatpush1.bf16.xpose.msra.mxu0 0
    %552 = vmatprep.subr.bf16.mxu0 0
    %553 = vmatpush1.bf16.xpose.msra.mxu0 0
    %554 = vmatprep.subr.bf16.mxu0 0
    %555 = vmatpush1.bf16.xpose.msra.mxu0 0
    %556 = vmatprep.subr.bf16.mxu0 0
    %557 = vmatpush1.bf16.xpose.msra.mxu0 0
    %558 = vmatprep.subr.bf16.mxu0 0
    %559 = vmatpush1.bf16.xpose.msra.mxu0 0
    %560 = vmatprep.subr.bf16.mxu0 0
    %561 = vmatpush1.bf16.xpose.msra.mxu0 0
    %562 = vmatprep.subr.bf16.mxu0 0
    %563 = vmatpush1.bf16.xpose.msra.mxu0 0
    %564 = vmatprep.subr.bf16.mxu0 0
    %565 = vmatpush1.bf16.xpose.msra.mxu0 0
    %566 = vmatprep.subr.bf16.mxu0 0
    %567 = vmatpush1.bf16.xpose.msra.mxu0 0
    %568 = vmatprep.subr.bf16.mxu0 0
    %569 = vmatpush1.bf16.xpose.msra.mxu0 0
    %570 = vmatprep.mubr.bf16.mxu0 0
    %571 = vmatmul.mubr.bf16.gmra.mrb[0].mxu0 %v533
    %v572 = vpop.f32.mrb[0].mxu0
    %v573 = vadd.f32 0.0, %v572
    %v574 = vpop.f32.mrb[0].mxu0
    %v575 = vpop.f32.mrb[0].mxu0
    %v576 = vpop.f32.mrb[0].mxu0
    %577 = vdwg.mxu0
    %v578 = vpack.c.b16 %v517, %v517
    %579 = vrot.lane.b32.xlu0 %v578, 120
    %v580 = vpop.permute.xlu0 %579
    %v581 = vpack.c.b16 %v521, %v521
    %582 = vrot.lane.b32.xlu0 %v581, 120
    %v583 = vpop.permute.xlu0 %582
    %v585 = vsel %vm302, %v580, 0
    %v588 = vsel %vm302, %v583, 0
    %590 = vmatprep.subr.bf16.mxu0 0
    %591 = vmatpush1.bf16.xpose.msra.mxu0 %v588
    %592 = vmatprep.subr.bf16.mxu0 0
    %593 = vmatpush1.bf16.xpose.msra.mxu0 0
    %594 = vmatprep.subr.bf16.mxu0 0
    %595 = vmatpush1.bf16.xpose.msra.mxu0 0
    %596 = vmatprep.subr.bf16.mxu0 0
    %597 = vmatpush1.bf16.xpose.msra.mxu0 0
    %598 = vmatprep.subr.bf16.mxu0 0
    %599 = vmatpush1.bf16.xpose.msra.mxu0 0
    %600 = vmatprep.subr.bf16.mxu0 0
    %601 = vmatpush1.bf16.xpose.msra.mxu0 0
    %602 = vmatprep.subr.bf16.mxu0 0
    %603 = vmatpush1.bf16.xpose.msra.mxu0 0
    %604 = vmatprep.subr.bf16.mxu0 0
    %605 = vmatpush1.bf16.xpose.msra.mxu0 0
    %606 = vmatprep.subr.bf16.mxu0 0
    %607 = vmatpush1.bf16.xpose.msra.mxu0 0
    %608 = vmatprep.subr.bf16.mxu0 0
    %609 = vmatpush1.bf16.xpose.msra.mxu0 0
    %610 = vmatprep.subr.bf16.mxu0 0
    %611 = vmatpush1.bf16.xpose.msra.mxu0 0
    %612 = vmatprep.subr.bf16.mxu0 0
    %613 = vmatpush1.bf16.xpose.msra.mxu0 0
    %614 = vmatprep.subr.bf16.mxu0 0
    %615 = vmatpush1.bf16.xpose.msra.mxu0 0
    %616 = vmatprep.subr.bf16.mxu0 0
    %617 = vmatpush1.bf16.xpose.msra.mxu0 0
    %618 = vmatprep.subr.bf16.mxu0 0
    %619 = vmatpush1.bf16.xpose.msra.mxu0 0
    %620 = vmatprep.subr.bf16.mxu0 0
    %621 = vmatpush1.bf16.xpose.msra.mxu0 0
    %622 = vmatprep.mubr.bf16.mxu0 0
    %623 = vmatmul.mubr.bf16.gmra.mrb[0].mxu0 %v585
    %v624 = vpop.f32.mrb[0].mxu0
    %v625 = vadd.f32 0.0, %v624
    %v626 = vpop.f32.mrb[0].mxu0
    %v627 = vpop.f32.mrb[0].mxu0
    %v628 = vpop.f32.mrb[0].mxu0
    %629 = vdwg.mxu0
    %v630 = vsel %vm302, %v573, -inf
    %631 = vmax.xlane.f32.xlu0 %v630
    %v632 = vpop.xlane.xlu0 %631
    %v633 = vsel %vm302, %v625, -inf
    %634 = vmax.xlane.f32.xlu0 %v633
    %v635 = vpop.xlane.xlu0 %634
    %v636 = vsub.f32 %v573, %v632
    %v637 = vsub.f32 %v625, %v635
    %v638 = vmul.f32 %v636, 1.442695
    %v639 = vpow.pop %v638
    %v640 = vmul.f32 %v637, 1.442695
    %v641 = vpow.pop %v640
    %v642 = vsel %vm302, %v639, 0.0
    %643 = vadd.xlane.f32.xlu0 %v642
    %v644 = vpop.xlane.xlu0 %643
    %v645 = vsel %vm302, %v641, 0.0
    %646 = vadd.xlane.f32.xlu0 %v645
    %v647 = vpop.xlane.xlu0 %646
    %v648 = vpack.c.bf16 %v639, %v639
    %v649 = vpack.c.bf16 %v641, %v641
    %v650 = vpack.c.b16 %v524, %v524
    %651 = vrot.lane.b32.xlu0 %v650, 120
    %v652 = vpop.permute.xlu0 %651
    %v654 = vsel %vm302, %v648, 0
    %v657 = vsel %vm418, %v652, 0
    %659 = vmatprep.subr.bf16.mxu0 0
    %660 = vmatpush1.bf16.msra.mxu0 %v657
    %661 = vmatprep.subr.bf16.mxu0 0
    %662 = vmatpush1.bf16.msra.mxu0 0
    %663 = vmatprep.subr.bf16.mxu0 0
    %664 = vmatpush1.bf16.msra.mxu0 0
    %665 = vmatprep.subr.bf16.mxu0 0
    %666 = vmatpush1.bf16.msra.mxu0 0
    %667 = vmatprep.subr.bf16.mxu0 0
    %668 = vmatpush1.bf16.msra.mxu0 0
    %669 = vmatprep.subr.bf16.mxu0 0
    %670 = vmatpush1.bf16.msra.mxu0 0
    %671 = vmatprep.subr.bf16.mxu0 0
    %672 = vmatpush1.bf16.msra.mxu0 0
    %673 = vmatprep.subr.bf16.mxu0 0
    %674 = vmatpush1.bf16.msra.mxu0 0
    %675 = vmatprep.subr.bf16.mxu0 0
    %676 = vmatpush1.bf16.msra.mxu0 0
    %677 = vmatprep.subr.bf16.mxu0 0
    %678 = vmatpush1.bf16.msra.mxu0 0
    %679 = vmatprep.subr.bf16.mxu0 0
    %680 = vmatpush1.bf16.msra.mxu0 0
    %681 = vmatprep.subr.bf16.mxu0 0
    %682 = vmatpush1.bf16.msra.mxu0 0
    %683 = vmatprep.subr.bf16.mxu0 0
    %684 = vmatpush1.bf16.msra.mxu0 0
    %685 = vmatprep.subr.bf16.mxu0 0
    %686 = vmatpush1.bf16.msra.mxu0 0
    %687 = vmatprep.subr.bf16.mxu0 0
    %688 = vmatpush1.bf16.msra.mxu0 0
    %689 = vmatprep.subr.bf16.mxu0 0
    %690 = vmatpush1.bf16.msra.mxu0 0
    %691 = vmatprep.mubr.bf16.mxu0 0
    %692 = vmatmul.mubr.bf16.gmra.mrb[0].mxu0 %v654
    %v693 = vpop.f32.mrb[0].mxu0
    %v694 = vadd.f32 0.0, %v693
    %v695 = vpop.f32.mrb[0].mxu0
    %v696 = vpop.f32.mrb[0].mxu0
    %v697 = vpop.f32.mrb[0].mxu0
    %698 = vdwg.mxu0
    %v699 = vpack.c.b16 %v525, %v525
    %700 = vrot.lane.b32.xlu0 %v699, 120
    %v701 = vpop.permute.xlu0 %700
    %v703 = vsel %vm302, %v649, 0
    %v706 = vsel %vm418, %v701, 0
    %708 = vmatprep.subr.bf16.mxu0 0
    %709 = vmatpush1.bf16.msra.mxu0 %v706
    %710 = vmatprep.subr.bf16.mxu0 0
    %711 = vmatpush1.bf16.msra.mxu0 0
    %712 = vmatprep.subr.bf16.mxu0 0
    %713 = vmatpush1.bf16.msra.mxu0 0
    %714 = vmatprep.subr.bf16.mxu0 0
    %715 = vmatpush1.bf16.msra.mxu0 0
    %716 = vmatprep.subr.bf16.mxu0 0
    %717 = vmatpush1.bf16.msra.mxu0 0
    %718 = vmatprep.subr.bf16.mxu0 0
    %719 = vmatpush1.bf16.msra.mxu0 0
    %720 = vmatprep.subr.bf16.mxu0 0
    %721 = vmatpush1.bf16.msra.mxu0 0
    %722 = vmatprep.subr.bf16.mxu0 0
    %723 = vmatpush1.bf16.msra.mxu0 0
    %724 = vmatprep.subr.bf16.mxu0 0
    %725 = vmatpush1.bf16.msra.mxu0 0
    %726 = vmatprep.subr.bf16.mxu0 0
    %727 = vmatpush1.bf16.msra.mxu0 0
    %728 = vmatprep.subr.bf16.mxu0 0
    %729 = vmatpush1.bf16.msra.mxu0 0
    %730 = vmatprep.subr.bf16.mxu0 0
    %731 = vmatpush1.bf16.msra.mxu0 0
    %732 = vmatprep.subr.bf16.mxu0 0
    %733 = vmatpush1.bf16.msra.mxu0 0
    %734 = vmatprep.subr.bf16.mxu0 0
    %735 = vmatpush1.bf16.msra.mxu0 0
    %736 = vmatprep.subr.bf16.mxu0 0
    %737 = vmatpush1.bf16.msra.mxu0 0
    %738 = vmatprep.subr.bf16.mxu0 0
    %739 = vmatpush1.bf16.msra.mxu0 0
    %740 = vmatprep.mubr.bf16.mxu0 0
    %741 = vmatmul.mubr.bf16.gmra.mrb[0].mxu0 %v703
    %v742 = vpop.f32.mrb[0].mxu0
    %v743 = vadd.f32 0.0, %v742
    %v744 = vpop.f32.mrb[0].mxu0
    %v745 = vpop.f32.mrb[0].mxu0
    %v746 = vpop.f32.mrb[0].mxu0
    %747 = vdwg.mxu0
    %v748 = vrcp.pop %v644
    %v749 = vrcp.pop %v647
    %v750 = vmul.f32 %v694, %v748
    %v751 = vmul.f32 %v743, %v749
    %754 = vrot.lane.b32.xlu0 %v750, 8
    %v755 = vpop.permute.xlu0 %754
    %756 = vrot.lane.b32.xlu0 %v751, 8
    %v757 = vpop.permute.xlu0 %756
    %vm760 = vcmask 130112
    %761 = vst.msk [vmem:[#allocation6] sm:$0xff] %vm760, %v755
    %762 = vst.msk [vmem:[#allocation6 + $0x8] sm:$0xff] %vm760, %v757
    %v763 = vld [vmem:[#allocation3] sm:$0xff]
    %v765 = vunpack.c.l.b16 %v763
    %v766 = vunpack.c.h.b16 %v763
    %v767 = vld [vmem:[#allocation4] sm:$0xff]
    %v769 = vunpack.c.l.b16 %v767
    %v770 = vunpack.c.h.b16 %v767
    %v771 = vld [vmem:[#allocation5] sm:$0xff]
    %v773 = vunpack.c.l.b16 %v771
    %v774 = vunpack.c.h.b16 %v771
    %v775 = vpack.c.b16 %v765, %v765
    %776 = vrot.lane.b32.xlu0 %v775, 112
    %v777 = vpop.permute.xlu0 %776
    %v778 = vpack.c.b16 %v769, %v769
    %779 = vrot.lane.b32.xlu0 %v778, 112
    %v780 = vpop.permute.xlu0 %779
    %v782 = vsel %vm302, %v777, 0
    %v785 = vsel %vm302, %v780, 0
    %787 = vmatprep.subr.bf16.mxu0 0
    %788 = vmatpush1.bf16.xpose.msra.mxu0 %v785
    %789 = vmatprep.subr.bf16.mxu0 0
    %790 = vmatpush1.bf16.xpose.msra.mxu0 0
    %791 = vmatprep.subr.bf16.mxu0 0
    %792 = vmatpush1.bf16.xpose.msra.mxu0 0
    %793 = vmatprep.subr.bf16.mxu0 0
    %794 = vmatpush1.bf16.xpose.msra.mxu0 0
    %795 = vmatprep.subr.bf16.mxu0 0
    %796 = vmatpush1.bf16.xpose.msra.mxu0 0
    %797 = vmatprep.subr.bf16.mxu0 0
    %798 = vmatpush1.bf16.xpose.msra.mxu0 0
    %799 = vmatprep.subr.bf16.mxu0 0
    %800 = vmatpush1.bf16.xpose.msra.mxu0 0
    %801 = vmatprep.subr.bf16.mxu0 0
    %802 = vmatpush1.bf16.xpose.msra.mxu0 0
    %803 = vmatprep.subr.bf16.mxu0 0
    %804 = vmatpush1.bf16.xpose.msra.mxu0 0
    %805 = vmatprep.subr.bf16.mxu0 0
    %806 = vmatpush1.bf16.xpose.msra.mxu0 0
    %807 = vmatprep.subr.bf16.mxu0 0
    %808 = vmatpush1.bf16.xpose.msra.mxu0 0
    %809 = vmatprep.subr.bf16.mxu0 0
    %810 = vmatpush1.bf16.xpose.msra.mxu0 0
    %811 = vmatprep.subr.bf16.mxu0 0
    %812 = vmatpush1.bf16.xpose.msra.mxu0 0
    %813 = vmatprep.subr.bf16.mxu0 0
    %814 = vmatpush1.bf16.xpose.msra.mxu0 0
    %815 = vmatprep.subr.bf16.mxu0 0
    %816 = vmatpush1.bf16.xpose.msra.mxu0 0
    %817 = vmatprep.subr.bf16.mxu0 0
    %818 = vmatpush1.bf16.xpose.msra.mxu0 0
    %819 = vmatprep.mubr.bf16.mxu0 0
    %820 = vmatmul.mubr.bf16.gmra.mrb[0].mxu0 %v782
    %v821 = vpop.f32.mrb[0].mxu0
    %v822 = vadd.f32 0.0, %v821
    %v823 = vpop.f32.mrb[0].mxu0
    %v824 = vpop.f32.mrb[0].mxu0
    %v825 = vpop.f32.mrb[0].mxu0
    %826 = vdwg.mxu0
    %v827 = vpack.c.b16 %v766, %v766
    %828 = vrot.lane.b32.xlu0 %v827, 112
    %v829 = vpop.permute.xlu0 %828
    %v830 = vpack.c.b16 %v770, %v770
    %831 = vrot.lane.b32.xlu0 %v830, 112
    %v832 = vpop.permute.xlu0 %831
    %v834 = vsel %vm302, %v829, 0
    %v837 = vsel %vm302, %v832, 0
    %839 = vmatprep.subr.bf16.mxu0 0
    %840 = vmatpush1.bf16.xpose.msra.mxu0 %v837
    %841 = vmatprep.subr.bf16.mxu0 0
    %842 = vmatpush1.bf16.xpose.msra.mxu0 0
    %843 = vmatprep.subr.bf16.mxu0 0
    %844 = vmatpush1.bf16.xpose.msra.mxu0 0
    %845 = vmatprep.subr.bf16.mxu0 0
    %846 = vmatpush1.bf16.xpose.msra.mxu0 0
    %847 = vmatprep.subr.bf16.mxu0 0
    %848 = vmatpush1.bf16.xpose.msra.mxu0 0
    %849 = vmatprep.subr.bf16.mxu0 0
    %850 = vmatpush1.bf16.xpose.msra.mxu0 0
    %851 = vmatprep.subr.bf16.mxu0 0
    %852 = vmatpush1.bf16.xpose.msra.mxu0 0
    %853 = vmatprep.subr.bf16.mxu0 0
    %854 = vmatpush1.bf16.xpose.msra.mxu0 0
    %855 = vmatprep.subr.bf16.mxu0 0
    %856 = vmatpush1.bf16.xpose.msra.mxu0 0
    %857 = vmatprep.subr.bf16.mxu0 0
    %858 = vmatpush1.bf16.xpose.msra.mxu0 0
    %859 = vmatprep.subr.bf16.mxu0 0
    %860 = vmatpush1.bf16.xpose.msra.mxu0 0
    %861 = vmatprep.subr.bf16.mxu0 0
    %862 = vmatpush1.bf16.xpose.msra.mxu0 0
    %863 = vmatprep.subr.bf16.mxu0 0
    %864 = vmatpush1.bf16.xpose.msra.mxu0 0
    %865 = vmatprep.subr.bf16.mxu0 0
    %866 = vmatpush1.bf16.xpose.msra.mxu0 0
    %867 = vmatprep.subr.bf16.mxu0 0
    %868 = vmatpush1.bf16.xpose.msra.mxu0 0
    %869 = vmatprep.subr.bf16.mxu0 0
    %870 = vmatpush1.bf16.xpose.msra.mxu0 0
    %871 = vmatprep.mubr.bf16.mxu0 0
    %872 = vmatmul.mubr.bf16.gmra.mrb[0].mxu0 %v834
    %v873 = vpop.f32.mrb[0].mxu0
    %v874 = vadd.f32 0.0, %v873
    %v875 = vpop.f32.mrb[0].mxu0
    %v876 = vpop.f32.mrb[0].mxu0
    %v877 = vpop.f32.mrb[0].mxu0
    %878 = vdwg.mxu0
    %v879 = vsel %vm302, %v822, -inf
    %880 = vmax.xlane.f32.xlu0 %v879
    %v881 = vpop.xlane.xlu0 %880
    %v882 = vsel %vm302, %v874, -inf
    %883 = vmax.xlane.f32.xlu0 %v882
    %v884 = vpop.xlane.xlu0 %883
    %v885 = vsub.f32 %v822, %v881
    %v886 = vsub.f32 %v874, %v884
    %v887 = vmul.f32 %v885, 1.442695
    %v888 = vpow.pop %v887
    %v889 = vmul.f32 %v886, 1.442695
    %v890 = vpow.pop %v889
    %v891 = vsel %vm302, %v888, 0.0
    %892 = vadd.xlane.f32.xlu0 %v891
    %v893 = vpop.xlane.xlu0 %892
    %v894 = vsel %vm302, %v890, 0.0
    %895 = vadd.xlane.f32.xlu0 %v894
    %v896 = vpop.xlane.xlu0 %895
    %v897 = vpack.c.bf16 %v888, %v888
    %v898 = vpack.c.bf16 %v890, %v890
    %v899 = vpack.c.b16 %v773, %v773
    %900 = vrot.lane.b32.xlu0 %v899, 112
    %v901 = vpop.permute.xlu0 %900
    %v903 = vsel %vm302, %v897, 0
    %v906 = vsel %vm418, %v901, 0
    %908 = vmatprep.subr.bf16.mxu0 0
    %909 = vmatpush1.bf16.msra.mxu0 %v906
    %910 = vmatprep.subr.bf16.mxu0 0
    %911 = vmatpush1.bf16.msra.mxu0 0
    %912 = vmatprep.subr.bf16.mxu0 0
    %913 = vmatpush1.bf16.msra.mxu0 0
    %914 = vmatprep.subr.bf16.mxu0 0
    %915 = vmatpush1.bf16.msra.mxu0 0
    %916 = vmatprep.subr.bf16.mxu0 0
    %917 = vmatpush1.bf16.msra.mxu0 0
    %918 = vmatprep.subr.bf16.mxu0 0
    %919 = vmatpush1.bf16.msra.mxu0 0
    %920 = vmatprep.subr.bf16.mxu0 0
    %921 = vmatpush1.bf16.msra.mxu0 0
    %922 = vmatprep.subr.bf16.mxu0 0
    %923 = vmatpush1.bf16.msra.mxu0 0
    %924 = vmatprep.subr.bf16.mxu0 0
    %925 = vmatpush1.bf16.msra.mxu0 0
    %926 = vmatprep.subr.bf16.mxu0 0
    %927 = vmatpush1.bf16.msra.mxu0 0
    %928 = vmatprep.subr.bf16.mxu0 0
    %929 = vmatpush1.bf16.msra.mxu0 0
    %930 = vmatprep.subr.bf16.mxu0 0
    %931 = vmatpush1.bf16.msra.mxu0 0
    %932 = vmatprep.subr.bf16.mxu0 0
    %933 = vmatpush1.bf16.msra.mxu0 0
    %934 = vmatprep.subr.bf16.mxu0 0
    %935 = vmatpush1.bf16.msra.mxu0 0
    %936 = vmatprep.subr.bf16.mxu0 0
    %937 = vmatpush1.bf16.msra.mxu0 0
    %938 = vmatprep.subr.bf16.mxu0 0
    %939 = vmatpush1.bf16.msra.mxu0 0
    %940 = vmatprep.mubr.bf16.mxu0 0
    %941 = vmatmul.mubr.bf16.gmra.mrb[0].mxu0 %v903
    %v942 = vpop.f32.mrb[0].mxu0
    %v943 = vadd.f32 0.0, %v942
    %v944 = vpop.f32.mrb[0].mxu0
    %v945 = vpop.f32.mrb[0].mxu0
    %v946 = vpop.f32.mrb[0].mxu0
    %947 = vdwg.mxu0
    %v948 = vpack.c.b16 %v774, %v774
    %949 = vrot.lane.b32.xlu0 %v948, 112
    %v950 = vpop.permute.xlu0 %949
    %v952 = vsel %vm302, %v898, 0
    %v955 = vsel %vm418, %v950, 0
    %957 = vmatprep.subr.bf16.mxu0 0
    %958 = vmatpush1.bf16.msra.mxu0 %v955
    %959 = vmatprep.subr.bf16.mxu0 0
    %960 = vmatpush1.bf16.msra.mxu0 0
    %961 = vmatprep.subr.bf16.mxu0 0
    %962 = vmatpush1.bf16.msra.mxu0 0
    %963 = vmatprep.subr.bf16.mxu0 0
    %964 = vmatpush1.bf16.msra.mxu0 0
    %965 = vmatprep.subr.bf16.mxu0 0
    %966 = vmatpush1.bf16.msra.mxu0 0
    %967 = vmatprep.subr.bf16.mxu0 0
    %968 = vmatpush1.bf16.msra.mxu0 0
    %969 = vmatprep.subr.bf16.mxu0 0
    %970 = vmatpush1.bf16.msra.mxu0 0
    %971 = vmatprep.subr.bf16.mxu0 0
    %972 = vmatpush1.bf16.msra.mxu0 0
    %973 = vmatprep.subr.bf16.mxu0 0
    %974 = vmatpush1.bf16.msra.mxu0 0
    %975 = vmatprep.subr.bf16.mxu0 0
    %976 = vmatpush1.bf16.msra.mxu0 0
    %977 = vmatprep.subr.bf16.mxu0 0
    %978 = vmatpush1.bf16.msra.mxu0 0
    %979 = vmatprep.subr.bf16.mxu0 0
    %980 = vmatpush1.bf16.msra.mxu0 0
    %981 = vmatprep.subr.bf16.mxu0 0
    %982 = vmatpush1.bf16.msra.mxu0 0
    %983 = vmatprep.subr.bf16.mxu0 0
    %984 = vmatpush1.bf16.msra.mxu0 0
    %985 = vmatprep.subr.bf16.mxu0 0
    %986 = vmatpush1.bf16.msra.mxu0 0
    %987 = vmatprep.subr.bf16.mxu0 0
    %988 = vmatpush1.bf16.msra.mxu0 0
    %989 = vmatprep.mubr.bf16.mxu0 0
    %990 = vmatmul.mubr.bf16.gmra.mrb[0].mxu0 %v952
    %v991 = vpop.f32.mrb[0].mxu0
    %v992 = vadd.f32 0.0, %v991
    %v993 = vpop.f32.mrb[0].mxu0
    %v994 = vpop.f32.mrb[0].mxu0
    %v995 = vpop.f32.mrb[0].mxu0
    %996 = vdwg.mxu0
    %v997 = vrcp.pop %v893
    %v998 = vrcp.pop %v896
    %v999 = vmul.f32 %v943, %v997
    %v1000 = vmul.f32 %v992, %v998
    %1003 = vrot.lane.b32.xlu0 %v999, 16
    %v1004 = vpop.permute.xlu0 %1003
    %1005 = vrot.lane.b32.xlu0 %v1000, 16
    %v1006 = vpop.permute.xlu0 %1005
    %vm1009 = vcmask 195712
    %1010 = vst.msk [vmem:[#allocation6] sm:$0xff] %vm1009, %v1004
    %1011 = vst.msk [vmem:[#allocation6 + $0x8] sm:$0xff] %vm1009, %v1006
    %v1012 = vld [vmem:[#allocation3] sm:$0xff]
    %v1014 = vunpack.c.l.b16 %v1012
    %v1015 = vunpack.c.h.b16 %v1012
    %v1016 = vld [vmem:[#allocation4] sm:$0xff]
    %v1018 = vunpack.c.l.b16 %v1016
    %v1019 = vunpack.c.h.b16 %v1016
    %v1020 = vld [vmem:[#allocation5] sm:$0xff]
    %v1022 = vunpack.c.l.b16 %v1020
    %v1023 = vunpack.c.h.b16 %v1020
    %v1024 = vpack.c.b16 %v1014, %v1014
    %1025 = vrot.lane.b32.xlu0 %v1024, 104
    %v1026 = vpop.permute.xlu0 %1025
    %v1027 = vpack.c.b16 %v1018, %v1018
    %1028 = vrot.lane.b32.xlu0 %v1027, 104
    %v1029 = vpop.permute.xlu0 %1028
    %v1031 = vsel %vm302, %v1026, 0
    %v1034 = vsel %vm302, %v1029, 0
    %1036 = vmatprep.subr.bf16.mxu0 0
    %1037 = vmatpush1.bf16.xpose.msra.mxu0 %v1034
    %1038 = vmatprep.subr.bf16.mxu0 0
    %1039 = vmatpush1.bf16.xpose.msra.mxu0 0
    %1040 = vmatprep.subr.bf16.mxu0 0
    %1041 = vmatpush1.bf16.xpose.msra.mxu0 0
    %1042 = vmatprep.subr.bf16.mxu0 0
    %1043 = vmatpush1.bf16.xpose.msra.mxu0 0
    %1044 = vmatprep.subr.bf16.mxu0 0
    %1045 = vmatpush1.bf16.xpose.msra.mxu0 0
    %1046 = vmatprep.subr.bf16.mxu0 0
    %1047 = vmatpush1.bf16.xpose.msra.mxu0 0
    %1048 = vmatprep.subr.bf16.mxu0 0
    %1049 = vmatpush1.bf16.xpose.msra.mxu0 0
    %1050 = vmatprep.subr.bf16.mxu0 0
    %1051 = vmatpush1.bf16.xpose.msra.mxu0 0
    %1052 = vmatprep.subr.bf16.mxu0 0
    %1053 = vmatpush1.bf16.xpose.msra.mxu0 0
    %1054 = vmatprep.subr.bf16.mxu0 0
    %1055 = vmatpush1.bf16.xpose.msra.mxu0 0
    %1056 = vmatprep.subr.bf16.mxu0 0
    %1057 = vmatpush1.bf16.xpose.msra.mxu0 0
    %1058 = vmatprep.subr.bf16.mxu0 0
    %1059 = vmatpush1.bf16.xpose.msra.mxu0 0
    %1060 = vmatprep.subr.bf16.mxu0 0
    %1061 = vmatpush1.bf16.xpose.msra.mxu0 0
    %1062 = vmatprep.subr.bf16.mxu0 0
    %1063 = vmatpush1.bf16.xpose.msra.mxu0 0
    %1064 = vmatprep.subr.bf16.mxu0 0
    %1065 = vmatpush1.bf16.xpose.msra.mxu0 0
    %1066 = vmatprep.subr.bf16.mxu0 0
    %1067 = vmatpush1.bf16.xpose.msra.mxu0 0
    %1068 = vmatprep.mubr.bf16.mxu0 0
    %1069 = vmatmul.mubr.bf16.gmra.mrb[0].mxu0 %v1031
    %v1070 = vpop.f32.mrb[0].mxu0
    %v1071 = vadd.f32 0.0, %v1070
    %v1072 = vpop.f32.mrb[0].mxu0
    %v1073 = vpop.f32.mrb[0].mxu0
    %v1074 = vpop.f32.mrb[0].mxu0
    %1075 = vdwg.mxu0
    %v1076 = vpack.c.b16 %v1015, %v1015
    %1077 = vrot.lane.b32.xlu0 %v1076, 104
    %v1078 = vpop.permute.xlu0 %1077
    %v1079 = vpack.c.b16 %v1019, %v1019
    %1080 = vrot.lane.b32.xlu0 %v1079, 104
    %v1081 = vpop.permute.xlu0 %1080
    %v1083 = vsel %vm302, %v1078, 0
    %v1086 = vsel %vm302, %v1081, 0
    %1088 = vmatprep.subr.bf16.mxu0 0
    %1089 = vmatpush1.bf16.xpose.msra.mxu0 %v1086
    %1090 = vmatprep.subr.bf16.mxu0 0
    %1091 = vmatpush1.bf16.xpose.msra.mxu0 0
    %1092 = vmatprep.subr.bf16.mxu0 0
    %1093 = vmatpush1.bf16.xpose.msra.mxu0 0
    %1094 = vmatprep.subr.bf16.mxu0 0
    %1095 = vmatpush1.bf16.xpose.msra.mxu0 0
    %1096 = vmatprep.subr.bf16.mxu0 0
    %1097 = vmatpush1.bf16.xpose.msra.mxu0 0
    %1098 = vmatprep.subr.bf16.mxu0 0
    %1099 = vmatpush1.bf16.xpose.msra.mxu0 0
    %1100 = vmatprep.subr.bf16.mxu0 0
    %1101 = vmatpush1.bf16.xpose.msra.mxu0 0
    %1102 = vmatprep.subr.bf16.mxu0 0
    %1103 = vmatpush1.bf16.xpose.msra.mxu0 0
    %1104 = vmatprep.subr.bf16.mxu0 0
    %1105 = vmatpush1.bf16.xpose.msra.mxu0 0
    %1106 = vmatprep.subr.bf16.mxu0 0
    %1107 = vmatpush1.bf16.xpose.msra.mxu0 0
    %1108 = vmatprep.subr.bf16.mxu0 0
    %1109 = vmatpush1.bf16.xpose.msra.mxu0 0
    %1110 = vmatprep.subr.bf16.mxu0 0
    %1111 = vmatpush1.bf16.xpose.msra.mxu0 0
    %1112 = vmatprep.subr.bf16.mxu0 0
    %1113 = vmatpush1.bf16.xpose.msra.mxu0 0
    %1114 = vmatprep.subr.bf16.mxu0 0
    %1115 = vmatpush1.bf16.xpose.msra.mxu0 0
    %1116 = vmatprep.subr.bf16.mxu0 0
    %1117 = vmatpush1.bf16.xpose.msra.mxu0 0
    %1118 = vmatprep.subr.bf16.mxu0 0
    %1119 = vmatpush1.bf16.xpose.msra.mxu0 0
    %1120 = vmatprep.mubr.bf16.mxu0 0
    %1121 = vmatmul.mubr.bf16.gmra.mrb[0].mxu0 %v1083
    %v1122 = vpop.f32.mrb[0].mxu0
    %v1123 = vadd.f32 0.0, %v1122
    %v1124 = vpop.f32.mrb[0].mxu0
    %v1125 = vpop.f32.mrb[0].mxu0
    %v1126 = vpop.f32.mrb[0].mxu0
    %1127 = vdwg.mxu0
    %v1128 = vsel %vm302, %v1071, -inf
    %1129 = vmax.xlane.f32.xlu0 %v1128
    %v1130 = vpop.xlane.xlu0 %1129
    %v1131 = vsel %vm302, %v1123, -inf
    %1132 = vmax.xlane.f32.xlu0 %v1131
    %v1133 = vpop.xlane.xlu0 %1132
    %v1134 = vsub.f32 %v1071, %v1130
    %v1135 = vsub.f32 %v1123, %v1133
    %v1136 = vmul.f32 %v1134, 1.442695
    %v1137 = vpow.pop %v1136
    %v1138 = vmul.f32 %v1135, 1.442695
    %v1139 = vpow.pop %v1138
    %v1140 = vsel %vm302, %v1137, 0.0
    %1141 = vadd.xlane.f32.xlu0 %v1140
    %v1142 = vpop.xlane.xlu0 %1141
    %v1143 = vsel %vm302, %v1139, 0.0
    %1144 = vadd.xlane.f32.xlu0 %v1143
    %v1145 = vpop.xlane.xlu0 %1144
    %v1146 = vpack.c.bf16 %v1137, %v1137
    %v1147 = vpack.c.bf16 %v1139, %v1139
    %v1148 = vpack.c.b16 %v1022, %v1022
    %1149 = vrot.lane.b32.xlu0 %v1148, 104
    %v1150 = vpop.permute.xlu0 %1149
    %v1152 = vsel %vm302, %v1146, 0
    %v1155 = vsel %vm418, %v1150, 0
    %1157 = vmatprep.subr.bf16.mxu0 0
    %1158 = vmatpush1.bf16.msra.mxu0 %v1155
    %1159 = vmatprep.subr.bf16.mxu0 0
    %1160 = vmatpush1.bf16.msra.mxu0 0
    %1161 = vmatprep.subr.bf16.mxu0 0
    %1162 = vmatpush1.bf16.msra.mxu0 0
    %1163 = vmatprep.subr.bf16.mxu0 0
    %1164 = vmatpush1.bf16.msra.mxu0 0
    %1165 = vmatprep.subr.bf16.mxu0 0
    %1166 = vmatpush1.bf16.msra.mxu0 0
    %1167 = vmatprep.subr.bf16.mxu0 0
    %1168 = vmatpush1.bf16.msra.mxu0 0
    %1169 = vmatprep.subr.bf16.mxu0 0
    %1170 = vmatpush1.bf16.msra.mxu0 0
    %1171 = vmatprep.subr.bf16.mxu0 0
    %1172 = vmatpush1.bf16.msra.mxu0 0
    %1173 = vmatprep.subr.bf16.mxu0 0
    %1174 = vmatpush1.bf16.msra.mxu0 0
    %1175 = vmatprep.subr.bf16.mxu0 0
    %1176 = vmatpush1.bf16.msra.mxu0 0
    %1177 = vmatprep.subr.bf16.mxu0 0
    %1178 = vmatpush1.bf16.msra.mxu0 0
    %1179 = vmatprep.subr.bf16.mxu0 0
    %1180 = vmatpush1.bf16.msra.mxu0 0
    %1181 = vmatprep.subr.bf16.mxu0 0
    %1182 = vmatpush1.bf16.msra.mxu0 0
    %1183 = vmatprep.subr.bf16.mxu0 0
    %1184 = vmatpush1.bf16.msra.mxu0 0
    %1185 = vmatprep.subr.bf16.mxu0 0
    %1186 = vmatpush1.bf16.msra.mxu0 0
    %1187 = vmatprep.subr.bf16.mxu0 0
    %1188 = vmatpush1.bf16.msra.mxu0 0
    %1189 = vmatprep.mubr.bf16.mxu0 0
    %1190 = vmatmul.mubr.bf16.gmra.mrb[0].mxu0 %v1152
    %v1191 = vpop.f32.mrb[0].mxu0
    %v1192 = vadd.f32 0.0, %v1191
    %v1193 = vpop.f32.mrb[0].mxu0
    %v1194 = vpop.f32.mrb[0].mxu0
    %v1195 = vpop.f32.mrb[0].mxu0
    %1196 = vdwg.mxu0
    %v1197 = vpack.c.b16 %v1023, %v1023
    %1198 = vrot.lane.b32.xlu0 %v1197, 104
    %v1199 = vpop.permute.xlu0 %1198
    %v1201 = vsel %vm302, %v1147, 0
    %v1204 = vsel %vm418, %v1199, 0
    %1206 = vmatprep.subr.bf16.mxu0 0
    %1207 = vmatpush1.bf16.msra.mxu0 %v1204
    %1208 = vmatprep.subr.bf16.mxu0 0
    %1209 = vmatpush1.bf16.msra.mxu0 0
    %1210 = vmatprep.subr.bf16.mxu0 0
    %1211 = vmatpush1.bf16.msra.mxu0 0
    %1212 = vmatprep.subr.bf16.mxu0 0
    %1213 = vmatpush1.bf16.msra.mxu0 0
    %1214 = vmatprep.subr.bf16.mxu0 0
    %1215 = vmatpush1.bf16.msra.mxu0 0
    %1216 = vmatprep.subr.bf16.mxu0 0
    %1217 = vmatpush1.bf16.msra.mxu0 0
    %1218 = vmatprep.subr.bf16.mxu0 0
    %1219 = vmatpush1.bf16.msra.mxu0 0
    %1220 = vmatprep.subr.bf16.mxu0 0
    %1221 = vmatpush1.bf16.msra.mxu0 0
    %1222 = vmatprep.subr.bf16.mxu0 0
    %1223 = vmatpush1.bf16.msra.mxu0 0
    %1224 = vmatprep.subr.bf16.mxu0 0
    %1225 = vmatpush1.bf16.msra.mxu0 0
    %1226 = vmatprep.subr.bf16.mxu0 0
    %1227 = vmatpush1.bf16.msra.mxu0 0
    %1228 = vmatprep.subr.bf16.mxu0 0
    %1229 = vmatpush1.bf16.msra.mxu0 0
    %1230 = vmatprep.subr.bf16.mxu0 0
    %1231 = vmatpush1.bf16.msra.mxu0 0
    %1232 = vmatprep.subr.bf16.mxu0 0
    %1233 = vmatpush1.bf16.msra.mxu0 0
    %1234 = vmatprep.subr.bf16.mxu0 0
    %1235 = vmatpush1.bf16.msra.mxu0 0
    %1236 = vmatprep.subr.bf16.mxu0 0
    %1237 = vmatpush1.bf16.msra.mxu0 0
    %1238 = vmatprep.mubr.bf16.mxu0 0
    %1239 = vmatmul.mubr.bf16.gmra.mrb[0].mxu0 %v1201
    %v1240 = vpop.f32.mrb[0].mxu0
    %v1241 = vadd.f32 0.0, %v1240
    %v1242 = vpop.f32.mrb[0].mxu0
    %v1243 = vpop.f32.mrb[0].mxu0
    %v1244 = vpop.f32.mrb[0].mxu0
    %1245 = vdwg.mxu0
    %v1246 = vrcp.pop %v1142
    %v1247 = vrcp.pop %v1145
    %v1248 = vmul.f32 %v1192, %v1246
    %v1249 = vmul.f32 %v1241, %v1247
    %1252 = vrot.lane.b32.xlu0 %v1248, 24
    %v1253 = vpop.permute.xlu0 %1252
    %1254 = vrot.lane.b32.xlu0 %v1249, 24
    %v1255 = vpop.permute.xlu0 %1254
    %vm1258 = vcmask 261312
    %1259 = vst.msk [vmem:[#allocation6] sm:$0xff] %vm1258, %v1253
    %1260 = vst.msk [vmem:[#allocation6 + $0x8] sm:$0xff] %vm1258, %v1255
    %v1261 = vld [vmem:[#allocation2] sm:$0xff]
    %v1262 = vld [vmem:[#allocation2 + $0x8] sm:$0xff]
    %v1263 = vld [vmem:[#allocation6] sm:$0xff]
    %v1264 = vld [vmem:[#allocation6 + $0x8] sm:$0xff]
    %v1265 = vadd.f32 %v1261, %v1263
    %v1266 = vadd.f32 %v1262, %v1264
    %v1267 = vpack.c.bf16 %v1266, %v1265
    %v1268 = vld [vmem:[%s8] sm:$0xf]
    %v1269 = vld [vmem:[%s8 + $0x4] sm:$0xf]
    %v1270 = vld [vmem:[%s8 + $0x8] sm:$0xf]
    %v1271 = vld [vmem:[%s8 + $0xc] sm:$0xf]
    %v1272 = vld [vmem:[%s9] sm:$0x1]
    %v1274 = vlaneseq
    %v1275 = vshrl.u32 %v1274, 7
    %v1276 = vsub.s32 0, %v1275
    %v1277 = vrot.slane %v1272, %v1276
    %v1283 = vunpack.c.l.b16 %v1268
    %v1284 = vunpack.c.l.b16 %v1269
    %v1285 = vunpack.c.l.b16 %v1270
    %v1286 = vunpack.c.l.b16 %v1271
    %v1287 = vpack.c.b16 %v1284, %v1283
    %v1288 = vpack.c.b16 %v1286, %v1285
    %v1292 = vsel %vm158, %v1267, 0
    %1294 = vmatprep.subr.bf16.mxu0 0
    %1295 = vmatpush1.bf16.msra.mxu0 %v1287
    %1296 = vmatprep.subr.bf16.mxu0 0
    %1297 = vmatpush1.bf16.msra.mxu0 %v1288
    %1298 = vmatprep.subr.bf16.mxu0 0
    %1299 = vmatpush1.bf16.msra.mxu0 0
    %1300 = vmatprep.subr.bf16.mxu0 0
    %1301 = vmatpush1.bf16.msra.mxu0 0
    %1302 = vmatprep.subr.bf16.mxu0 0
    %1303 = vmatpush1.bf16.msra.mxu0 0
    %1304 = vmatprep.subr.bf16.mxu0 0
    %1305 = vmatpush1.bf16.msra.mxu0 0
    %1306 = vmatprep.subr.bf16.mxu0 0
    %1307 = vmatpush1.bf16.msra.mxu0 0
    %1308 = vmatprep.subr.bf16.mxu0 0
    %1309 = vmatpush1.bf16.msra.mxu0 0
    %1310 = vmatprep.subr.bf16.mxu0 0
    %1311 = vmatpush1.bf16.msra.mxu0 0
    %1312 = vmatprep.subr.bf16.mxu0 0
    %1313 = vmatpush1.bf16.msra.mxu0 0
    %1314 = vmatprep.subr.bf16.mxu0 0
    %1315 = vmatpush1.bf16.msra.mxu0 0
    %1316 = vmatprep.subr.bf16.mxu0 0
    %1317 = vmatpush1.bf16.msra.mxu0 0
    %1318 = vmatprep.subr.bf16.mxu0 0
    %1319 = vmatpush1.bf16.msra.mxu0 0
    %1320 = vmatprep.subr.bf16.mxu0 0
    %1321 = vmatpush1.bf16.msra.mxu0 0
    %1322 = vmatprep.subr.bf16.mxu0 0
    %1323 = vmatpush1.bf16.msra.mxu0 0
    %1324 = vmatprep.subr.bf16.mxu0 0
    %1325 = vmatpush1.bf16.msra.mxu0 0
    %1326 = vmatprep.mubr.bf16.mxu0 0
    %1327 = vmatmul.mubr.bf16.gmra.mrb[0].mxu0 %v1292
    %v1328 = vpop.f32.mrb[0].mxu0
    %v1329 = vadd.f32 %v1277, %v1328
    %v1330 = vpop.f32.mrb[0].mxu0
    %v1331 = vpop.f32.mrb[0].mxu0
    %v1332 = vadd.f32 %v1277, %v1331
    %v1333 = vpop.f32.mrb[0].mxu0
    %1334 = vdwg.mxu0
    %v1335 = vmax.f32 %v1329, 0.0
    %v1336 = vmax.f32 %v1332, 0.0
    %v1337 = vadd.f32 %v1265, %v1335
    %v1338 = vadd.f32 %v1266, %v1336
    %1339 = vst.msk [vmem:[#allocation15] sm:$0xff] %vm158, %v1337
    %1340 = vst.msk [vmem:[#allocation15 + $0x8] sm:$0xff] %vm158, %v1338
    // Predicated region
    $region58: #{tpu_custom_call.1} parent=1 // pred_check
      _
    $region59: #{tpu_custom_call.1} parent=1 // pred_check_branch
      %1342 = sbr.rel (0) target = $region61
    $region60: #{tpu_custom_call.1} parent=1 // pred_region
      %s1344 = ssub.s32 256, 256
      %1345 = vsyncadd [#allocation9], %s1344
      %s1346 = sshll.u32 [#allocation15], 4
      %s1347 = int_to_ptr.vmem [resolvable:$true] %s1346
      %1352 = dma.vmem_to_hbm [thread:$0]  %s1347, 256, %s10, [#allocation9], 128, 128, 8
    $region61: #{tpu_custom_call.1} parent=1 // pred_fallthru
      _
    // Predicated region
    $region62: #{tpu_custom_call.1} parent=1 // pred_check
      _
    $region63: #{tpu_custom_call.1} parent=1 // pred_check_branch
      %1354 = sbr.rel (0) target = $region65
    $region64: #{tpu_custom_call.1} parent=1 // pred_region
      %1355 = dma.done [#allocation9], 256
    $region65: #{tpu_custom_call.1} parent=1 // pred_fallthru
      _
    %1356 = vsyncpa [#allocation8], 1
    %1357 = vsyncpa [#allocation11], 1
    %1358 = vsyncpa [#allocation14], 1
    %1359 = vsyncpa [#allocation9], 1

// kernel: tpu_custom_call.1
$region0: #{tpu_custom_call.1}
  #allocation0 [shape = 'u32[]', space=smem, size = 0x4, offset = 0x4, fixed_abs, tag = 'smem constant byte address 0x4 - core index']
  #allocation1 [shape = 'u32[144,128]{1,0:T(1,128)}', space=vmem, size = 0x12000, scoped, tag = 'internal scratch']
  #allocation2 [shape = 'f32[16,32]{1,0:T(8,128)}', space=vmem, size = 0x2000, scoped, tag = 'scratch operand']
  #allocation3 [shape = 'bf16[16,32]{1,0:T(16,128)(2,1)}', space=vmem, size = 0x1000, scoped, tag = 'scratch operand']
  #allocation4 [shape = 'bf16[16,32]{1,0:T(16,128)(2,1)}', space=vmem, size = 0x1000, scoped, tag = 'scratch operand']
  #allocation5 [shape = 'bf16[16,32]{1,0:T(16,128)(2,1)}', space=vmem, size = 0x1000, scoped, tag = 'scratch operand']
  #allocation6 [shape = 'f32[16,32]{1,0:T(8,128)}', space=vmem, size = 0x2000, scoped, tag = 'scratch operand']
  %s0 = inlined_call_operand.hbm [shape: f32[2,8,16], index: 0, kind: input, shape index: {}]
  %s1 = inlined_call_operand.hbm [shape: f32[2,8,16], index: 1, kind: input, shape index: {}]
  %s2 = inlined_call_operand.hbm [shape: bf16[16,32], index: 2, kind: input, shape index: {}]
  %s3 = inlined_call_operand.vmem [shape: f32[1,32], index: 3, kind: input, shape index: {}]
  %s4 = inlined_call_operand.vmem [shape: bf16[16,32], index: 4, kind: input, shape index: {}]
  %s5 = inlined_call_operand.vmem [shape: f32[1,32], index: 5, kind: input, shape index: {}]
  %s6 = inlined_call_operand.hbm [shape: bf16[16,32], index: 6, kind: input, shape index: {}]
  %s7 = inlined_call_operand.vmem [shape: f32[1,32], index: 7, kind: input, shape index: {}]
  %s8 = inlined_call_operand.vmem [shape: bf16[32,32], index: 8, kind: input, shape index: {}]
  %s9 = inlined_call_operand.vmem [shape: f32[1,32], index: 9, kind: input, shape index: {}]
  %s10 = inlined_call_operand.hbm [shape: f32[2,8,32], index: 10, kind: output, shape index: {}]
  %s11 = sld [smem:[#allocation0]]
  $region66: #{tpu_custom_call.1} parent=0
    _
  %s13 = ssub.s32 1, %s11
  %s14 = scalar_select 0, %s13, %s11
  $region1: #{tpu_custom_call.1} parent=0
    #allocation7 [shape = 'u8[8192]{0}', space=vmem, size = 0x2000, scoped, tag = 'input window, operand 0, single buffered']
    #allocation8 [shape = 's32[1]{0}', space=sflag, size = 0x4, scoped, tag = 'scoped memory for tpu_custom_call.1']
    #allocation9 [shape = 's32[1]{0}', space=sflag, size = 0x4, scoped, tag = 'scoped memory for tpu_custom_call.1']
    #allocation10 [shape = 'u8[8192]{0}', space=vmem, size = 0x2000, scoped, tag = 'input window, operand 1, single buffered']
    #allocation11 [shape = 's32[1]{0}', space=sflag, size = 0x4, scoped, tag = 'scoped memory for tpu_custom_call.1']
    #allocation12 [shape = 'u8[4096]{0}', space=vmem, size = 0x1000, scoped, tag = 'input window, operand 2, single buffered']
    #allocation13 [shape = 'u8[4096]{0}', space=vmem, size = 0x1000, scoped, tag = 'input window, operand 6, single buffered']
    #allocation14 [shape = 's32[1]{0}', space=sflag, size = 0x4, scoped, tag = 'scoped memory for tpu_custom_call.1']
    #allocation15 [shape = 'u8[8192]{0}', space=vmem, size = 0x2000, scoped, tag = 'output window, operand 0, single buffered']
    %15 = vsyncpa [#allocation8], 0
    %16 = vsyncpa [#allocation11], 0
    %17 = vsyncpa [#allocation14], 0
    %18 = vsyncpa [#allocation9], 0
    // Predicated region
    $region2: #{tpu_custom_call.1} parent=1 // pred_check
      _
    $region3: #{tpu_custom_call.1} parent=1 // pred_check_branch
      %20 = sbr.rel (0) target = $region5
    $region4: #{tpu_custom_call.1} parent=1 // pred_region
      %s22 = ssub.s32 256, 256
      %23 = vsyncadd [#allocation8], %s22
      %s24 = sshll.u32 [#allocation7], 4
      %s25 = int_to_ptr.vmem [resolvable:$true] %s24
      %30 = dma.hbm_to_vmem [thread:$0]  %s0, 256, %s25, [#allocation8], 128, 128, 8
    $region5: #{tpu_custom_call.1} parent=1 // pred_fallthru
      _
    // Predicated region
    $region6: #{tpu_custom_call.1} parent=1 // pred_check
      _
    $region7: #{tpu_custom_call.1} parent=1 // pred_check_branch
      %32 = sbr.rel (0) target = $region9
    $region8: #{tpu_custom_call.1} parent=1 // pred_region
      %s34 = ssub.s32 256, 256
      %35 = vsyncadd [#allocation11], %s34
      %s36 = sshll.u32 [#allocation10], 4
      %s37 = int_to_ptr.vmem [resolvable:$true] %s36
      %42 = dma.hbm_to_vmem [thread:$0]  %s1, 256, %s37, [#allocation11], 128, 128, 8
    $region9: #{tpu_custom_call.1} parent=1 // pred_fallthru
      _
    // Predicated region
    $region10: #{tpu_custom_call.1} parent=1 // pred_check
      _
    $region11: #{tpu_custom_call.1} parent=1 // pred_check_branch
      %44 = sbr.rel (0) target = $region13
    $region12: #{tpu_custom_call.1} parent=1 // pred_region
      %s46 = ssub.s32 128, 128
      %47 = vsyncadd [#allocation11], %s46
      %s48 = sshll.u32 [#allocation12], 4
      %s49 = int_to_ptr.vmem [resolvable:$true] %s48
      %54 = dma.hbm_to_vmem [thread:$0]  %s2, 128, %s49, [#allocation11], 64, 64, 4
    $region13: #{tpu_custom_call.1} parent=1 // pred_fallthru
      _
    // Predicated region
    $region14: #{tpu_custom_call.1} parent=1 // pred_check
      _
    $region15: #{tpu_custom_call.1} parent=1 // pred_check_branch
      %56 = sbr.rel (0) target = $region17
    $region16: #{tpu_custom_call.1} parent=1 // pred_region
      _
    $region17: #{tpu_custom_call.1} parent=1 // pred_fallthru
      _
    // Predicated region
    $region18: #{tpu_custom_call.1} parent=1 // pred_check
      _
    $region19: #{tpu_custom_call.1} parent=1 // pred_check_branch
      %58 = sbr.rel (0) target = $region21
    $region20: #{tpu_custom_call.1} parent=1 // pred_region
      _
    $region21: #{tpu_custom_call.1} parent=1 // pred_fallthru
      _
    // Predicated region
    $region22: #{tpu_custom_call.1} parent=1 // pred_check
      _
    $region23: #{tpu_custom_call.1} parent=1 // pred_check_branch
      %60 = sbr.rel (0) target = $region25
    $region24: #{tpu_custom_call.1} parent=1 // pred_region
      _
    $region25: #{tpu_custom_call.1} parent=1 // pred_fallthru
      _
    // Predicated region
    $region26: #{tpu_custom_call.1} parent=1 // pred_check
      _
    $region27: #{tpu_custom_call.1} parent=1 // pred_check_branch
      %62 = sbr.rel (0) target = $region29
    $region28: #{tpu_custom_call.1} parent=1 // pred_region
      %s64 = ssub.s32 128, 128
      %65 = vsyncadd [#allocation14], %s64
      %s66 = sshll.u32 [#allocation13], 4
      %s67 = int_to_ptr.vmem [resolvable:$true] %s66
      %72 = dma.hbm_to_vmem [thread:$0]  %s6, 128, %s67, [#allocation14], 64, 64, 4
    $region29: #{tpu_custom_call.1} parent=1 // pred_fallthru
      _
    // Predicated region
    $region30: #{tpu_custom_call.1} parent=1 // pred_check
      _
    $region31: #{tpu_custom_call.1} parent=1 // pred_check_branch
      %74 = sbr.rel (0) target = $region33
    $region32: #{tpu_custom_call.1} parent=1 // pred_region
      _
    $region33: #{tpu_custom_call.1} parent=1 // pred_fallthru
      _
    // Predicated region
    $region34: #{tpu_custom_call.1} parent=1 // pred_check
      _
    $region35: #{tpu_custom_call.1} parent=1 // pred_check_branch
      %76 = sbr.rel (0) target = $region37
    $region36: #{tpu_custom_call.1} parent=1 // pred_region
      _
    $region37: #{tpu_custom_call.1} parent=1 // pred_fallthru
      _
    // Predicated region
    $region38: #{tpu_custom_call.1} parent=1 // pred_check
      _
    $region39: #{tpu_custom_call.1} parent=1 // pred_check_branch
      %78 = sbr.rel (0) target = $region41
    $region40: #{tpu_custom_call.1} parent=1 // pred_region
      _
    $region41: #{tpu_custom_call.1} parent=1 // pred_fallthru
      _
    // Predicated region
    $region42: #{tpu_custom_call.1} parent=1 // pred_check
      _
    $region43: #{tpu_custom_call.1} parent=1 // pred_check_branch
      %80 = sbr.rel (0) target = $region45
    $region44: #{tpu_custom_call.1} parent=1 // pred_region
      %81 = dma.done [#allocation8], 256
    $region45: #{tpu_custom_call.1} parent=1 // pred_fallthru
      _
    // Predicated region
    $region46: #{tpu_custom_call.1} parent=1 // pred_check
      _
    $region47: #{tpu_custom_call.1} parent=1 // pred_check_branch
      %83 = sbr.rel (0) target = $region49
    $region48: #{tpu_custom_call.1} parent=1 // pred_region
      %84 = dma.done [#allocation11], 256
    $region49: #{tpu_custom_call.1} parent=1 // pred_fallthru
      _
    // Predicated region
    $region50: #{tpu_custom_call.1} parent=1 // pred_check
      _
    $region51: #{tpu_custom_call.1} parent=1 // pred_check_branch
      %86 = sbr.rel (0) target = $region53
    $region52: #{tpu_custom_call.1} parent=1 // pred_region
      %87 = dma.done [#allocation11], 128
    $region53: #{tpu_custom_call.1} parent=1 // pred_fallthru
      _
    // Predicated region
    $region54: #{tpu_custom_call.1} parent=1 // pred_check
      _
    $region55: #{tpu_custom_call.1} parent=1 // pred_check_branch
      %89 = sbr.rel (0) target = $region57
    $region56: #{tpu_custom_call.1} parent=1 // pred_region
      %90 = dma.done [#allocation14], 128
    $region57: #{tpu_custom_call.1} parent=1 // pred_fallthru
      _
    %v92 = vld [vmem:[#allocation7] sm:$0xff]
    %v93 = vld [vmem:[#allocation7 + $0x8] sm:$0xff]
    %v94 = vpack.c.bf16 %v93, %v92
    %v95 = vld [vmem:[#allocation10] sm:$0xff]
    %v96 = vld [vmem:[#allocation10 + $0x8] sm:$0xff]
    %v97 = vpack.c.bf16 %v96, %v95
    %v98 = vld [vmem:[#allocation12] sm:$0xf]
    %v99 = vld [vmem:[#allocation12 + $0x4] sm:$0xf]
    %v100 = vld [vmem:[%s3] sm:$0x1]
    %v102 = vlaneseq
    %v103 = vshrl.u32 %v102, 7
    %v104 = vsub.s32 0, %v103
    %v105 = vrot.slane %v100, %v104
    %v109 = vunpack.c.l.b16 %v98
    %v110 = vunpack.c.l.b16 %v99
    %v111 = vpack.c.b16 %v110, %v109
    %vm113 = vcmask 130048
    %v115 = vsel %vm113, %v94, 0
    %117 = vmatprep.subr.bf16.mxu0 0
    %118 = vmatpush1.bf16.msra.mxu0 %v111
    %119 = vmatprep.subr.bf16.mxu0 0
    %120 = vmatpush1.bf16.msra.mxu0 0
    %121 = vmatprep.subr.bf16.mxu0 0
    %122 = vmatpush1.bf16.msra.mxu0 0
    %123 = vmatprep.subr.bf16.mxu0 0
    %124 = vmatpush1.bf16.msra.mxu0 0
    %125 = vmatprep.subr.bf16.mxu0 0
    %126 = vmatpush1.bf16.msra.mxu0 0
    %127 = vmatprep.subr.bf16.mxu0 0
    %128 = vmatpush1.bf16.msra.mxu0 0
    %129 = vmatprep.subr.bf16.mxu0 0
    %130 = vmatpush1.bf16.msra.mxu0 0
    %131 = vmatprep.subr.bf16.mxu0 0
    %132 = vmatpush1.bf16.msra.mxu0 0
    %133 = vmatprep.subr.bf16.mxu0 0
    %134 = vmatpush1.bf16.msra.mxu0 0
    %135 = vmatprep.subr.bf16.mxu0 0
    %136 = vmatpush1.bf16.msra.mxu0 0
    %137 = vmatprep.subr.bf16.mxu0 0
    %138 = vmatpush1.bf16.msra.mxu0 0
    %139 = vmatprep.subr.bf16.mxu0 0
    %140 = vmatpush1.bf16.msra.mxu0 0
    %141 = vmatprep.subr.bf16.mxu0 0
    %142 = vmatpush1.bf16.msra.mxu0 0
    %143 = vmatprep.subr.bf16.mxu0 0
    %144 = vmatpush1.bf16.msra.mxu0 0
    %145 = vmatprep.subr.bf16.mxu0 0
    %146 = vmatpush1.bf16.msra.mxu0 0
    %147 = vmatprep.subr.bf16.mxu0 0
    %148 = vmatpush1.bf16.msra.mxu0 0
    %149 = vmatprep.mubr.bf16.mxu0 0
    %150 = vmatmul.mubr.bf16.gmra.mrb[0].mxu0 %v115
    %v151 = vpop.f32.mrb[0].mxu0
    %v152 = vadd.f32 %v105, %v151
    %v153 = vpop.f32.mrb[0].mxu0
    %v154 = vpop.f32.mrb[0].mxu0
    %v155 = vadd.f32 %v105, %v154
    %v156 = vpop.f32.mrb[0].mxu0
    %157 = vdwg.mxu0
    %vm158 = vcmask 261120
    %159 = vst.msk [vmem:[#allocation2] sm:$0xff] %vm158, %v152
    %160 = vst.msk [vmem:[#allocation2 + $0x8] sm:$0xff] %vm158, %v155
    %v161 = vpack.c.bf16 %v155, %v152
    %162 = vst.msk [vmem:[#allocation3] sm:$0xff] %vm158, %v161
    %v163 = vld [vmem:[%s4] sm:$0xf]
    %v164 = vld [vmem:[%s4 + $0x4] sm:$0xf]
    %v165 = vld [vmem:[%s5] sm:$0x1]
    %v167 = vlaneseq
    %v168 = vshrl.u32 %v167, 7
    %v169 = vsub.s32 0, %v168
    %v170 = vrot.slane %v165, %v169
    %v174 = vunpack.c.l.b16 %v163
    %v175 = vunpack.c.l.b16 %v164
    %v176 = vpack.c.b16 %v175, %v174
    %v179 = vsel %vm113, %v97, 0
    %181 = vmatprep.subr.bf16.mxu0 0
    %182 = vmatpush1.bf16.msra.mxu0 %v176
    %183 = vmatprep.subr.bf16.mxu0 0
    %184 = vmatpush1.bf16.msra.mxu0 0
    %185 = vmatprep.subr.bf16.mxu0 0
    %186 = vmatpush1.bf16.msra.mxu0 0
    %187 = vmatprep.subr.bf16.mxu0 0
    %188 = vmatpush1.bf16.msra.mxu0 0
    %189 = vmatprep.subr.bf16.mxu0 0
    %190 = vmatpush1.bf16.msra.mxu0 0
    %191 = vmatprep.subr.bf16.mxu0 0
    %192 = vmatpush1.bf16.msra.mxu0 0
    %193 = vmatprep.subr.bf16.mxu0 0
    %194 = vmatpush1.bf16.msra.mxu0 0
    %195 = vmatprep.subr.bf16.mxu0 0
    %196 = vmatpush1.bf16.msra.mxu0 0
    %197 = vmatprep.subr.bf16.mxu0 0
    %198 = vmatpush1.bf16.msra.mxu0 0
    %199 = vmatprep.subr.bf16.mxu0 0
    %200 = vmatpush1.bf16.msra.mxu0 0
    %201 = vmatprep.subr.bf16.mxu0 0
    %202 = vmatpush1.bf16.msra.mxu0 0
    %203 = vmatprep.subr.bf16.mxu0 0
    %204 = vmatpush1.bf16.msra.mxu0 0
    %205 = vmatprep.subr.bf16.mxu0 0
    %206 = vmatpush1.bf16.msra.mxu0 0
    %207 = vmatprep.subr.bf16.mxu0 0
    %208 = vmatpush1.bf16.msra.mxu0 0
    %209 = vmatprep.subr.bf16.mxu0 0
    %210 = vmatpush1.bf16.msra.mxu0 0
    %211 = vmatprep.subr.bf16.mxu0 0
    %212 = vmatpush1.bf16.msra.mxu0 0
    %213 = vmatprep.mubr.bf16.mxu0 0
    %214 = vmatmul.mubr.bf16.gmra.mrb[0].mxu0 %v179
    %v215 = vpop.f32.mrb[0].mxu0
    %v216 = vadd.f32 %v170, %v215
    %v217 = vpop.f32.mrb[0].mxu0
    %v218 = vpop.f32.mrb[0].mxu0
    %v219 = vadd.f32 %v170, %v218
    %v220 = vpop.f32.mrb[0].mxu0
    %221 = vdwg.mxu0
    %v222 = vld [vmem:[#allocation13] sm:$0xf]
    %v223 = vld [vmem:[#allocation13 + $0x4] sm:$0xf]
    %v224 = vld [vmem:[%s7] sm:$0x1]
    %v226 = vlaneseq
    %v227 = vshrl.u32 %v226, 7
    %v228 = vsub.s32 0, %v227
    %v229 = vrot.slane %v224, %v228
    %v233 = vunpack.c.l.b16 %v222
    %v234 = vunpack.c.l.b16 %v223
    %v235 = vpack.c.b16 %v234, %v233
    %237 = vmatprep.subr.bf16.mxu0 0
    %238 = vmatpush1.bf16.msra.mxu0 %v235
    %239 = vmatprep.subr.bf16.mxu0 0
    %240 = vmatpush1.bf16.msra.mxu0 0
    %241 = vmatprep.subr.bf16.mxu0 0
    %242 = vmatpush1.bf16.msra.mxu0 0
    %243 = vmatprep.subr.bf16.mxu0 0
    %244 = vmatpush1.bf16.msra.mxu0 0
    %245 = vmatprep.subr.bf16.mxu0 0
    %246 = vmatpush1.bf16.msra.mxu0 0
    %247 = vmatprep.subr.bf16.mxu0 0
    %248 = vmatpush1.bf16.msra.mxu0 0
    %249 = vmatprep.subr.bf16.mxu0 0
    %250 = vmatpush1.bf16.msra.mxu0 0
    %251 = vmatprep.subr.bf16.mxu0 0
    %252 = vmatpush1.bf16.msra.mxu0 0
    %253 = vmatprep.subr.bf16.mxu0 0
    %254 = vmatpush1.bf16.msra.mxu0 0
    %255 = vmatprep.subr.bf16.mxu0 0
    %256 = vmatpush1.bf16.msra.mxu0 0
    %257 = vmatprep.subr.bf16.mxu0 0
    %258 = vmatpush1.bf16.msra.mxu0 0
    %259 = vmatprep.subr.bf16.mxu0 0
    %260 = vmatpush1.bf16.msra.mxu0 0
    %261 = vmatprep.subr.bf16.mxu0 0
    %262 = vmatpush1.bf16.msra.mxu0 0
    %263 = vmatprep.subr.bf16.mxu0 0
    %264 = vmatpush1.bf16.msra.mxu0 0
    %265 = vmatprep.subr.bf16.mxu0 0
    %266 = vmatpush1.bf16.msra.mxu0 0
    %267 = vmatprep.subr.bf16.mxu0 0
    %268 = vmatpush1.bf16.msra.mxu0 0
    %269 = vmatprep.mubr.bf16.mxu0 0
    %270 = vmatmul.mubr.bf16.gmra.mrb[0].mxu0 %v179
    %v271 = vpop.f32.mrb[0].mxu0
    %v272 = vadd.f32 %v229, %v271
    %v273 = vpop.f32.mrb[0].mxu0
    %v274 = vpop.f32.mrb[0].mxu0
    %v275 = vadd.f32 %v229, %v274
    %v276 = vpop.f32.mrb[0].mxu0
    %277 = vdwg.mxu0
    %v278 = vmul.f32 %v216, 0.17677669
    %v279 = vmul.f32 %v219, 0.17677669
    %v280 = vpack.c.bf16 %v279, %v278
    %281 = vst.msk [vmem:[#allocation4] sm:$0xff] %vm158, %v280
    %v282 = vpack.c.bf16 %v275, %v272
    %283 = vst.msk [vmem:[#allocation5] sm:$0xff] %vm158, %v282
    %v284 = vld [vmem:[#allocation3] sm:$0xff]
    %v286 = vunpack.c.l.b16 %v284
    %v287 = vunpack.c.h.b16 %v284
    %v288 = vpack.c.b16 %v286, %v286
    %v289 = vpack.c.b16 %v287, %v287
    %v290 = vld [vmem:[#allocation4] sm:$0xff]
    %v292 = vunpack.c.l.b16 %v290
    %v293 = vunpack.c.h.b16 %v290
    %v294 = vpack.c.b16 %v292, %v292
    %v295 = vpack.c.b16 %v293, %v293
    %v296 = vld [vmem:[#allocation5] sm:$0xff]
    %v298 = vunpack.c.l.b16 %v296
    %v299 = vunpack.c.h.b16 %v296
    %v300 = vpack.c.b16 %v298, %v298
    %v301 = vpack.c.b16 %v299, %v299
    %vm302 = vcmask 64512
    %v304 = vsel %vm302, %v288, 0
    %v307 = vsel %vm302, %v294, 0
    %309 = vmatprep.subr.bf16.mxu0 0
    %310 = vmatpush1.bf16.xpose.msra.mxu0 %v307
    %311 = vmatprep.subr.bf16.mxu0 0
    %312 = vmatpush1.bf16.xpose.msra.mxu0 0
    %313 = vmatprep.subr.bf16.mxu0 0
    %314 = vmatpush1.bf16.xpose.msra.mxu0 0
    %315 = vmatprep.subr.bf16.mxu0 0
    %316 = vmatpush1.bf16.xpose.msra.mxu0 0
    %317 = vmatprep.subr.bf16.mxu0 0
    %318 = vmatpush1.bf16.xpose.msra.mxu0 0
    %319 = vmatprep.subr.bf16.mxu0 0
    %320 = vmatpush1.bf16.xpose.msra.mxu0 0
    %321 = vmatprep.subr.bf16.mxu0 0
    %322 = vmatpush1.bf16.xpose.msra.mxu0 0
    %323 = vmatprep.subr.bf16.mxu0 0
    %324 = vmatpush1.bf16.xpose.msra.mxu0 0
    %325 = vmatprep.subr.bf16.mxu0 0
    %326 = vmatpush1.bf16.xpose.msra.mxu0 0
    %327 = vmatprep.subr.bf16.mxu0 0
    %328 = vmatpush1.bf16.xpose.msra.mxu0 0
    %329 = vmatprep.subr.bf16.mxu0 0
    %330 = vmatpush1.bf16.xpose.msra.mxu0 0
    %331 = vmatprep.subr.bf16.mxu0 0
    %332 = vmatpush1.bf16.xpose.msra.mxu0 0
    %333 = vmatprep.subr.bf16.mxu0 0
    %334 = vmatpush1.bf16.xpose.msra.mxu0 0
    %335 = vmatprep.subr.bf16.mxu0 0
    %336 = vmatpush1.bf16.xpose.msra.mxu0 0
    %337 = vmatprep.subr.bf16.mxu0 0
    %338 = vmatpush1.bf16.xpose.msra.mxu0 0
    %339 = vmatprep.subr.bf16.mxu0 0
    %340 = vmatpush1.bf16.xpose.msra.mxu0 0
    %341 = vmatprep.mubr.bf16.mxu0 0
    %342 = vmatmul.mubr.bf16.gmra.mrb[0].mxu0 %v304
    %v343 = vpop.f32.mrb[0].mxu0
    %v344 = vadd.f32 0.0, %v343
    %v345 = vpop.f32.mrb[0].mxu0
    %v346 = vpop.f32.mrb[0].mxu0
    %v347 = vpop.f32.mrb[0].mxu0
    %348 = vdwg.mxu0
    %v350 = vsel %vm302, %v289, 0
    %v353 = vsel %vm302, %v295, 0
    %355 = vmatprep.subr.bf16.mxu0 0
    %356 = vmatpush1.bf16.xpose.msra.mxu0 %v353
    %357 = vmatprep.subr.bf16.mxu0 0
    %358 = vmatpush1.bf16.xpose.msra.mxu0 0
    %359 = vmatprep.subr.bf16.mxu0 0
    %360 = vmatpush1.bf16.xpose.msra.mxu0 0
    %361 = vmatprep.subr.bf16.mxu0 0
    %362 = vmatpush1.bf16.xpose.msra.mxu0 0
    %363 = vmatprep.subr.bf16.mxu0 0
    %364 = vmatpush1.bf16.xpose.msra.mxu0 0
    %365 = vmatprep.subr.bf16.mxu0 0
    %366 = vmatpush1.bf16.xpose.msra.mxu0 0
    %367 = vmatprep.subr.bf16.mxu0 0
    %368 = vmatpush1.bf16.xpose.msra.mxu0 0
    %369 = vmatprep.subr.bf16.mxu0 0
    %370 = vmatpush1.bf16.xpose.msra.mxu0 0
    %371 = vmatprep.subr.bf16.mxu0 0
    %372 = vmatpush1.bf16.xpose.msra.mxu0 0
    %373 = vmatprep.subr.bf16.mxu0 0
    %374 = vmatpush1.bf16.xpose.msra.mxu0 0
    %375 = vmatprep.subr.bf16.mxu0 0
    %376 = vmatpush1.bf16.xpose.msra.mxu0 0
    %377 = vmatprep.subr.bf16.mxu0 0
    %378 = vmatpush1.bf16.xpose.msra.mxu0 0
    %379 = vmatprep.subr.bf16.mxu0 0
    %380 = vmatpush1.bf16.xpose.msra.mxu0 0
    %381 = vmatprep.subr.bf16.mxu0 0
    %382 = vmatpush1.bf16.xpose.msra.mxu0 0
    %383 = vmatprep.subr.bf16.mxu0 0
    %384 = vmatpush1.bf16.xpose.msra.mxu0 0
    %385 = vmatprep.subr.bf16.mxu0 0
    %386 = vmatpush1.bf16.xpose.msra.mxu0 0
    %387 = vmatprep.mubr.bf16.mxu0 0
    %388 = vmatmul.mubr.bf16.gmra.mrb[0].mxu0 %v350
    %v389 = vpop.f32.mrb[0].mxu0
    %v390 = vadd.f32 0.0, %v389
    %v391 = vpop.f32.mrb[0].mxu0
    %v392 = vpop.f32.mrb[0].mxu0
    %v393 = vpop.f32.mrb[0].mxu0
    %394 = vdwg.mxu0
    %v395 = vsel %vm302, %v344, -inf
    %396 = vmax.xlane.f32.xlu0 %v395
    %v397 = vpop.xlane.xlu0 %396
    %v398 = vsel %vm302, %v390, -inf
    %399 = vmax.xlane.f32.xlu0 %v398
    %v400 = vpop.xlane.xlu0 %399
    %v401 = vsub.f32 %v344, %v397
    %v402 = vsub.f32 %v390, %v400
    %v403 = vmul.f32 %v401, 1.442695
    %v404 = vpow.pop %v403
    %v405 = vmul.f32 %v402, 1.442695
    %v406 = vpow.pop %v405
    %v407 = vsel %vm302, %v404, 0.0
    %408 = vadd.xlane.f32.xlu0 %v407
    %v409 = vpop.xlane.xlu0 %408
    %v410 = vsel %vm302, %v406, 0.0
    %411 = vadd.xlane.f32.xlu0 %v410
    %v412 = vpop.xlane.xlu0 %411
    %v413 = vpack.c.bf16 %v404, %v404
    %v414 = vpack.c.bf16 %v406, %v406
    %v416 = vsel %vm302, %v413, 0
    %vm418 = vcmask 1043456
    %v420 = vsel %vm418, %v300, 0
    %422 = vmatprep.subr.bf16.mxu0 0
    %423 = vmatpush1.bf16.msra.mxu0 %v420
    %424 = vmatprep.subr.bf16.mxu0 0
    %425 = vmatpush1.bf16.msra.mxu0 0
    %426 = vmatprep.subr.bf16.mxu0 0
    %427 = vmatpush1.bf16.msra.mxu0 0
    %428 = vmatprep.subr.bf16.mxu0 0
    %429 = vmatpush1.bf16.msra.mxu0 0
    %430 = vmatprep.subr.bf16.mxu0 0
    %431 = vmatpush1.bf16.msra.mxu0 0
    %432 = vmatprep.subr.bf16.mxu0 0
    %433 = vmatpush1.bf16.msra.mxu0 0
    %434 = vmatprep.subr.bf16.mxu0 0
    %435 = vmatpush1.bf16.msra.mxu0 0
    %436 = vmatprep.subr.bf16.mxu0 0
    %437 = vmatpush1.bf16.msra.mxu0 0
    %438 = vmatprep.subr.bf16.mxu0 0
    %439 = vmatpush1.bf16.msra.mxu0 0
    %440 = vmatprep.subr.bf16.mxu0 0
    %441 = vmatpush1.bf16.msra.mxu0 0
    %442 = vmatprep.subr.bf16.mxu0 0
    %443 = vmatpush1.bf16.msra.mxu0 0
    %444 = vmatprep.subr.bf16.mxu0 0
    %445 = vmatpush1.bf16.msra.mxu0 0
    %446 = vmatprep.subr.bf16.mxu0 0
    %447 = vmatpush1.bf16.msra.mxu0 0
    %448 = vmatprep.subr.bf16.mxu0 0
    %449 = vmatpush1.bf16.msra.mxu0 0
    %450 = vmatprep.subr.bf16.mxu0 0
    %451 = vmatpush1.bf16.msra.mxu0 0
    %452 = vmatprep.subr.bf16.mxu0 0
    %453 = vmatpush1.bf16.msra.mxu0 0
    %454 = vmatprep.mubr.bf16.mxu0 0
    %455 = vmatmul.mubr.bf16.gmra.mrb[0].mxu0 %v416
    %v456 = vpop.f32.mrb[0].mxu0
    %v457 = vadd.f32 0.0, %v456
    %v458 = vpop.f32.mrb[0].mxu0
    %v459 = vpop.f32.mrb[0].mxu0
    %v460 = vpop.f32.mrb[0].mxu0
    %461 = vdwg.mxu0
    %v463 = vsel %vm302, %v414, 0
    %v466 = vsel %vm418, %v301, 0
    %468 = vmatprep.subr.bf16.mxu0 0
    %469 = vmatpush1.bf16.msra.mxu0 %v466
    %470 = vmatprep.subr.bf16.mxu0 0
    %471 = vmatpush1.bf16.msra.mxu0 0
    %472 = vmatprep.subr.bf16.mxu0 0
    %473 = vmatpush1.bf16.msra.mxu0 0
    %474 = vmatprep.subr.bf16.mxu0 0
    %475 = vmatpush1.bf16.msra.mxu0 0
    %476 = vmatprep.subr.bf16.mxu0 0
    %477 = vmatpush1.bf16.msra.mxu0 0
    %478 = vmatprep.subr.bf16.mxu0 0
    %479 = vmatpush1.bf16.msra.mxu0 0
    %480 = vmatprep.subr.bf16.mxu0 0
    %481 = vmatpush1.bf16.msra.mxu0 0
    %482 = vmatprep.subr.bf16.mxu0 0
    %483 = vmatpush1.bf16.msra.mxu0 0
    %484 = vmatprep.subr.bf16.mxu0 0
    %485 = vmatpush1.bf16.msra.mxu0 0
    %486 = vmatprep.subr.bf16.mxu0 0
    %487 = vmatpush1.bf16.msra.mxu0 0
    %488 = vmatprep.subr.bf16.mxu0 0
    %489 = vmatpush1.bf16.msra.mxu0 0
    %490 = vmatprep.subr.bf16.mxu0 0
    %491 = vmatpush1.bf16.msra.mxu0 0
    %492 = vmatprep.subr.bf16.mxu0 0
    %493 = vmatpush1.bf16.msra.mxu0 0
    %494 = vmatprep.subr.bf16.mxu0 0
    %495 = vmatpush1.bf16.msra.mxu0 0
    %496 = vmatprep.subr.bf16.mxu0 0
    %497 = vmatpush1.bf16.msra.mxu0 0
    %498 = vmatprep.subr.bf16.mxu0 0
    %499 = vmatpush1.bf16.msra.mxu0 0
    %500 = vmatprep.mubr.bf16.mxu0 0
    %501 = vmatmul.mubr.bf16.gmra.mrb[0].mxu0 %v463
    %v502 = vpop.f32.mrb[0].mxu0
    %v503 = vadd.f32 0.0, %v502
    %v504 = vpop.f32.mrb[0].mxu0
    %v505 = vpop.f32.mrb[0].mxu0
    %v506 = vpop.f32.mrb[0].mxu0
    %507 = vdwg.mxu0
    %v508 = vrcp.pop %v409
    %v509 = vrcp.pop %v412
    %v510 = vmul.f32 %v457, %v508
    %v511 = vmul.f32 %v503, %v509
    %512 = vst.msk [vmem:[#allocation6] sm:$0xff] %vm302, %v510
    %513 = vst.msk [vmem:[#allocation6 + $0x8] sm:$0xff] %vm302, %v511
    %v514 = vld [vmem:[#allocation3] sm:$0xff]
    %v516 = vunpack.c.l.b16 %v514
    %v517 = vunpack.c.h.b16 %v514
    %v518 = vld [vmem:[#allocation4] sm:$0xff]
    %v520 = vunpack.c.l.b16 %v518
    %v521 = vunpack.c.h.b16 %v518
    %v522 = vld [vmem:[#allocation5] sm:$0xff]
    %v524 = vunpack.c.l.b16 %v522
    %v525 = vunpack.c.h.b16 %v522
    %v526 = vpack.c.b16 %v516, %v516
    %527 = vrot.lane.b32.xlu0 %v526, 120
    %v528 = vpop.permute.xlu0 %527
    %v529 = vpack.c.b16 %v520, %v520
    %530 = vrot.lane.b32.xlu0 %v529, 120
    %v531 = vpop.permute.xlu0 %530
    %v533 = vsel %vm302, %v528, 0
    %v536 = vsel %vm302, %v531, 0
    %538 = vmatprep.subr.bf16.mxu0 0
    %539 = vmatpush1.bf16.xpose.msra.mxu0 %v536
    %540 = vmatprep.subr.bf16.mxu0 0
    %541 = vmatpush1.bf16.xpose.msra.mxu0 0
    %542 = vmatprep.subr.bf16.mxu0 0
    %543 = vmatpush1.bf16.xpose.msra.mxu0 0
    %544 = vmatprep.subr.bf16.mxu0 0
    %545 = vmatpush1.bf16.xpose.msra.mxu0 0
    %546 = vmatprep.subr.bf16.mxu0 0
    %547 = vmatpush1.bf16.xpose.msra.mxu0 0
    %548 = vmatprep.subr.bf16.mxu0 0
    %549 = vmatpush1.bf16.xpose.msra.mxu0 0
    %550 = vmatprep.subr.bf16.mxu0 0
    %551 = vmatpush1.bf16.xpose.msra.mxu0 0
    %552 = vmatprep.subr.bf16.mxu0 0
    %553 = vmatpush1.bf16.xpose.msra.mxu0 0
    %554 = vmatprep.subr.bf16.mxu0 0
    %555 = vmatpush1.bf16.xpose.msra.mxu0 0
    %556 = vmatprep.subr.bf16.mxu0 0
    %557 = vmatpush1.bf16.xpose.msra.mxu0 0
    %558 = vmatprep.subr.bf16.mxu0 0
    %559 = vmatpush1.bf16.xpose.msra.mxu0 0
    %560 = vmatprep.subr.bf16.mxu0 0
    %561 = vmatpush1.bf16.xpose.msra.mxu0 0
    %562 = vmatprep.subr.bf16.mxu0 0
    %563 = vmatpush1.bf16.xpose.msra.mxu0 0
    %564 = vmatprep.subr.bf16.mxu0 0
    %565 = vmatpush1.bf16.xpose.msra.mxu0 0
    %566 = vmatprep.subr.bf16.mxu0 0
    %567 = vmatpush1.bf16.xpose.msra.mxu0 0
    %568 = vmatprep.subr.bf16.mxu0 0
    %569 = vmatpush1.bf16.xpose.msra.mxu0 0
    %570 = vmatprep.mubr.bf16.mxu0 0
    %571 = vmatmul.mubr.bf16.gmra.mrb[0].mxu0 %v533
    %v572 = vpop.f32.mrb[0].mxu0
    %v573 = vadd.f32 0.0, %v572
    %v574 = vpop.f32.mrb[0].mxu0
    %v575 = vpop.f32.mrb[0].mxu0
    %v576 = vpop.f32.mrb[0].mxu0
    %577 = vdwg.mxu0
    %v578 = vpack.c.b16 %v517, %v517
    %579 = vrot.lane.b32.xlu0 %v578, 120
    %v580 = vpop.permute.xlu0 %579
    %v581 = vpack.c.b16 %v521, %v521
    %582 = vrot.lane.b32.xlu0 %v581, 120
    %v583 = vpop.permute.xlu0 %582
    %v585 = vsel %vm302, %v580, 0
    %v588 = vsel %vm302, %v583, 0
    %590 = vmatprep.subr.bf16.mxu0 0
    %591 = vmatpush1.bf16.xpose.msra.mxu0 %v588
    %592 = vmatprep.subr.bf16.mxu0 0
    %593 = vmatpush1.bf16.xpose.msra.mxu0 0
    %594 = vmatprep.subr.bf16.mxu0 0
    %595 = vmatpush1.bf16.xpose.msra.mxu0 0
    %596 = vmatprep.subr.bf16.mxu0 0
    %597 = vmatpush1.bf16.xpose.msra.mxu0 0
    %598 = vmatprep.subr.bf16.mxu0 0
    %599 = vmatpush1.bf16.xpose.msra.mxu0 0
    %600 = vmatprep.subr.bf16.mxu0 0
    %601 = vmatpush1.bf16.xpose.msra.mxu0 0
    %602 = vmatprep.subr.bf16.mxu0 0
    %603 = vmatpush1.bf16.xpose.msra.mxu0 0
    %604 = vmatprep.subr.bf16.mxu0 0
    %605 = vmatpush1.bf16.xpose.msra.mxu0 0
    %606 = vmatprep.subr.bf16.mxu0 0
    %607 = vmatpush1.bf16.xpose.msra.mxu0 0
    %608 = vmatprep.subr.bf16.mxu0 0
    %609 = vmatpush1.bf16.xpose.msra.mxu0 0
    %610 = vmatprep.subr.bf16.mxu0 0
    %611 = vmatpush1.bf16.xpose.msra.mxu0 0
    %612 = vmatprep.subr.bf16.mxu0 0
    %613 = vmatpush1.bf16.xpose.msra.mxu0 0
    %614 = vmatprep.subr.bf16.mxu0 0
    %615 = vmatpush1.bf16.xpose.msra.mxu0 0
    %616 = vmatprep.subr.bf16.mxu0 0
    %617 = vmatpush1.bf16.xpose.msra.mxu0 0
    %618 = vmatprep.subr.bf16.mxu0 0
    %619 = vmatpush1.bf16.xpose.msra.mxu0 0
    %620 = vmatprep.subr.bf16.mxu0 0
    %621 = vmatpush1.bf16.xpose.msra.mxu0 0
    %622 = vmatprep.mubr.bf16.mxu0 0
    %623 = vmatmul.mubr.bf16.gmra.mrb[0].mxu0 %v585
    %v624 = vpop.f32.mrb[0].mxu0
    %v625 = vadd.f32 0.0, %v624
    %v626 = vpop.f32.mrb[0].mxu0
    %v627 = vpop.f32.mrb[0].mxu0
    %v628 = vpop.f32.mrb[0].mxu0
    %629 = vdwg.mxu0
    %v630 = vsel %vm302, %v573, -inf
    %631 = vmax.xlane.f32.xlu0 %v630
    %v632 = vpop.xlane.xlu0 %631
    %v633 = vsel %vm302, %v625, -inf
    %634 = vmax.xlane.f32.xlu0 %v633
    %v635 = vpop.xlane.xlu0 %634
    %v636 = vsub.f32 %v573, %v632
    %v637 = vsub.f32 %v625, %v635
    %v638 = vmul.f32 %v636, 1.442695
    %v639 = vpow.pop %v638
    %v640 = vmul.f32 %v637, 1.442695
    %v641 = vpow.pop %v640
    %v642 = vsel %vm302, %v639, 0.0
    %643 = vadd.xlane.f32.xlu0 %v642
    %v644 = vpop.xlane.xlu0 %643
    %v645 = vsel %vm302, %v641, 0.0
    %646 = vadd.xlane.f32.xlu0 %v645
    %v647 = vpop.xlane.xlu0 %646
    %v648 = vpack.c.bf16 %v639, %v639
    %v649 = vpack.c.bf16 %v641, %v641
    %v650 = vpack.c.b16 %v524, %v524
    %651 = vrot.lane.b32.xlu0 %v650, 120
    %v652 = vpop.permute.xlu0 %651
    %v654 = vsel %vm302, %v648, 0
    %v657 = vsel %vm418, %v652, 0
    %659 = vmatprep.subr.bf16.mxu0 0
    %660 = vmatpush1.bf16.msra.mxu0 %v657
    %661 = vmatprep.subr.bf16.mxu0 0
    %662 = vmatpush1.bf16.msra.mxu0 0
    %663 = vmatprep.subr.bf16.mxu0 0
    %664 = vmatpush1.bf16.msra.mxu0 0
    %665 = vmatprep.subr.bf16.mxu0 0
    %666 = vmatpush1.bf16.msra.mxu0 0
    %667 = vmatprep.subr.bf16.mxu0 0
    %668 = vmatpush1.bf16.msra.mxu0 0
    %669 = vmatprep.subr.bf16.mxu0 0
    %670 = vmatpush1.bf16.msra.mxu0 0
    %671 = vmatprep.subr.bf16.mxu0 0
    %672 = vmatpush1.bf16.msra.mxu0 0
    %673 = vmatprep.subr.bf16.mxu0 0
    %674 = vmatpush1.bf16.msra.mxu0 0
    %675 = vmatprep.subr.bf16.mxu0 0
    %676 = vmatpush1.bf16.msra.mxu0 0
    %677 = vmatprep.subr.bf16.mxu0 0
    %678 = vmatpush1.bf16.msra.mxu0 0
    %679 = vmatprep.subr.bf16.mxu0 0
    %680 = vmatpush1.bf16.msra.mxu0 0
    %681 = vmatprep.subr.bf16.mxu0 0
    %682 = vmatpush1.bf16.msra.mxu0 0
    %683 = vmatprep.subr.bf16.mxu0 0
    %684 = vmatpush1.bf16.msra.mxu0 0
    %685 = vmatprep.subr.bf16.mxu0 0
    %686 = vmatpush1.bf16.msra.mxu0 0
    %687 = vmatprep.subr.bf16.mxu0 0
    %688 = vmatpush1.bf16.msra.mxu0 0
    %689 = vmatprep.subr.bf16.mxu0 0
    %690 = vmatpush1.bf16.msra.mxu0 0
    %691 = vmatprep.mubr.bf16.mxu0 0
    %692 = vmatmul.mubr.bf16.gmra.mrb[0].mxu0 %v654
    %v693 = vpop.f32.mrb[0].mxu0
    %v694 = vadd.f32 0.0, %v693
    %v695 = vpop.f32.mrb[0].mxu0
    %v696 = vpop.f32.mrb[0].mxu0
    %v697 = vpop.f32.mrb[0].mxu0
    %698 = vdwg.mxu0
    %v699 = vpack.c.b16 %v525, %v525
    %700 = vrot.lane.b32.xlu0 %v699, 120
    %v701 = vpop.permute.xlu0 %700
    %v703 = vsel %vm302, %v649, 0
    %v706 = vsel %vm418, %v701, 0
    %708 = vmatprep.subr.bf16.mxu0 0
    %709 = vmatpush1.bf16.msra.mxu0 %v706
    %710 = vmatprep.subr.bf16.mxu0 0
    %711 = vmatpush1.bf16.msra.mxu0 0
    %712 = vmatprep.subr.bf16.mxu0 0
    %713 = vmatpush1.bf16.msra.mxu0 0
    %714 = vmatprep.subr.bf16.mxu0 0
    %715 = vmatpush1.bf16.msra.mxu0 0
    %716 = vmatprep.subr.bf16.mxu0 0
    %717 = vmatpush1.bf16.msra.mxu0 0
    %718 = vmatprep.subr.bf16.mxu0 0
    %719 = vmatpush1.bf16.msra.mxu0 0
    %720 = vmatprep.subr.bf16.mxu0 0
    %721 = vmatpush1.bf16.msra.mxu0 0
    %722 = vmatprep.subr.bf16.mxu0 0
    %723 = vmatpush1.bf16.msra.mxu0 0
    %724 = vmatprep.subr.bf16.mxu0 0
    %725 = vmatpush1.bf16.msra.mxu0 0
    %726 = vmatprep.subr.bf16.mxu0 0
    %727 = vmatpush1.bf16.msra.mxu0 0
    %728 = vmatprep.subr.bf16.mxu0 0
    %729 = vmatpush1.bf16.msra.mxu0 0
    %730 = vmatprep.subr.bf16.mxu0 0
    %731 = vmatpush1.bf16.msra.mxu0 0
    %732 = vmatprep.subr.bf16.mxu0 0
    %733 = vmatpush1.bf16.msra.mxu0 0
    %734 = vmatprep.subr.bf16.mxu0 0
    %735 = vmatpush1.bf16.msra.mxu0 0
    %736 = vmatprep.subr.bf16.mxu0 0
    %737 = vmatpush1.bf16.msra.mxu0 0
    %738 = vmatprep.subr.bf16.mxu0 0
    %739 = vmatpush1.bf16.msra.mxu0 0
    %740 = vmatprep.mubr.bf16.mxu0 0
    %741 = vmatmul.mubr.bf16.gmra.mrb[0].mxu0 %v703
    %v742 = vpop.f32.mrb[0].mxu0
    %v743 = vadd.f32 0.0, %v742
    %v744 = vpop.f32.mrb[0].mxu0
    %v745 = vpop.f32.mrb[0].mxu0
    %v746 = vpop.f32.mrb[0].mxu0
    %747 = vdwg.mxu0
    %v748 = vrcp.pop %v644
    %v749 = vrcp.pop %v647
    %v750 = vmul.f32 %v694, %v748
    %v751 = vmul.f32 %v743, %v749
    %754 = vrot.lane.b32.xlu0 %v750, 8
    %v755 = vpop.permute.xlu0 %754
    %756 = vrot.lane.b32.xlu0 %v751, 8
    %v757 = vpop.permute.xlu0 %756
    %vm760 = vcmask 130112
    %761 = vst.msk [vmem:[#allocation6] sm:$0xff] %vm760, %v755
    %762 = vst.msk [vmem:[#allocation6 + $0x8] sm:$0xff] %vm760, %v757
    %v763 = vld [vmem:[#allocation3] sm:$0xff]
    %v765 = vunpack.c.l.b16 %v763
    %v766 = vunpack.c.h.b16 %v763
    %v767 = vld [vmem:[#allocation4] sm:$0xff]
    %v769 = vunpack.c.l.b16 %v767
    %v770 = vunpack.c.h.b16 %v767
    %v771 = vld [vmem:[#allocation5] sm:$0xff]
    %v773 = vunpack.c.l.b16 %v771
    %v774 = vunpack.c.h.b16 %v771
    %v775 = vpack.c.b16 %v765, %v765
    %776 = vrot.lane.b32.xlu0 %v775, 112
    %v777 = vpop.permute.xlu0 %776
    %v778 = vpack.c.b16 %v769, %v769
    %779 = vrot.lane.b32.xlu0 %v778, 112
    %v780 = vpop.permute.xlu0 %779
    %v782 = vsel %vm302, %v777, 0
    %v785 = vsel %vm302, %v780, 0
    %787 = vmatprep.subr.bf16.mxu0 0
    %788 = vmatpush1.bf16.xpose.msra.mxu0 %v785
    %789 = vmatprep.subr.bf16.mxu0 0
    %790 = vmatpush1.bf16.xpose.msra.mxu0 0
    %791 = vmatprep.subr.bf16.mxu0 0
    %792 = vmatpush1.bf16.xpose.msra.mxu0 0
    %793 = vmatprep.subr.bf16.mxu0 0
    %794 = vmatpush1.bf16.xpose.msra.mxu0 0
    %795 = vmatprep.subr.bf16.mxu0 0
    %796 = vmatpush1.bf16.xpose.msra.mxu0 0
    %797 = vmatprep.subr.bf16.mxu0 0
    %798 = vmatpush1.bf16.xpose.msra.mxu0 0
    %799 = vmatprep.subr.bf16.mxu0 0
    %800 = vmatpush1.bf16.xpose.msra.mxu0 0
    %801 = vmatprep.subr.bf16.mxu0 0
    %802 = vmatpush1.bf16.xpose.msra.mxu0 0
    %803 = vmatprep.subr.bf16.mxu0 0
    %804 = vmatpush1.bf16.xpose.msra.mxu0 0
    %805 = vmatprep.subr.bf16.mxu0 0
    %806 = vmatpush1.bf16.xpose.msra.mxu0 0
    %807 = vmatprep.subr.bf16.mxu0 0
    %808 = vmatpush1.bf16.xpose.msra.mxu0 0
    %809 = vmatprep.subr.bf16.mxu0 0
    %810 = vmatpush1.bf16.xpose.msra.mxu0 0
    %811 = vmatprep.subr.bf16.mxu0 0
    %812 = vmatpush1.bf16.xpose.msra.mxu0 0
    %813 = vmatprep.subr.bf16.mxu0 0
    %814 = vmatpush1.bf16.xpose.msra.mxu0 0
    %815 = vmatprep.subr.bf16.mxu0 0
    %816 = vmatpush1.bf16.xpose.msra.mxu0 0
    %817 = vmatprep.subr.bf16.mxu0 0
    %818 = vmatpush1.bf16.xpose.msra.mxu0 0
    %819 = vmatprep.mubr.bf16.mxu0 0
    %820 = vmatmul.mubr.bf16.gmra.mrb[0].mxu0 %v782
    %v821 = vpop.f32.mrb[0].mxu0
    %v822 = vadd.f32 0.0, %v821
    %v823 = vpop.f32.mrb[0].mxu0
    %v824 = vpop.f32.mrb[0].mxu0
    %v825 = vpop.f32.mrb[0].mxu0
    %826 = vdwg.mxu0
    %v827 = vpack.c.b16 %v766, %v766
    %828 = vrot.lane.b32.xlu0 %v827, 112
    %v829 = vpop.permute.xlu0 %828
    %v830 = vpack.c.b16 %v770, %v770
    %831 = vrot.lane.b32.xlu0 %v830, 112
    %v832 = vpop.permute.xlu0 %831
    %v834 = vsel %vm302, %v829, 0
    %v837 = vsel %vm302, %v832, 0
    %839 = vmatprep.subr.bf16.mxu0 0
    %840 = vmatpush1.bf16.xpose.msra.mxu0 %v837
    %841 = vmatprep.subr.bf16.mxu0 0
    %842 = vmatpush1.bf16.xpose.msra.mxu0 0
    %843 = vmatprep.subr.bf16.mxu0 0
    %844 = vmatpush1.bf16.xpose.msra.mxu0 0
    %845 = vmatprep.subr.bf16.mxu0 0
    %846 = vmatpush1.bf16.xpose.msra.mxu0 0
    %847 = vmatprep.subr.bf16.mxu0 0
    %848 = vmatpush1.bf16.xpose.msra.mxu0 0
    %849 = vmatprep.subr.bf16.mxu0 0
    %850 = vmatpush1.bf16.xpose.msra.mxu0 0
    %851 = vmatprep.subr.bf16.mxu0 0
    %852 = vmatpush1.bf16.xpose.msra.mxu0 0
    %853 = vmatprep.subr.bf16.mxu0 0
    %854 = vmatpush1.bf16.xpose.msra.mxu0 0
    %855 = vmatprep.subr.bf16.mxu0 0
    %856 = vmatpush1.bf16.xpose.msra.mxu0 0
    %857 = vmatprep.subr.bf16.mxu0 0
    %858 = vmatpush1.bf16.xpose.msra.mxu0 0
    %859 = vmatprep.subr.bf16.mxu0 0
    %860 = vmatpush1.bf16.xpose.msra.mxu0 0
    %861 = vmatprep.subr.bf16.mxu0 0
    %862 = vmatpush1.bf16.xpose.msra.mxu0 0
    %863 = vmatprep.subr.bf16.mxu0 0
    %864 = vmatpush1.bf16.xpose.msra.mxu0 0
    %865 = vmatprep.subr.bf16.mxu0 0
    %866 = vmatpush1.bf16.xpose.msra.mxu0 0
    %867 = vmatprep.subr.bf16.mxu0 0
    %868 = vmatpush1.bf16.xpose.msra.mxu0 0
    %869 = vmatprep.subr.bf16.mxu0 0
    %870 = vmatpush1.bf16.xpose.msra.mxu0 0
    %871 = vmatprep.mubr.bf16.mxu0 0
    %872 = vmatmul.mubr.bf16.gmra.mrb[0].mxu0 %v834
    %v873 = vpop.f32.mrb[0].mxu0
    %v874 = vadd.f32 0.0, %v873
    %v875 = vpop.f32.mrb[0].mxu0
    %v876 = vpop.f32.mrb[0].mxu0
    %v877 = vpop.f32.mrb[0].mxu0
    %878 = vdwg.mxu0
    %v879 = vsel %vm302, %v822, -inf
    %880 = vmax.xlane.f32.xlu0 %v879
    %v881 = vpop.xlane.xlu0 %880
    %v882 = vsel %vm302, %v874, -inf
    %883 = vmax.xlane.f32.xlu0 %v882
    %v884 = vpop.xlane.xlu0 %883
    %v885 = vsub.f32 %v822, %v881
    %v886 = vsub.f32 %v874, %v884
    %v887 = vmul.f32 %v885, 1.442695
    %v888 = vpow.pop %v887
    %v889 = vmul.f32 %v886, 1.442695
    %v890 = vpow.pop %v889
    %v891 = vsel %vm302, %v888, 0.0
    %892 = vadd.xlane.f32.xlu0 %v891
    %v893 = vpop.xlane.xlu0 %892
    %v894 = vsel %vm302, %v890, 0.0
    %895 = vadd.xlane.f32.xlu0 %v894
    %v896 = vpop.xlane.xlu0 %895
    %v897 = vpack.c.bf16 %v888, %v888
    %v898 = vpack.c.bf16 %v890, %v890
    %v899 = vpack.c.b16 %v773, %v773
    %900 = vrot.lane.b32.xlu0 %v899, 112
    %v901 = vpop.permute.xlu0 %900
    %v903 = vsel %vm302, %v897, 0
    %v906 = vsel %vm418, %v901, 0
    %908 = vmatprep.subr.bf16.mxu0 0
    %909 = vmatpush1.bf16.msra.mxu0 %v906
    %910 = vmatprep.subr.bf16.mxu0 0
    %911 = vmatpush1.bf16.msra.mxu0 0
    %912 = vmatprep.subr.bf16.mxu0 0
    %913 = vmatpush1.bf16.msra.mxu0 0
    %914 = vmatprep.subr.bf16.mxu0 0
    %915 = vmatpush1.bf16.msra.mxu0 0
    %916 = vmatprep.subr.bf16.mxu0 0
    %917 = vmatpush1.bf16.msra.mxu0 0
    %918 = vmatprep.subr.bf16.mxu0 0
    %919 = vmatpush1.bf16.msra.mxu0 0
    %920 = vmatprep.subr.bf16.mxu0 0
    %921 = vmatpush1.bf16.msra.mxu0 0
    %922 = vmatprep.subr.bf16.mxu0 0
    %923 = vmatpush1.bf16.msra.mxu0 0
    %924 = vmatprep.subr.bf16.mxu0 0
    %925 = vmatpush1.bf16.msra.mxu0 0
    %926 = vmatprep.subr.bf16.mxu0 0
    %927 = vmatpush1.bf16.msra.mxu0 0
    %928 = vmatprep.subr.bf16.mxu0 0
    %929 = vmatpush1.bf16.msra.mxu0 0
    %930 = vmatprep.subr.bf16.mxu0 0
    %931 = vmatpush1.bf16.msra.mxu0 0
    %932 = vmatprep.subr.bf16.mxu0 0
    %933 = vmatpush1.bf16.msra.mxu0 0
    %934 = vmatprep.subr.bf16.mxu0 0
    %935 = vmatpush1.bf16.msra.mxu0 0
    %936 = vmatprep.subr.bf16.mxu0 0
    %937 = vmatpush1.bf16.msra.mxu0 0
    %938 = vmatprep.subr.bf16.mxu0 0
    %939 = vmatpush1.bf16.msra.mxu0 0
    %940 = vmatprep.mubr.bf16.mxu0 0
    %941 = vmatmul.mubr.bf16.gmra.mrb[0].mxu0 %v903
    %v942 = vpop.f32.mrb[0].mxu0
    %v943 = vadd.f32 0.0, %v942
    %v944 = vpop.f32.mrb[0].mxu0
    %v945 = vpop.f32.mrb[0].mxu0
    %v946 = vpop.f32.mrb[0].mxu0
    %947 = vdwg.mxu0
    %v948 = vpack.c.b16 %v774, %v774
    %949 = vrot.lane.b32.xlu0 %v948, 112
    %v950 = vpop.permute.xlu0 %949
    %v952 = vsel %vm302, %v898, 0
    %v955 = vsel %vm418, %v950, 0
    %957 = vmatprep.subr.bf16.mxu0 0
    %958 = vmatpush1.bf16.msra.mxu0 %v955
    %959 = vmatprep.subr.bf16.mxu0 0
    %960 = vmatpush1.bf16.msra.mxu0 0
    %961 = vmatprep.subr.bf16.mxu0 0
    %962 = vmatpush1.bf16.msra.mxu0 0
    %963 = vmatprep.subr.bf16.mxu0 0
    %964 = vmatpush1.bf16.msra.mxu0 0
    %965 = vmatprep.subr.bf16.mxu0 0
    %966 = vmatpush1.bf16.msra.mxu0 0
    %967 = vmatprep.subr.bf16.mxu0 0
    %968 = vmatpush1.bf16.msra.mxu0 0
    %969 = vmatprep.subr.bf16.mxu0 0
    %970 = vmatpush1.bf16.msra.mxu0 0
    %971 = vmatprep.subr.bf16.mxu0 0
    %972 = vmatpush1.bf16.msra.mxu0 0
    %973 = vmatprep.subr.bf16.mxu0 0
    %974 = vmatpush1.bf16.msra.mxu0 0
    %975 = vmatprep.subr.bf16.mxu0 0
    %976 = vmatpush1.bf16.msra.mxu0 0
    %977 = vmatprep.subr.bf16.mxu0 0
    %978 = vmatpush1.bf16.msra.mxu0 0
    %979 = vmatprep.subr.bf16.mxu0 0
    %980 = vmatpush1.bf16.msra.mxu0 0
    %981 = vmatprep.subr.bf16.mxu0 0
    %982 = vmatpush1.bf16.msra.mxu0 0
    %983 = vmatprep.subr.bf16.mxu0 0
    %984 = vmatpush1.bf16.msra.mxu0 0
    %985 = vmatprep.subr.bf16.mxu0 0
    %986 = vmatpush1.bf16.msra.mxu0 0
    %987 = vmatprep.subr.bf16.mxu0 0
    %988 = vmatpush1.bf16.msra.mxu0 0
    %989 = vmatprep.mubr.bf16.mxu0 0
    %990 = vmatmul.mubr.bf16.gmra.mrb[0].mxu0 %v952
    %v991 = vpop.f32.mrb[0].mxu0
    %v992 = vadd.f32 0.0, %v991
    %v993 = vpop.f32.mrb[0].mxu0
    %v994 = vpop.f32.mrb[0].mxu0
    %v995 = vpop.f32.mrb[0].mxu0
    %996 = vdwg.mxu0
    %v997 = vrcp.pop %v893
    %v998 = vrcp.pop %v896
    %v999 = vmul.f32 %v943, %v997
    %v1000 = vmul.f32 %v992, %v998
    %1003 = vrot.lane.b32.xlu0 %v999, 16
    %v1004 = vpop.permute.xlu0 %1003
    %1005 = vrot.lane.b32.xlu0 %v1000, 16
    %v1006 = vpop.permute.xlu0 %1005
    %vm1009 = vcmask 195712
    %1010 = vst.msk [vmem:[#allocation6] sm:$0xff] %vm1009, %v1004
    %1011 = vst.msk [vmem:[#allocation6 + $0x8] sm:$0xff] %vm1009, %v1006
    %v1012 = vld [vmem:[#allocation3] sm:$0xff]
    %v1014 = vunpack.c.l.b16 %v1012
    %v1015 = vunpack.c.h.b16 %v1012
    %v1016 = vld [vmem:[#allocation4] sm:$0xff]
    %v1018 = vunpack.c.l.b16 %v1016
    %v1019 = vunpack.c.h.b16 %v1016
    %v1020 = vld [vmem:[#allocation5] sm:$0xff]
    %v1022 = vunpack.c.l.b16 %v1020
    %v1023 = vunpack.c.h.b16 %v1020
    %v1024 = vpack.c.b16 %v1014, %v1014
    %1025 = vrot.lane.b32.xlu0 %v1024, 104
    %v1026 = vpop.permute.xlu0 %1025
    %v1027 = vpack.c.b16 %v1018, %v1018
    %1028 = vrot.lane.b32.xlu0 %v1027, 104
    %v1029 = vpop.permute.xlu0 %1028
    %v1031 = vsel %vm302, %v1026, 0
    %v1034 = vsel %vm302, %v1029, 0
    %1036 = vmatprep.subr.bf16.mxu0 0
    %1037 = vmatpush1.bf16.xpose.msra.mxu0 %v1034
    %1038 = vmatprep.subr.bf16.mxu0 0
    %1039 = vmatpush1.bf16.xpose.msra.mxu0 0
    %1040 = vmatprep.subr.bf16.mxu0 0
    %1041 = vmatpush1.bf16.xpose.msra.mxu0 0
    %1042 = vmatprep.subr.bf16.mxu0 0
    %1043 = vmatpush1.bf16.xpose.msra.mxu0 0
    %1044 = vmatprep.subr.bf16.mxu0 0
    %1045 = vmatpush1.bf16.xpose.msra.mxu0 0
    %1046 = vmatprep.subr.bf16.mxu0 0
    %1047 = vmatpush1.bf16.xpose.msra.mxu0 0
    %1048 = vmatprep.subr.bf16.mxu0 0
    %1049 = vmatpush1.bf16.xpose.msra.mxu0 0
    %1050 = vmatprep.subr.bf16.mxu0 0
    %1051 = vmatpush1.bf16.xpose.msra.mxu0 0
    %1052 = vmatprep.subr.bf16.mxu0 0
    %1053 = vmatpush1.bf16.xpose.msra.mxu0 0
    %1054 = vmatprep.subr.bf16.mxu0 0
    %1055 = vmatpush1.bf16.xpose.msra.mxu0 0
    %1056 = vmatprep.subr.bf16.mxu0 0
    %1057 = vmatpush1.bf16.xpose.msra.mxu0 0
    %1058 = vmatprep.subr.bf16.mxu0 0
    %1059 = vmatpush1.bf16.xpose.msra.mxu0 0
    %1060 = vmatprep.subr.bf16.mxu0 0
    %1061 = vmatpush1.bf16.xpose.msra.mxu0 0
    %1062 = vmatprep.subr.bf16.mxu0 0
    %1063 = vmatpush1.bf16.xpose.msra.mxu0 0
    %1064 = vmatprep.subr.bf16.mxu0 0
    %1065 = vmatpush1.bf16.xpose.msra.mxu0 0
    %1066 = vmatprep.subr.bf16.mxu0 0
    %1067 = vmatpush1.bf16.xpose.msra.mxu0 0
    %1068 = vmatprep.mubr.bf16.mxu0 0
    %1069 = vmatmul.mubr.bf16.gmra.mrb[0].mxu0 %v1031
    %v1070 = vpop.f32.mrb[0].mxu0
    %v1071 = vadd.f32 0.0, %v1070
    %v1072 = vpop.f32.mrb[0].mxu0
    %v1073 = vpop.f32.mrb[0].mxu0
    %v1074 = vpop.f32.mrb[0].mxu0
    %1075 = vdwg.mxu0
    %v1076 = vpack.c.b16 %v1015, %v1015
    %1077 = vrot.lane.b32.xlu0 %v1076, 104
    %v1078 = vpop.permute.xlu0 %1077
    %v1079 = vpack.c.b16 %v1019, %v1019
    %1080 = vrot.lane.b32.xlu0 %v1079, 104
    %v1081 = vpop.permute.xlu0 %1080
    %v1083 = vsel %vm302, %v1078, 0
    %v1086 = vsel %vm302, %v1081, 0
    %1088 = vmatprep.subr.bf16.mxu0 0
    %1089 = vmatpush1.bf16.xpose.msra.mxu0 %v1086
    %1090 = vmatprep.subr.bf16.mxu0 0
    %1091 = vmatpush1.bf16.xpose.msra.mxu0 0
    %1092 = vmatprep.subr.bf16.mxu0 0
    %1093 = vmatpush1.bf16.xpose.msra.mxu0 0
    %1094 = vmatprep.subr.bf16.mxu0 0
    %1095 = vmatpush1.bf16.xpose.msra.mxu0 0
    %1096 = vmatprep.subr.bf16.mxu0 0
    %1097 = vmatpush1.bf16.xpose.msra.mxu0 0
    %1098 = vmatprep.subr.bf16.mxu0 0
    %1099 = vmatpush1.bf16.xpose.msra.mxu0 0
    %1100 = vmatprep.subr.bf16.mxu0 0
    %1101 = vmatpush1.bf16.xpose.msra.mxu0 0
    %1102 = vmatprep.subr.bf16.mxu0 0
    %1103 = vmatpush1.bf16.xpose.msra.mxu0 0
    %1104 = vmatprep.subr.bf16.mxu0 0
    %1105 = vmatpush1.bf16.xpose.msra.mxu0 0
    %1106 = vmatprep.subr.bf16.mxu0 0
    %1107 = vmatpush1.bf16.xpose.msra.mxu0 0
    %1108 = vmatprep.subr.bf16.mxu0 0
    %1109 = vmatpush1.bf16.xpose.msra.mxu0 0
    %1110 = vmatprep.subr.bf16.mxu0 0
    %1111 = vmatpush1.bf16.xpose.msra.mxu0 0
    %1112 = vmatprep.subr.bf16.mxu0 0
    %1113 = vmatpush1.bf16.xpose.msra.mxu0 0
    %1114 = vmatprep.subr.bf16.mxu0 0
    %1115 = vmatpush1.bf16.xpose.msra.mxu0 0
    %1116 = vmatprep.subr.bf16.mxu0 0
    %1117 = vmatpush1.bf16.xpose.msra.mxu0 0
    %1118 = vmatprep.subr.bf16.mxu0 0
    %1119 = vmatpush1.bf16.xpose.msra.mxu0 0
    %1120 = vmatprep.mubr.bf16.mxu0 0
    %1121 = vmatmul.mubr.bf16.gmra.mrb[0].mxu0 %v1083
    %v1122 = vpop.f32.mrb[0].mxu0
    %v1123 = vadd.f32 0.0, %v1122
    %v1124 = vpop.f32.mrb[0].mxu0
    %v1125 = vpop.f32.mrb[0].mxu0
    %v1126 = vpop.f32.mrb[0].mxu0
    %1127 = vdwg.mxu0
    %v1128 = vsel %vm302, %v1071, -inf
    %1129 = vmax.xlane.f32.xlu0 %v1128
    %v1130 = vpop.xlane.xlu0 %1129
    %v1131 = vsel %vm302, %v1123, -inf
    %1132 = vmax.xlane.f32.xlu0 %v1131
    %v1133 = vpop.xlane.xlu0 %1132
    %v1134 = vsub.f32 %v1071, %v1130
    %v1135 = vsub.f32 %v1123, %v1133
    %v1136 = vmul.f32 %v1134, 1.442695
    %v1137 = vpow.pop %v1136
    %v1138 = vmul.f32 %v1135, 1.442695
    %v1139 = vpow.pop %v1138
    %v1140 = vsel %vm302, %v1137, 0.0
    %1141 = vadd.xlane.f32.xlu0 %v1140
    %v1142 = vpop.xlane.xlu0 %1141
    %v1143 = vsel %vm302, %v1139, 0.0
    %1144 = vadd.xlane.f32.xlu0 %v1143
    %v1145 = vpop.xlane.xlu0 %1144
    %v1146 = vpack.c.bf16 %v1137, %v1137
    %v1147 = vpack.c.bf16 %v1139, %v1139
    %v1148 = vpack.c.b16 %v1022, %v1022
    %1149 = vrot.lane.b32.xlu0 %v1148, 104
    %v1150 = vpop.permute.xlu0 %1149
    %v1152 = vsel %vm302, %v1146, 0
    %v1155 = vsel %vm418, %v1150, 0
    %1157 = vmatprep.subr.bf16.mxu0 0
    %1158 = vmatpush1.bf16.msra.mxu0 %v1155
    %1159 = vmatprep.subr.bf16.mxu0 0
    %1160 = vmatpush1.bf16.msra.mxu0 0
    %1161 = vmatprep.subr.bf16.mxu0 0
    %1162 = vmatpush1.bf16.msra.mxu0 0
    %1163 = vmatprep.subr.bf16.mxu0 0
    %1164 = vmatpush1.bf16.msra.mxu0 0
    %1165 = vmatprep.subr.bf16.mxu0 0
    %1166 = vmatpush1.bf16.msra.mxu0 0
    %1167 = vmatprep.subr.bf16.mxu0 0
    %1168 = vmatpush1.bf16.msra.mxu0 0
    %1169 = vmatprep.subr.bf16.mxu0 0
    %1170 = vmatpush1.bf16.msra.mxu0 0
    %1171 = vmatprep.subr.bf16.mxu0 0
    %1172 = vmatpush1.bf16.msra.mxu0 0
    %1173 = vmatprep.subr.bf16.mxu0 0
    %1174 = vmatpush1.bf16.msra.mxu0 0
    %1175 = vmatprep.subr.bf16.mxu0 0
    %1176 = vmatpush1.bf16.msra.mxu0 0
    %1177 = vmatprep.subr.bf16.mxu0 0
    %1178 = vmatpush1.bf16.msra.mxu0 0
    %1179 = vmatprep.subr.bf16.mxu0 0
    %1180 = vmatpush1.bf16.msra.mxu0 0
    %1181 = vmatprep.subr.bf16.mxu0 0
    %1182 = vmatpush1.bf16.msra.mxu0 0
    %1183 = vmatprep.subr.bf16.mxu0 0
    %1184 = vmatpush1.bf16.msra.mxu0 0
    %1185 = vmatprep.subr.bf16.mxu0 0
    %1186 = vmatpush1.bf16.msra.mxu0 0
    %1187 = vmatprep.subr.bf16.mxu0 0
    %1188 = vmatpush1.bf16.msra.mxu0 0
    %1189 = vmatprep.mubr.bf16.mxu0 0
    %1190 = vmatmul.mubr.bf16.gmra.mrb[0].mxu0 %v1152
    %v1191 = vpop.f32.mrb[0].mxu0
    %v1192 = vadd.f32 0.0, %v1191
    %v1193 = vpop.f32.mrb[0].mxu0
    %v1194 = vpop.f32.mrb[0].mxu0
    %v1195 = vpop.f32.mrb[0].mxu0
    %1196 = vdwg.mxu0
    %v1197 = vpack.c.b16 %v1023, %v1023
    %1198 = vrot.lane.b32.xlu0 %v1197, 104
    %v1199 = vpop.permute.xlu0 %1198
    %v1201 = vsel %vm302, %v1147, 0
    %v1204 = vsel %vm418, %v1199, 0
    %1206 = vmatprep.subr.bf16.mxu0 0
    %1207 = vmatpush1.bf16.msra.mxu0 %v1204
    %1208 = vmatprep.subr.bf16.mxu0 0
    %1209 = vmatpush1.bf16.msra.mxu0 0
    %1210 = vmatprep.subr.bf16.mxu0 0
    %1211 = vmatpush1.bf16.msra.mxu0 0
    %1212 = vmatprep.subr.bf16.mxu0 0
    %1213 = vmatpush1.bf16.msra.mxu0 0
    %1214 = vmatprep.subr.bf16.mxu0 0
    %1215 = vmatpush1.bf16.msra.mxu0 0
    %1216 = vmatprep.subr.bf16.mxu0 0
    %1217 = vmatpush1.bf16.msra.mxu0 0
    %1218 = vmatprep.subr.bf16.mxu0 0
    %1219 = vmatpush1.bf16.msra.mxu0 0
    %1220 = vmatprep.subr.bf16.mxu0 0
    %1221 = vmatpush1.bf16.msra.mxu0 0
    %1222 = vmatprep.subr.bf16.mxu0 0
    %1223 = vmatpush1.bf16.msra.mxu0 0
    %1224 = vmatprep.subr.bf16.mxu0 0
    %1225 = vmatpush1.bf16.msra.mxu0 0
    %1226 = vmatprep.subr.bf16.mxu0 0
    %1227 = vmatpush1.bf16.msra.mxu0 0
    %1228 = vmatprep.subr.bf16.mxu0 0
    %1229 = vmatpush1.bf16.msra.mxu0 0
    %1230 = vmatprep.subr.bf16.mxu0 0
    %1231 = vmatpush1.bf16.msra.mxu0 0
    %1232 = vmatprep.subr.bf16.mxu0 0
    %1233 = vmatpush1.bf16.msra.mxu0 0
    %1234 = vmatprep.subr.bf16.mxu0 0
    %1235 = vmatpush1.bf16.msra.mxu0 0
    %1236 = vmatprep.subr.bf16.mxu0 0
    %1237 = vmatpush1.bf16.msra.mxu0 0
    %1238 = vmatprep.mubr.bf16.mxu0 0
    %1239 = vmatmul.mubr.bf16.gmra.mrb[0].mxu0 %v1201
    %v1240 = vpop.f32.mrb[0].mxu0
    %v1241 = vadd.f32 0.0, %v1240
    %v1242 = vpop.f32.mrb[0].mxu0
    %v1243 = vpop.f32.mrb[0].mxu0
    %v1244 = vpop.f32.mrb[0].mxu0
    %1245 = vdwg.mxu0
    %v1246 = vrcp.pop %v1142
    %v1247 = vrcp.pop %v1145
    %v1248 = vmul.f32 %v1192, %v1246
    %v1249 = vmul.f32 %v1241, %v1247
    %1252 = vrot.lane.b32.xlu0 %v1248, 24
    %v1253 = vpop.permute.xlu0 %1252
    %1254 = vrot.lane.b32.xlu0 %v1249, 24
    %v1255 = vpop.permute.xlu0 %1254
    %vm1258 = vcmask 261312
    %1259 = vst.msk [vmem:[#allocation6] sm:$0xff] %vm1258, %v1253
    %1260 = vst.msk [vmem:[#allocation6 + $0x8] sm:$0xff] %vm1258, %v1255
    %v1261 = vld [vmem:[#allocation2] sm:$0xff]
    %v1262 = vld [vmem:[#allocation2 + $0x8] sm:$0xff]
    %v1263 = vld [vmem:[#allocation6] sm:$0xff]
    %v1264 = vld [vmem:[#allocation6 + $0x8] sm:$0xff]
    %v1265 = vadd.f32 %v1261, %v1263
    %v1266 = vadd.f32 %v1262, %v1264
    %v1267 = vpack.c.bf16 %v1266, %v1265
    %v1268 = vld [vmem:[%s8] sm:$0xf]
    %v1269 = vld [vmem:[%s8 + $0x4] sm:$0xf]
    %v1270 = vld [vmem:[%s8 + $0x8] sm:$0xf]
    %v1271 = vld [vmem:[%s8 + $0xc] sm:$0xf]
    %v1272 = vld [vmem:[%s9] sm:$0x1]
    %v1274 = vlaneseq
    %v1275 = vshrl.u32 %v1274, 7
    %v1276 = vsub.s32 0, %v1275
    %v1277 = vrot.slane %v1272, %v1276
    %v1283 = vunpack.c.l.b16 %v1268
    %v1284 = vunpack.c.l.b16 %v1269
    %v1285 = vunpack.c.l.b16 %v1270
    %v1286 = vunpack.c.l.b16 %v1271
    %v1287 = vpack.c.b16 %v1284, %v1283
    %v1288 = vpack.c.b16 %v1286, %v1285
    %v1292 = vsel %vm158, %v1267, 0
    %1294 = vmatprep.subr.bf16.mxu0 0
    %1295 = vmatpush1.bf16.msra.mxu0 %v1287
    %1296 = vmatprep.subr.bf16.mxu0 0
    %1297 = vmatpush1.bf16.msra.mxu0 %v1288
    %1298 = vmatprep.subr.bf16.mxu0 0
    %1299 = vmatpush1.bf16.msra.mxu0 0
    %1300 = vmatprep.subr.bf16.mxu0 0
    %1301 = vmatpush1.bf16.msra.mxu0 0
    %1302 = vmatprep.subr.bf16.mxu0 0
    %1303 = vmatpush1.bf16.msra.mxu0 0
    %1304 = vmatprep.subr.bf16.mxu0 0
    %1305 = vmatpush1.bf16.msra.mxu0 0
    %1306 = vmatprep.subr.bf16.mxu0 0
    %1307 = vmatpush1.bf16.msra.mxu0 0
    %1308 = vmatprep.subr.bf16.mxu0 0
    %1309 = vmatpush1.bf16.msra.mxu0 0
    %1310 = vmatprep.subr.bf16.mxu0 0
    %1311 = vmatpush1.bf16.msra.mxu0 0
    %1312 = vmatprep.subr.bf16.mxu0 0
    %1313 = vmatpush1.bf16.msra.mxu0 0
    %1314 = vmatprep.subr.bf16.mxu0 0
    %1315 = vmatpush1.bf16.msra.mxu0 0
    %1316 = vmatprep.subr.bf16.mxu0 0
    %1317 = vmatpush1.bf16.msra.mxu0 0
    %1318 = vmatprep.subr.bf16.mxu0 0
    %1319 = vmatpush1.bf16.msra.mxu0 0
    %1320 = vmatprep.subr.bf16.mxu0 0
    %1321 = vmatpush1.bf16.msra.mxu0 0
    %1322 = vmatprep.subr.bf16.mxu0 0
    %1323 = vmatpush1.bf16.msra.mxu0 0
    %1324 = vmatprep.subr.bf16.mxu0 0
    %1325 = vmatpush1.bf16.msra.mxu0 0
    %1326 = vmatprep.mubr.bf16.mxu0 0
    %1327 = vmatmul.mubr.bf16.gmra.mrb[0].mxu0 %v1292
    %v1328 = vpop.f32.mrb[0].mxu0
    %v1329 = vadd.f32 %v1277, %v1328
    %v1330 = vpop.f32.mrb[0].mxu0
    %v1331 = vpop.f32.mrb[0].mxu0
    %v1332 = vadd.f32 %v1277, %v1331
    %v1333 = vpop.f32.mrb[0].mxu0
    %1334 = vdwg.mxu0
    %v1335 = vmax.f32 %v1329, 0.0
    %v1336 = vmax.f32 %v1332, 0.0
    %v1337 = vadd.f32 %v1265, %v1335
    %v1338 = vadd.f32 %v1266, %v1336
    %1339 = vst.msk [vmem:[#allocation15] sm:$0xff] %vm158, %v1337
    %1340 = vst.msk [vmem:[#allocation15 + $0x8] sm:$0xff] %vm158, %v1338
    // Predicated region
    $region58: #{tpu_custom_call.1} parent=1 // pred_check
      _
    $region59: #{tpu_custom_call.1} parent=1 // pred_check_branch
      %1342 = sbr.rel (0) target = $region61
    $region60: #{tpu_custom_call.1} parent=1 // pred_region
      %s1344 = ssub.s32 256, 256
      %1345 = vsyncadd [#allocation9], %s1344
      %s1346 = sshll.u32 [#allocation15], 4
      %s1347 = int_to_ptr.vmem [resolvable:$true] %s1346
      %1352 = dma.vmem_to_hbm [thread:$0]  %s1347, 256, %s10, [#allocation9], 128, 128, 8
    $region61: #{tpu_custom_call.1} parent=1 // pred_fallthru
      _
    // Predicated region
    $region62: #{tpu_custom_call.1} parent=1 // pred_check
      _
    $region63: #{tpu_custom_call.1} parent=1 // pred_check_branch
      %1354 = sbr.rel (0) target = $region65
    $region64: #{tpu_custom_call.1} parent=1 // pred_region
      %1355 = dma.done [#allocation9], 256
    $region65: #{tpu_custom_call.1} parent=1 // pred_fallthru
      _
    %1356 = vsyncpa [#allocation8], 1
    %1357 = vsyncpa [#allocation11], 1
    %1358 = vsyncpa [#allocation14], 1
    %1359 = vsyncpa [#allocation9], 1

</llo_original>
